<compile_context>
chip_gen: v5e
topology: v5e:2x2
jax: 0.10.0
libtpu: 0.0.40
codegen_flags: <defaults>
</compile_context>

<pallas_src>
import functools

import jax
import jax.numpy as jnp
from jax.experimental import pallas as pl
from jax.experimental.pallas import tpu as pltpu


def _round_up(x: int, m: int) -> int:
    return (x + m - 1) // m * m


def mlp_medium_kernel(x_ref,
                      w1_ref, b1_ref, w2_ref, b2_ref, w3_ref, b3_ref,
                      w4_ref, b4_ref, w5_ref, b5_ref,
                      wo_ref, bo_ref,
                      out_ref,
                      h_ref):
    """One (TM, TN) output tile of the fused 6-layer MLP.

    Grid = (batch tiles, output-N tiles), N innermost.  The five hidden layers
    run once per batch tile (j == 0) into a bf16 VMEM scratch; the output layer
    consumes that scratch for every N tile.  Weights are bf16, biases f32, all
    MXU accumulation f32.
    """
    @pl.when(pl.program_id(1) == 0)
    def _():
        h = x_ref[...]                                      # (TM, I) bf16
        for w_ref, b_ref in ((w1_ref, b1_ref), (w2_ref, b2_ref),
                             (w3_ref, b3_ref), (w4_ref, b4_ref),
                             (w5_ref, b5_ref)):
            acc = jnp.dot(h, w_ref[...],
                          preferred_element_type=jnp.float32) + b_ref[...]
            h = jnp.maximum(acc, 0.0).astype(jnp.bfloat16)  # bf16 between layers
        h_ref[...] = h

    out_ref[...] = (
        jnp.dot(h_ref[...], wo_ref[...], preferred_element_type=jnp.float32)
        + bo_ref[...])


def init_params(key, num_i, num_h, vocab_len):
    """nn.Linear-style U(-1/sqrt(fan_in), 1/sqrt(fan_in)) init.

    Weights stored (in_features, out_features) (transposed vs torch) so the
    kernel computes x @ W + b; biases stored (1, out_features).
    """
    dims = [
        ("1", num_i, num_h), ("2", num_h, num_h), ("3", num_h, num_h),
        ("4", num_h, num_h), ("5", num_h, num_h), ("o", num_h, vocab_len * 6),
    ]
    params = {}
    for name, fan_in, fan_out in dims:
        key, kw, kb = jax.random.split(key, 3)
        bound = 1.0 / jnp.sqrt(jnp.float32(fan_in))
        params[f"w{name}"] = jax.random.uniform(
            kw, (fan_in, fan_out), jnp.float32, minval=-bound, maxval=bound)
        params[f"b{name}"] = jax.random.uniform(
            kb, (1, fan_out), jnp.float32, minval=-bound, maxval=bound)
    return params


def prepare_params(params, num_i, num_h, vocab_len):
    """Zero-pad all feature dims to multiples of 128; weights bf16, biases f32.

    Zero rows/cols contribute exactly 0 to every dot, and padded hidden units
    are ReLU(0 + 0) = 0, so padding is numerically transparent.
    """
    I = _round_up(num_i, 128)
    H = _round_up(num_h, 128)
    O = _round_up(6 * vocab_len, 128)

    def pad_w(w, rows, cols):
        return jnp.pad(w, ((0, rows - w.shape[0]),
                           (0, cols - w.shape[1]))).astype(jnp.bfloat16)

    def pad_b(b, cols):
        return jnp.pad(b, ((0, 0), (0, cols - b.shape[1]))).astype(jnp.float32)

    dims = {"1": (I, H), "2": (H, H), "3": (H, H), "4": (H, H), "5": (H, H),
            "o": (H, O)}
    padded = {}
    for name, (rows, cols) in dims.items():
        padded[f"w{name}"] = pad_w(params[f"w{name}"], rows, cols)
        padded[f"b{name}"] = pad_b(params[f"b{name}"], cols)
    return padded


@functools.partial(jax.jit, static_argnames=("vocab_len", "block_m", "block_n",
                                              "single_buffer_weights"))
def _mlp_medium_forward(x, padded_params, vocab_len, block_m, block_n,
                        single_buffer_weights):
    batch, num_i = x.shape
    I, H = padded_params["w1"].shape
    O = padded_params["wo"].shape[1]
    out_dim = 6 * vocab_len

    # Batch tiling: TM multiple of 8; guarantee >= 2 grid steps when the batch
    # allows so the "parallel" axis actually feeds both v7x TensorCores.
    tm = min(block_m, _round_up(batch, 8))
    if batch > 8 and _round_up(batch, tm) // tm < 2:
        tm = _round_up(pl.cdiv(batch, 2), 8)
    padded_batch = _round_up(batch, tm)

    # Output-N tiling: wo / bo / out streamed in TN-wide lane-dense tiles.
    tn = min(_round_up(block_n, 128), O)
    while O % tn:            # O is a multiple of 128, so this terminates at 128
        tn -= 128
    grid = (padded_batch // tm, O // tn)

    # Stream x in bf16 (first matmul consumes bf16 anyway).
    x_p = jnp.pad(x.astype(jnp.float32),
                  ((0, padded_batch - batch), (0, I - num_i))
                  ).astype(jnp.bfloat16)

    const = lambda i, j: (0, 0)

    def resident_spec(shape):
        # Constant index_map -> fetched once, never re-fetched; single-buffer
        # it so it doesn't occupy 2x VMEM.
        if single_buffer_weights:
            return pl.BlockSpec(shape, const, pipeline_mode=pl.Buffered(1))
        return pl.BlockSpec(shape, const)

    in_specs = [pl.BlockSpec((tm, I), lambda i, j: (i, 0))]
    operands = [x_p]
    resident_bytes = 0
    for name in ("1", "2", "3", "4", "5"):
        w = padded_params[f"w{name}"]
        b = padded_params[f"b{name}"]
        in_specs.append(resident_spec(w.shape))
        in_specs.append(resident_spec(b.shape))
        operands += [w, b]
        resident_bytes += (w.size * w.dtype.itemsize + b.size * b.dtype.itemsize)
    wo = padded_params["wo"]
    bo = padded_params["bo"]
    in_specs.append(pl.BlockSpec((H, tn), lambda i, j: (0, j)))   # streamed
    in_specs.append(pl.BlockSpec((1, tn), lambda i, j: (0, j)))
    operands += [wo, bo]

    out_specs = pl.BlockSpec((tm, tn), lambda i, j: (i, j))

    # VMEM budget with real buffer multiplicities.
    weight_mult = 1 if single_buffer_weights else 2
    vmem_needed = (weight_mult * resident_bytes
                   + 2 * H * tn * 2          # wo tiles (bf16, double-buffered)
                   + 2 * tn * 4              # bo tiles
                   + 2 * tm * I * 2          # x tiles (bf16, double-buffered)
                   + 2 * tm * tn * 4         # out tiles (f32, double-buffered)
                   + tm * H * 2              # bf16 activation scratch
                   + 2 * tm * H * 4          # live f32 layer intermediates
                   + (4 << 20))              # Mosaic internal scratch margin
    try:
        vmem_cap = int(0.85 * pltpu.get_tpu_info().vmem_capacity_bytes)
    except Exception:
        vmem_cap = 48 << 20                  # safe on v5e / v6e / v7x
    vmem_limit = int(min(max(vmem_needed, 32 << 20), vmem_cap))

    flops = 2 * padded_batch * (I * H + 4 * H * H + H * O)
    bytes_accessed = int(x_p.size * 2 + resident_bytes
                         + wo.size * 2 + bo.size * 4 + padded_batch * O * 4)

    out = pl.pallas_call(
        mlp_medium_kernel,
        out_shape=jax.ShapeDtypeStruct((padded_batch, O), jnp.float32),
        grid=grid,
        in_specs=in_specs,
        out_specs=out_specs,
        scratch_shapes=[pltpu.VMEM((tm, H), jnp.bfloat16)],
        compiler_params=pltpu.CompilerParams(
            dimension_semantics=("parallel", "arbitrary"),
            vmem_limit_bytes=vmem_limit),
        cost_estimate=pl.CostEstimate(flops=flops, transcendentals=0,
                                      bytes_accessed=bytes_accessed),
    )(*operands)

    out = out[:batch, :out_dim].reshape(batch, 6, vocab_len)
    return out, None, None


def mlp_medium_forward(x, padded_params, vocab_len, block_m=256, block_n=1024):
    """Runs the fused Pallas kernel; returns (out, None, None) like the module."""
    try:
        return _mlp_medium_forward(x, padded_params, vocab_len,
                                   block_m, block_n, True)
    except Exception:
        # Fallback if this jax build rejects pipeline_mode on pallas_call:
        # identical kernel, resident weights just stay double-buffered.
        return _mlp_medium_forward(x, padded_params, vocab_len,
                                   block_m, block_n, False)


def reference_forward(x, params, vocab_len):
    """Plain-JAX reference with the same bf16-weight/activation, f32-acc numerics."""
    h = x.astype(jnp.float32).astype(jnp.bfloat16)
    for name in ("1", "2", "3", "4", "5"):
        w = params[f"w{name}"].astype(jnp.bfloat16)
        acc = jnp.dot(h, w, preferred_element_type=jnp.float32) + params[f"b{name}"]
        h = jnp.maximum(acc, 0.0).astype(jnp.bfloat16)
    wo = params["wo"].astype(jnp.bfloat16)
    out = jnp.dot(h, wo, preferred_element_type=jnp.float32) + params["bo"]
    return out.reshape(x.shape[0], 6, vocab_len)


if __name__ == "__main__":
    # Small shapes; batch=256 -> 2 batch tiles, block_n=128 -> 2 output-N tiles,
    # so both grid axes (and the scratch-reuse path) are exercised.
    batch, num_i, num_h, vocab_len = 256, 32, 64, 32

    key = jax.random.PRNGKey(0)
    key, kx = jax.random.split(key)
    x = jax.random.normal(kx, (batch, num_i), jnp.float32)

    params = init_params(key, num_i, num_h, vocab_len)
    padded_params = prepare_params(params, num_i, num_h, vocab_len)

    out, _, _ = mlp_medium_forward(x, padded_params, vocab_len, block_n=128)
    out = jax.block_until_ready(out)

    ref = reference_forward(x, params, vocab_len)
    assert out.shape == (batch, 6, vocab_len), out.shape
    assert jnp.allclose(out, ref, atol=2e-2, rtol=2e-2), \
        float(jnp.max(jnp.abs(out - ref)))

    print("KERNEL_OK")
</pallas_src>

<mosaic_0001>
module attributes {stable_mosaic.version = 11 : i64} {
  func.func @mlp_medium_kernel(%arg0: i32, %arg1: i32, %arg2: memref<128x128xbf16, #tpu.memory_space<vmem>>, %arg3: memref<128x128xbf16, #tpu.memory_space<vmem>>, %arg4: memref<1x128xf32, #tpu.memory_space<vmem>>, %arg5: memref<128x128xbf16, #tpu.memory_space<vmem>>, %arg6: memref<1x128xf32, #tpu.memory_space<vmem>>, %arg7: memref<128x128xbf16, #tpu.memory_space<vmem>>, %arg8: memref<1x128xf32, #tpu.memory_space<vmem>>, %arg9: memref<128x128xbf16, #tpu.memory_space<vmem>>, %arg10: memref<1x128xf32, #tpu.memory_space<vmem>>, %arg11: memref<128x128xbf16, #tpu.memory_space<vmem>>, %arg12: memref<1x128xf32, #tpu.memory_space<vmem>>, %arg13: memref<128x128xbf16, #tpu.memory_space<vmem>>, %arg14: memref<1x128xf32, #tpu.memory_space<vmem>>, %arg15: memref<128x128xf32, #tpu.memory_space<vmem>>, %arg16: memref<128x128xbf16, #tpu.memory_space<vmem>>) attributes {dimension_semantics = [#tpu.dimension_semantics<parallel>, #tpu.dimension_semantics<arbitrary>], iteration_bounds = array<i64: 2, 2>, scalar_prefetch = 0 : i64, scratch_operands = 1 : i64, tpu.core_type = #tpu.core_type<tc>, window_params = [{transform_indices = @transform_0, window_bounds = array<i64: 128, 128>}, {pipeline_mode = #tpu.pipeline_mode<synchronous>, transform_indices = @transform_1, window_bounds = array<i64: 128, 128>}, {pipeline_mode = #tpu.pipeline_mode<synchronous>, transform_indices = @transform_2, window_bounds = array<i64: 1, 128>}, {pipeline_mode = #tpu.pipeline_mode<synchronous>, transform_indices = @transform_3, window_bounds = array<i64: 128, 128>}, {pipeline_mode = #tpu.pipeline_mode<synchronous>, transform_indices = @transform_4, window_bounds = array<i64: 1, 128>}, {pipeline_mode = #tpu.pipeline_mode<synchronous>, transform_indices = @transform_5, window_bounds = array<i64: 128, 128>}, {pipeline_mode = #tpu.pipeline_mode<synchronous>, transform_indices = @transform_6, window_bounds = array<i64: 1, 128>}, {pipeline_mode = #tpu.pipeline_mode<synchronous>, transform_indices = @transform_7, window_bounds = array<i64: 128, 128>}, {pipeline_mode = #tpu.pipeline_mode<synchronous>, transform_indices = @transform_8, window_bounds = array<i64: 1, 128>}, {pipeline_mode = #tpu.pipeline_mode<synchronous>, transform_indices = @transform_9, window_bounds = array<i64: 128, 128>}, {pipeline_mode = #tpu.pipeline_mode<synchronous>, transform_indices = @transform_10, window_bounds = array<i64: 1, 128>}, {transform_indices = @transform_11, window_bounds = array<i64: 128, 128>}, {transform_indices = @transform_12, window_bounds = array<i64: 1, 128>}, {transform_indices = @transform_13, window_bounds = array<i64: 128, 128>}]} {
    %c0_i32 = arith.constant 0 : i32
    %0 = arith.cmpi eq, %arg1, %c0_i32 : i32
    %1 = arith.extui %0 : i1 to i32
    %c0_i32_0 = arith.constant 0 : i32
    %2 = arith.cmpi ne, %1, %c0_i32_0 : i32
    scf.if %2 {
      %c0_8 = arith.constant 0 : index
      %c0_9 = arith.constant 0 : index
      %10 = vector.load %arg2[%c0_8, %c0_9] : memref<128x128xbf16, #tpu.memory_space<vmem>>, vector<128x128xbf16>
      %c0_10 = arith.constant 0 : index
      %c0_11 = arith.constant 0 : index
      %11 = vector.load %arg3[%c0_10, %c0_11] : memref<128x128xbf16, #tpu.memory_space<vmem>>, vector<128x128xbf16>
      %cst_12 = arith.constant dense<0.000000e+00> : vector<128x128xf32>
      %12 = tpu.matmul %10, %11, %cst_12 {dimension_numbers = #tpu.dot_dimension_numbers<[1], [0], [0], [1], [0, 0, 1, 1], [], []>} : vector<128x128xbf16>, vector<128x128xbf16>, vector<128x128xf32> -> vector<128x128xf32>
      %c0_13 = arith.constant 0 : index
      %c0_14 = arith.constant 0 : index
      %13 = vector.load %arg4[%c0_13, %c0_14] : memref<1x128xf32, #tpu.memory_space<vmem>>, vector<1x128xf32>
      %14 = vector.broadcast %13 : vector<1x128xf32> to vector<128x128xf32>
      %15 = arith.addf %12, %14 : vector<128x128xf32>
      %cst_15 = arith.constant 0.000000e+00 : f32
      %16 = vector.broadcast %cst_15 : f32 to vector<128x128xf32>
      %17 = arith.maximumf %15, %16 : vector<128x128xf32>
      %18 = arith.truncf %17 : vector<128x128xf32> to vector<128x128xbf16>
      %c0_16 = arith.constant 0 : index
      %c0_17 = arith.constant 0 : index
      %19 = vector.load %arg5[%c0_16, %c0_17] : memref<128x128xbf16, #tpu.memory_space<vmem>>, vector<128x128xbf16>
      %cst_18 = arith.constant dense<0.000000e+00> : vector<128x128xf32>
      %20 = tpu.matmul %18, %19, %cst_18 {dimension_numbers = #tpu.dot_dimension_numbers<[1], [0], [0], [1], [0, 0, 1, 1], [], []>} : vector<128x128xbf16>, vector<128x128xbf16>, vector<128x128xf32> -> vector<128x128xf32>
      %c0_19 = arith.constant 0 : index
      %c0_20 = arith.constant 0 : index
      %21 = vector.load %arg6[%c0_19, %c0_20] : memref<1x128xf32, #tpu.memory_space<vmem>>, vector<1x128xf32>
      %22 = vector.broadcast %21 : vector<1x128xf32> to vector<128x128xf32>
      %23 = arith.addf %20, %22 : vector<128x128xf32>
      %cst_21 = arith.constant 0.000000e+00 : f32
      %24 = vector.broadcast %cst_21 : f32 to vector<128x128xf32>
      %25 = arith.maximumf %23, %24 : vector<128x128xf32>
      %26 = arith.truncf %25 : vector<128x128xf32> to vector<128x128xbf16>
      %c0_22 = arith.constant 0 : index
      %c0_23 = arith.constant 0 : index
      %27 = vector.load %arg7[%c0_22, %c0_23] : memref<128x128xbf16, #tpu.memory_space<vmem>>, vector<128x128xbf16>
      %cst_24 = arith.constant dense<0.000000e+00> : vector<128x128xf32>
      %28 = tpu.matmul %26, %27, %cst_24 {dimension_numbers = #tpu.dot_dimension_numbers<[1], [0], [0], [1], [0, 0, 1, 1], [], []>} : vector<128x128xbf16>, vector<128x128xbf16>, vector<128x128xf32> -> vector<128x128xf32>
      %c0_25 = arith.constant 0 : index
      %c0_26 = arith.constant 0 : index
      %29 = vector.load %arg8[%c0_25, %c0_26] : memref<1x128xf32, #tpu.memory_space<vmem>>, vector<1x128xf32>
      %30 = vector.broadcast %29 : vector<1x128xf32> to vector<128x128xf32>
      %31 = arith.addf %28, %30 : vector<128x128xf32>
      %cst_27 = arith.constant 0.000000e+00 : f32
      %32 = vector.broadcast %cst_27 : f32 to vector<128x128xf32>
      %33 = arith.maximumf %31, %32 : vector<128x128xf32>
      %34 = arith.truncf %33 : vector<128x128xf32> to vector<128x128xbf16>
      %c0_28 = arith.constant 0 : index
      %c0_29 = arith.constant 0 : index
      %35 = vector.load %arg9[%c0_28, %c0_29] : memref<128x128xbf16, #tpu.memory_space<vmem>>, vector<128x128xbf16>
      %cst_30 = arith.constant dense<0.000000e+00> : vector<128x128xf32>
      %36 = tpu.matmul %34, %35, %cst_30 {dimension_numbers = #tpu.dot_dimension_numbers<[1], [0], [0], [1], [0, 0, 1, 1], [], []>} : vector<128x128xbf16>, vector<128x128xbf16>, vector<128x128xf32> -> vector<128x128xf32>
      %c0_31 = arith.constant 0 : index
      %c0_32 = arith.constant 0 : index
      %37 = vector.load %arg10[%c0_31, %c0_32] : memref<1x128xf32, #tpu.memory_space<vmem>>, vector<1x128xf32>
      %38 = vector.broadcast %37 : vector<1x128xf32> to vector<128x128xf32>
      %39 = arith.addf %36, %38 : vector<128x128xf32>
      %cst_33 = arith.constant 0.000000e+00 : f32
      %40 = vector.broadcast %cst_33 : f32 to vector<128x128xf32>
      %41 = arith.maximumf %39, %40 : vector<128x128xf32>
      %42 = arith.truncf %41 : vector<128x128xf32> to vector<128x128xbf16>
      %c0_34 = arith.constant 0 : index
      %c0_35 = arith.constant 0 : index
      %43 = vector.load %arg11[%c0_34, %c0_35] : memref<128x128xbf16, #tpu.memory_space<vmem>>, vector<128x128xbf16>
      %cst_36 = arith.constant dense<0.000000e+00> : vector<128x128xf32>
      %44 = tpu.matmul %42, %43, %cst_36 {dimension_numbers = #tpu.dot_dimension_numbers<[1], [0], [0], [1], [0, 0, 1, 1], [], []>} : vector<128x128xbf16>, vector<128x128xbf16>, vector<128x128xf32> -> vector<128x128xf32>
      %c0_37 = arith.constant 0 : index
      %c0_38 = arith.constant 0 : index
      %45 = vector.load %arg12[%c0_37, %c0_38] : memref<1x128xf32, #tpu.memory_space<vmem>>, vector<1x128xf32>
      %46 = vector.broadcast %45 : vector<1x128xf32> to vector<128x128xf32>
      %47 = arith.addf %44, %46 : vector<128x128xf32>
      %cst_39 = arith.constant 0.000000e+00 : f32
      %48 = vector.broadcast %cst_39 : f32 to vector<128x128xf32>
      %49 = arith.maximumf %47, %48 : vector<128x128xf32>
      %50 = arith.truncf %49 : vector<128x128xf32> to vector<128x128xbf16>
      %c0_40 = arith.constant 0 : index
      %c0_41 = arith.constant 0 : index
      %51 = vector.load %arg16[%c0_40, %c0_41] : memref<128x128xbf16, #tpu.memory_space<vmem>>, vector<128x128xbf16>
      tpu.vector_store %arg16[%c0_40, %c0_41], %50 {strides = array<i32>} : memref<128x128xbf16, #tpu.memory_space<vmem>>, vector<128x128xbf16>,
    } else {
    }
    %c0 = arith.constant 0 : index
    %c0_1 = arith.constant 0 : index
    %3 = vector.load %arg16[%c0, %c0_1] : memref<128x128xbf16, #tpu.memory_space<vmem>>, vector<128x128xbf16>
    %c0_2 = arith.constant 0 : index
    %c0_3 = arith.constant 0 : index
    %4 = vector.load %arg13[%c0_2, %c0_3] : memref<128x128xbf16, #tpu.memory_space<vmem>>, vector<128x128xbf16>
    %cst = arith.constant dense<0.000000e+00> : vector<128x128xf32>
    %5 = tpu.matmul %3, %4, %cst {dimension_numbers = #tpu.dot_dimension_numbers<[1], [0], [0], [1], [0, 0, 1, 1], [], []>} : vector<128x128xbf16>, vector<128x128xbf16>, vector<128x128xf32> -> vector<128x128xf32>
    %c0_4 = arith.constant 0 : index
    %c0_5 = arith.constant 0 : index
    %6 = vector.load %arg14[%c0_4, %c0_5] : memref<1x128xf32, #tpu.memory_space<vmem>>, vector<1x128xf32>
    %7 = vector.broadcast %6 : vector<1x128xf32> to vector<128x128xf32>
    %8 = arith.addf %5, %7 : vector<128x128xf32>
    %c0_6 = arith.constant 0 : index
    %c0_7 = arith.constant 0 : index
    %9 = vector.load %arg15[%c0_6, %c0_7] : memref<128x128xf32, #tpu.memory_space<vmem>>, vector<128x128xf32>
    tpu.vector_store %arg15[%c0_6, %c0_7], %8 {strides = array<i32>} : memref<128x128xf32, #tpu.memory_space<vmem>>, vector<128x128xf32>,
    return
  }
  func.func @transform_0(%arg0: i32, %arg1: i32) -> (i32, i32) {
    %c0_i32 = arith.constant 0 : i32
    %c0_i32_0 = arith.constant 0 : i32
    return %arg0, %c0_i32 : i32, i32
  }
  func.func @transform_1(%arg0: i32, %arg1: i32) -> (i32, i32) {
    %c0_i32 = arith.constant 0 : i32
    %c0_i32_0 = arith.constant 0 : i32
    %c0_i32_1 = arith.constant 0 : i32
    return %c0_i32, %c0_i32_0 : i32, i32
  }
  func.func @transform_2(%arg0: i32, %arg1: i32) -> (i32, i32) {
    %c0_i32 = arith.constant 0 : i32
    %c0_i32_0 = arith.constant 0 : i32
    %c0_i32_1 = arith.constant 0 : i32
    return %c0_i32, %c0_i32_0 : i32, i32
  }
  func.func @transform_3(%arg0: i32, %arg1: i32) -> (i32, i32) {
    %c0_i32 = arith.constant 0 : i32
    %c0_i32_0 = arith.constant 0 : i32
    %c0_i32_1 = arith.constant 0 : i32
    return %c0_i32, %c0_i32_0 : i32, i32
  }
  func.func @transform_4(%arg0: i32, %arg1: i32) -> (i32, i32) {
    %c0_i32 = arith.constant 0 : i32
    %c0_i32_0 = arith.constant 0 : i32
    %c0_i32_1 = arith.constant 0 : i32
    return %c0_i32, %c0_i32_0 : i32, i32
  }
  func.func @transform_5(%arg0: i32, %arg1: i32) -> (i32, i32) {
    %c0_i32 = arith.constant 0 : i32
    %c0_i32_0 = arith.constant 0 : i32
    %c0_i32_1 = arith.constant 0 : i32
    return %c0_i32, %c0_i32_0 : i32, i32
  }
  func.func @transform_6(%arg0: i32, %arg1: i32) -> (i32, i32) {
    %c0_i32 = arith.constant 0 : i32
    %c0_i32_0 = arith.constant 0 : i32
    %c0_i32_1 = arith.constant 0 : i32
    return %c0_i32, %c0_i32_0 : i32, i32
  }
  func.func @transform_7(%arg0: i32, %arg1: i32) -> (i32, i32) {
    %c0_i32 = arith.constant 0 : i32
    %c0_i32_0 = arith.constant 0 : i32
    %c0_i32_1 = arith.constant 0 : i32
    return %c0_i32, %c0_i32_0 : i32, i32
  }
  func.func @transform_8(%arg0: i32, %arg1: i32) -> (i32, i32) {
    %c0_i32 = arith.constant 0 : i32
    %c0_i32_0 = arith.constant 0 : i32
    %c0_i32_1 = arith.constant 0 : i32
    return %c0_i32, %c0_i32_0 : i32, i32
  }
  func.func @transform_9(%arg0: i32, %arg1: i32) -> (i32, i32) {
    %c0_i32 = arith.constant 0 : i32
    %c0_i32_0 = arith.constant 0 : i32
    %c0_i32_1 = arith.constant 0 : i32
    return %c0_i32, %c0_i32_0 : i32, i32
  }
  func.func @transform_10(%arg0: i32, %arg1: i32) -> (i32, i32) {
    %c0_i32 = arith.constant 0 : i32
    %c0_i32_0 = arith.constant 0 : i32
    %c0_i32_1 = arith.constant 0 : i32
    return %c0_i32, %c0_i32_0 : i32, i32
  }
  func.func @transform_11(%arg0: i32, %arg1: i32) -> (i32, i32) {
    %c0_i32 = arith.constant 0 : i32
    %c0_i32_0 = arith.constant 0 : i32
    return %c0_i32, %arg1 : i32, i32
  }
  func.func @transform_12(%arg0: i32, %arg1: i32) -> (i32, i32) {
    %c0_i32 = arith.constant 0 : i32
    %c0_i32_0 = arith.constant 0 : i32
    return %c0_i32, %arg1 : i32, i32
  }
  func.func @transform_13(%arg0: i32, %arg1: i32) -> (i32, i32) {
    %c0_i32 = arith.constant 0 : i32
    return %arg0, %arg1 : i32, i32
  }
}

module attributes {stable_mosaic.version = 11 : i64} {
  func.func @mlp_medium_kernel(%arg0: i32, %arg1: i32, %arg2: memref<128x128xbf16, #tpu.memory_space<vmem>>, %arg3: memref<128x128xbf16, #tpu.memory_space<vmem>>, %arg4: memref<1x128xf32, #tpu.memory_space<vmem>>, %arg5: memref<128x128xbf16, #tpu.memory_space<vmem>>, %arg6: memref<1x128xf32, #tpu.memory_space<vmem>>, %arg7: memref<128x128xbf16, #tpu.memory_space<vmem>>, %arg8: memref<1x128xf32, #tpu.memory_space<vmem>>, %arg9: memref<128x128xbf16, #tpu.memory_space<vmem>>, %arg10: memref<1x128xf32, #tpu.memory_space<vmem>>, %arg11: memref<128x128xbf16, #tpu.memory_space<vmem>>, %arg12: memref<1x128xf32, #tpu.memory_space<vmem>>, %arg13: memref<128x128xbf16, #tpu.memory_space<vmem>>, %arg14: memref<1x128xf32, #tpu.memory_space<vmem>>, %arg15: memref<128x128xf32, #tpu.memory_space<vmem>>, %arg16: memref<128x128xbf16, #tpu.memory_space<vmem>>) attributes {dimension_semantics = [#tpu.dimension_semantics<parallel>, #tpu.dimension_semantics<arbitrary>], iteration_bounds = array<i64: 2, 2>, scalar_prefetch = 0 : i64, scratch_operands = 1 : i64, tpu.core_type = #tpu.core_type<tc>, window_params = [{transform_indices = @transform_0, window_bounds = array<i64: 128, 128>}, {pipeline_mode = #tpu.pipeline_mode<synchronous>, transform_indices = @transform_1, window_bounds = array<i64: 128, 128>}, {pipeline_mode = #tpu.pipeline_mode<synchronous>, transform_indices = @transform_2, window_bounds = array<i64: 1, 128>}, {pipeline_mode = #tpu.pipeline_mode<synchronous>, transform_indices = @transform_3, window_bounds = array<i64: 128, 128>}, {pipeline_mode = #tpu.pipeline_mode<synchronous>, transform_indices = @transform_4, window_bounds = array<i64: 1, 128>}, {pipeline_mode = #tpu.pipeline_mode<synchronous>, transform_indices = @transform_5, window_bounds = array<i64: 128, 128>}, {pipeline_mode = #tpu.pipeline_mode<synchronous>, transform_indices = @transform_6, window_bounds = array<i64: 1, 128>}, {pipeline_mode = #tpu.pipeline_mode<synchronous>, transform_indices = @transform_7, window_bounds = array<i64: 128, 128>}, {pipeline_mode = #tpu.pipeline_mode<synchronous>, transform_indices = @transform_8, window_bounds = array<i64: 1, 128>}, {pipeline_mode = #tpu.pipeline_mode<synchronous>, transform_indices = @transform_9, window_bounds = array<i64: 128, 128>}, {pipeline_mode = #tpu.pipeline_mode<synchronous>, transform_indices = @transform_10, window_bounds = array<i64: 1, 128>}, {transform_indices = @transform_11, window_bounds = array<i64: 128, 128>}, {transform_indices = @transform_12, window_bounds = array<i64: 1, 128>}, {transform_indices = @transform_13, window_bounds = array<i64: 128, 128>}]} {
    %c0_i32 = arith.constant 0 : i32
    %0 = arith.cmpi eq, %arg1, %c0_i32 : i32
    %1 = arith.extui %0 : i1 to i32
    %c0_i32_0 = arith.constant 0 : i32
    %2 = arith.cmpi ne, %1, %c0_i32_0 : i32
    scf.if %2 {
      %c0_8 = arith.constant 0 : index
      %c0_9 = arith.constant 0 : index
      %10 = vector.load %arg2[%c0_8, %c0_9] : memref<128x128xbf16, #tpu.memory_space<vmem>>, vector<128x128xbf16>
      %c0_10 = arith.constant 0 : index
      %c0_11 = arith.constant 0 : index
      %11 = vector.load %arg3[%c0_10, %c0_11] : memref<128x128xbf16, #tpu.memory_space<vmem>>, vector<128x128xbf16>
      %cst_12 = arith.constant dense<0.000000e+00> : vector<128x128xf32>
      %12 = tpu.matmul %10, %11, %cst_12 {dimension_numbers = #tpu.dot_dimension_numbers<[1], [0], [0], [1], [0, 0, 1, 1], [], []>} : vector<128x128xbf16>, vector<128x128xbf16>, vector<128x128xf32> -> vector<128x128xf32>
      %c0_13 = arith.constant 0 : index
      %c0_14 = arith.constant 0 : index
      %13 = vector.load %arg4[%c0_13, %c0_14] : memref<1x128xf32, #tpu.memory_space<vmem>>, vector<1x128xf32>
      %14 = vector.broadcast %13 : vector<1x128xf32> to vector<128x128xf32>
      %15 = arith.addf %12, %14 : vector<128x128xf32>
      %cst_15 = arith.constant 0.000000e+00 : f32
      %16 = vector.broadcast %cst_15 : f32 to vector<128x128xf32>
      %17 = arith.maximumf %15, %16 : vector<128x128xf32>
      %18 = arith.truncf %17 : vector<128x128xf32> to vector<128x128xbf16>
      %c0_16 = arith.constant 0 : index
      %c0_17 = arith.constant 0 : index
      %19 = vector.load %arg5[%c0_16, %c0_17] : memref<128x128xbf16, #tpu.memory_space<vmem>>, vector<128x128xbf16>
      %cst_18 = arith.constant dense<0.000000e+00> : vector<128x128xf32>
      %20 = tpu.matmul %18, %19, %cst_18 {dimension_numbers = #tpu.dot_dimension_numbers<[1], [0], [0], [1], [0, 0, 1, 1], [], []>} : vector<128x128xbf16>, vector<128x128xbf16>, vector<128x128xf32> -> vector<128x128xf32>
      %c0_19 = arith.constant 0 : index
      %c0_20 = arith.constant 0 : index
      %21 = vector.load %arg6[%c0_19, %c0_20] : memref<1x128xf32, #tpu.memory_space<vmem>>, vector<1x128xf32>
      %22 = vector.broadcast %21 : vector<1x128xf32> to vector<128x128xf32>
      %23 = arith.addf %20, %22 : vector<128x128xf32>
      %cst_21 = arith.constant 0.000000e+00 : f32
      %24 = vector.broadcast %cst_21 : f32 to vector<128x128xf32>
      %25 = arith.maximumf %23, %24 : vector<128x128xf32>
      %26 = arith.truncf %25 : vector<128x128xf32> to vector<128x128xbf16>
      %c0_22 = arith.constant 0 : index
      %c0_23 = arith.constant 0 : index
      %27 = vector.load %arg7[%c0_22, %c0_23] : memref<128x128xbf16, #tpu.memory_space<vmem>>, vector<128x128xbf16>
      %cst_24 = arith.constant dense<0.000000e+00> : vector<128x128xf32>
      %28 = tpu.matmul %26, %27, %cst_24 {dimension_numbers = #tpu.dot_dimension_numbers<[1], [0], [0], [1], [0, 0, 1, 1], [], []>} : vector<128x128xbf16>, vector<128x128xbf16>, vector<128x128xf32> -> vector<128x128xf32>
      %c0_25 = arith.constant 0 : index
      %c0_26 = arith.constant 0 : index
      %29 = vector.load %arg8[%c0_25, %c0_26] : memref<1x128xf32, #tpu.memory_space<vmem>>, vector<1x128xf32>
      %30 = vector.broadcast %29 : vector<1x128xf32> to vector<128x128xf32>
      %31 = arith.addf %28, %30 : vector<128x128xf32>
      %cst_27 = arith.constant 0.000000e+00 : f32
      %32 = vector.broadcast %cst_27 : f32 to vector<128x128xf32>
      %33 = arith.maximumf %31, %32 : vector<128x128xf32>
      %34 = arith.truncf %33 : vector<128x128xf32> to vector<128x128xbf16>
      %c0_28 = arith.constant 0 : index
      %c0_29 = arith.constant 0 : index
      %35 = vector.load %arg9[%c0_28, %c0_29] : memref<128x128xbf16, #tpu.memory_space<vmem>>, vector<128x128xbf16>
      %cst_30 = arith.constant dense<0.000000e+00> : vector<128x128xf32>
      %36 = tpu.matmul %34, %35, %cst_30 {dimension_numbers = #tpu.dot_dimension_numbers<[1], [0], [0], [1], [0, 0, 1, 1], [], []>} : vector<128x128xbf16>, vector<128x128xbf16>, vector<128x128xf32> -> vector<128x128xf32>
      %c0_31 = arith.constant 0 : index
      %c0_32 = arith.constant 0 : index
      %37 = vector.load %arg10[%c0_31, %c0_32] : memref<1x128xf32, #tpu.memory_space<vmem>>, vector<1x128xf32>
      %38 = vector.broadcast %37 : vector<1x128xf32> to vector<128x128xf32>
      %39 = arith.addf %36, %38 : vector<128x128xf32>
      %cst_33 = arith.constant 0.000000e+00 : f32
      %40 = vector.broadcast %cst_33 : f32 to vector<128x128xf32>
      %41 = arith.maximumf %39, %40 : vector<128x128xf32>
      %42 = arith.truncf %41 : vector<128x128xf32> to vector<128x128xbf16>
      %c0_34 = arith.constant 0 : index
      %c0_35 = arith.constant 0 : index
      %43 = vector.load %arg11[%c0_34, %c0_35] : memref<128x128xbf16, #tpu.memory_space<vmem>>, vector<128x128xbf16>
      %cst_36 = arith.constant dense<0.000000e+00> : vector<128x128xf32>
      %44 = tpu.matmul %42, %43, %cst_36 {dimension_numbers = #tpu.dot_dimension_numbers<[1], [0], [0], [1], [0, 0, 1, 1], [], []>} : vector<128x128xbf16>, vector<128x128xbf16>, vector<128x128xf32> -> vector<128x128xf32>
      %c0_37 = arith.constant 0 : index
      %c0_38 = arith.constant 0 : index
      %45 = vector.load %arg12[%c0_37, %c0_38] : memref<1x128xf32, #tpu.memory_space<vmem>>, vector<1x128xf32>
      %46 = vector.broadcast %45 : vector<1x128xf32> to vector<128x128xf32>
      %47 = arith.addf %44, %46 : vector<128x128xf32>
      %cst_39 = arith.constant 0.000000e+00 : f32
      %48 = vector.broadcast %cst_39 : f32 to vector<128x128xf32>
      %49 = arith.maximumf %47, %48 : vector<128x128xf32>
      %50 = arith.truncf %49 : vector<128x128xf32> to vector<128x128xbf16>
      %c0_40 = arith.constant 0 : index
      %c0_41 = arith.constant 0 : index
      %51 = vector.load %arg16[%c0_40, %c0_41] : memref<128x128xbf16, #tpu.memory_space<vmem>>, vector<128x128xbf16>
      tpu.vector_store %arg16[%c0_40, %c0_41], %50 {strides = array<i32>} : memref<128x128xbf16, #tpu.memory_space<vmem>>, vector<128x128xbf16>,
    } else {
    }
    %c0 = arith.constant 0 : index
    %c0_1 = arith.constant 0 : index
    %3 = vector.load %arg16[%c0, %c0_1] : memref<128x128xbf16, #tpu.memory_space<vmem>>, vector<128x128xbf16>
    %c0_2 = arith.constant 0 : index
    %c0_3 = arith.constant 0 : index
    %4 = vector.load %arg13[%c0_2, %c0_3] : memref<128x128xbf16, #tpu.memory_space<vmem>>, vector<128x128xbf16>
    %cst = arith.constant dense<0.000000e+00> : vector<128x128xf32>
    %5 = tpu.matmul %3, %4, %cst {dimension_numbers = #tpu.dot_dimension_numbers<[1], [0], [0], [1], [0, 0, 1, 1], [], []>} : vector<128x128xbf16>, vector<128x128xbf16>, vector<128x128xf32> -> vector<128x128xf32>
    %c0_4 = arith.constant 0 : index
    %c0_5 = arith.constant 0 : index
    %6 = vector.load %arg14[%c0_4, %c0_5] : memref<1x128xf32, #tpu.memory_space<vmem>>, vector<1x128xf32>
    %7 = vector.broadcast %6 : vector<1x128xf32> to vector<128x128xf32>
    %8 = arith.addf %5, %7 : vector<128x128xf32>
    %c0_6 = arith.constant 0 : index
    %c0_7 = arith.constant 0 : index
    %9 = vector.load %arg15[%c0_6, %c0_7] : memref<128x128xf32, #tpu.memory_space<vmem>>, vector<128x128xf32>
    tpu.vector_store %arg15[%c0_6, %c0_7], %8 {strides = array<i32>} : memref<128x128xf32, #tpu.memory_space<vmem>>, vector<128x128xf32>,
    return
  }
  func.func @transform_0(%arg0: i32, %arg1: i32) -> (i32, i32) {
    %c0_i32 = arith.constant 0 : i32
    %c0_i32_0 = arith.constant 0 : i32
    return %arg0, %c0_i32 : i32, i32
  }
  func.func @transform_1(%arg0: i32, %arg1: i32) -> (i32, i32) {
    %c0_i32 = arith.constant 0 : i32
    %c0_i32_0 = arith.constant 0 : i32
    %c0_i32_1 = arith.constant 0 : i32
    return %c0_i32, %c0_i32_0 : i32, i32
  }
  func.func @transform_2(%arg0: i32, %arg1: i32) -> (i32, i32) {
    %c0_i32 = arith.constant 0 : i32
    %c0_i32_0 = arith.constant 0 : i32
    %c0_i32_1 = arith.constant 0 : i32
    return %c0_i32, %c0_i32_0 : i32, i32
  }
  func.func @transform_3(%arg0: i32, %arg1: i32) -> (i32, i32) {
    %c0_i32 = arith.constant 0 : i32
    %c0_i32_0 = arith.constant 0 : i32
    %c0_i32_1 = arith.constant 0 : i32
    return %c0_i32, %c0_i32_0 : i32, i32
  }
  func.func @transform_4(%arg0: i32, %arg1: i32) -> (i32, i32) {
    %c0_i32 = arith.constant 0 : i32
    %c0_i32_0 = arith.constant 0 : i32
    %c0_i32_1 = arith.constant 0 : i32
    return %c0_i32, %c0_i32_0 : i32, i32
  }
  func.func @transform_5(%arg0: i32, %arg1: i32) -> (i32, i32) {
    %c0_i32 = arith.constant 0 : i32
    %c0_i32_0 = arith.constant 0 : i32
    %c0_i32_1 = arith.constant 0 : i32
    return %c0_i32, %c0_i32_0 : i32, i32
  }
  func.func @transform_6(%arg0: i32, %arg1: i32) -> (i32, i32) {
    %c0_i32 = arith.constant 0 : i32
    %c0_i32_0 = arith.constant 0 : i32
    %c0_i32_1 = arith.constant 0 : i32
    return %c0_i32, %c0_i32_0 : i32, i32
  }
  func.func @transform_7(%arg0: i32, %arg1: i32) -> (i32, i32) {
    %c0_i32 = arith.constant 0 : i32
    %c0_i32_0 = arith.constant 0 : i32
    %c0_i32_1 = arith.constant 0 : i32
    return %c0_i32, %c0_i32_0 : i32, i32
  }
  func.func @transform_8(%arg0: i32, %arg1: i32) -> (i32, i32) {
    %c0_i32 = arith.constant 0 : i32
    %c0_i32_0 = arith.constant 0 : i32
    %c0_i32_1 = arith.constant 0 : i32
    return %c0_i32, %c0_i32_0 : i32, i32
  }
  func.func @transform_9(%arg0: i32, %arg1: i32) -> (i32, i32) {
    %c0_i32 = arith.constant 0 : i32
    %c0_i32_0 = arith.constant 0 : i32
    %c0_i32_1 = arith.constant 0 : i32
    return %c0_i32, %c0_i32_0 : i32, i32
  }
  func.func @transform_10(%arg0: i32, %arg1: i32) -> (i32, i32) {
    %c0_i32 = arith.constant 0 : i32
    %c0_i32_0 = arith.constant 0 : i32
    %c0_i32_1 = arith.constant 0 : i32
    return %c0_i32, %c0_i32_0 : i32, i32
  }
  func.func @transform_11(%arg0: i32, %arg1: i32) -> (i32, i32) {
    %c0_i32 = arith.constant 0 : i32
    %c0_i32_0 = arith.constant 0 : i32
    return %c0_i32, %arg1 : i32, i32
  }
  func.func @transform_12(%arg0: i32, %arg1: i32) -> (i32, i32) {
    %c0_i32 = arith.constant 0 : i32
    %c0_i32_0 = arith.constant 0 : i32
    return %c0_i32, %arg1 : i32, i32
  }
  func.func @transform_13(%arg0: i32, %arg1: i32) -> (i32, i32) {
    %c0_i32 = arith.constant 0 : i32
    return %arg0, %arg1 : i32, i32
  }
}

</mosaic_0001>

<llo_original>
// kernel: _mlp_medium_forward.1
$region0: #{_mlp_medium_forward.1}
  #allocation0 [shape = 'u32[]', space=smem, size = 0x4, offset = 0x4, fixed_abs, tag = 'smem constant byte address 0x4 - core index']
  #allocation1 [shape = 'u32[72,128]{1,0:T(1,128)}', space=vmem, size = 0x9000, scoped, tag = 'internal scratch']
  #allocation2 [shape = 'bf16[128,128]{1,0:T(8,128)(2,1)}', space=vmem, size = 0x8000, scoped, tag = 'scratch operand']
  %s0 = inlined_call_operand.vmem [shape: bf16[256,128], index: 0, kind: input, shape index: {}]
  %s1 = inlined_call_operand.vmem [shape: bf16[128,128], index: 1, kind: input, shape index: {}]
  %s2 = inlined_call_operand.vmem [shape: f32[1,128], index: 2, kind: input, shape index: {}]
  %s3 = inlined_call_operand.vmem [shape: bf16[128,128], index: 3, kind: input, shape index: {}]
  %s4 = inlined_call_operand.vmem [shape: f32[1,128], index: 4, kind: input, shape index: {}]
  %s5 = inlined_call_operand.vmem [shape: bf16[128,128], index: 5, kind: input, shape index: {}]
  %s6 = inlined_call_operand.vmem [shape: f32[1,128], index: 6, kind: input, shape index: {}]
  %s7 = inlined_call_operand.vmem [shape: bf16[128,128], index: 7, kind: input, shape index: {}]
  %s8 = inlined_call_operand.vmem [shape: f32[1,128], index: 8, kind: input, shape index: {}]
  %s9 = inlined_call_operand.vmem [shape: bf16[128,128], index: 9, kind: input, shape index: {}]
  %s10 = inlined_call_operand.vmem [shape: f32[1,128], index: 10, kind: input, shape index: {}]
  %s11 = inlined_call_operand.vmem [shape: bf16[128,256], index: 11, kind: input, shape index: {}]
  %s12 = inlined_call_operand.vmem [shape: f32[1,256], index: 12, kind: input, shape index: {}]
  %s13 = inlined_call_operand.vmem [shape: f32[256,256], index: 13, kind: output, shape index: {}]
  %s14 = sld [smem:[#allocation0]]
  $region164: #{_mlp_medium_forward.1} parent=0
    _
  %s16 = ssub.s32 1, %s14
  %s17 = scalar_select 0, %s16, %s14
  $region1: #{_mlp_medium_forward.1} parent=0
    #allocation3 [shape = 'u8[65536]{0}', space=vmem, size = 0x10000, scoped, tag = 'input window, operand 11']
    #allocation4 [shape = 'u8[131072]{0}', space=vmem, size = 0x20000, scoped, tag = 'output window, operand 0']
    loop: start=0, step=1, limit=6
    $region2: #{_mlp_medium_forward.1} parent=1 // loop_pre_header
      _
    $region3: #{_mlp_medium_forward.1} parent=1 // loop_header
      %s19 = sphi 0, %s23
      %p20 = scmp.ge.s32.totalorder %s19, 6
      %s26 = sphi 0, %s38
      %s27 = sphi 0, %s34
      %s28 = sphi 0, %s26
      %s29 = sphi 0, %s27
      %s30 = sphi 0, %s28
      %s31 = sphi 0, %s29
      %s41 = sphi 0, %s43
      %s44 = sphi 0, %s41
      %s45 = sphi 0, %s44
      %s61 = sphi 0, %s45
      %s65 = sphi 0, %s65
      %s67 = sphi 0, %s65
      %s68 = sphi 0, %s67
      %s82 = sphi 0, %s68
      %s86 = sphi 0, %s86
      %s88 = sphi 0, %s86
      %s89 = sphi 0, %s88
      %s103 = sphi 0, %s89
      %s107 = sphi 0, %s107
      %s109 = sphi 0, %s107
      %s110 = sphi 0, %s109
      %s124 = sphi 0, %s110
      %s128 = sphi 0, %s128
      %s130 = sphi 0, %s128
      %s131 = sphi 0, %s130
      %s145 = sphi 0, %s131
      %s149 = sphi 0, %s149
      %s151 = sphi 0, %s149
      %s152 = sphi 0, %s151
      %s166 = sphi 0, %s152
      %s170 = sphi 0, %s170
      %s172 = sphi 0, %s170
      %s173 = sphi 0, %s172
      %s187 = sphi 0, %s173
      %s191 = sphi 0, %s191
      %s193 = sphi 0, %s191
      %s194 = sphi 0, %s193
      %s208 = sphi 0, %s194
      %s212 = sphi 0, %s212
      %s214 = sphi 0, %s212
      %s215 = sphi 0, %s214
      %s229 = sphi 0, %s215
      %s233 = sphi 0, %s233
      %s235 = sphi 0, %s233
      %s236 = sphi 0, %s235
      %s250 = sphi 0, %s236
      %s254 = sphi 0, %s254
      %s256 = sphi 0, %s254
      %s257 = sphi 0, %s256
      %s271 = sphi 0, %s257
      %s277 = sphi 0, %s279
      %s280 = sphi 0, %s277
      %s281 = sphi 0, %s280
      %s297 = sphi 0, %s281
      %s303 = sphi 0, %s305
      %s306 = sphi 0, %s303
      %s307 = sphi 0, %s306
      %s323 = sphi 0, %s307
      %s331 = sphi 0, %s333
      %s334 = sphi 0, %s331
      %s335 = sphi 0, %s334
      %s351 = sphi 0, %s335
    $region4: #{_mlp_medium_forward.1} parent=1 // loop_header_branch
      %22 = sbr.rel (%p20) target = $region8
    $region5: #{_mlp_medium_forward.1} parent=1 // loop_body
      %s24 = ssub.s32 %s19, 1
      %s25 = ssub.s32 %s19, 2
      %s32 = sadd.s32 1, %s27
      %p33 = scmp.ge.s32.totalorder %s32, 2
      %s34 = scalar_select %p33, 0, %s32
      %s35 = sadd.s32 1, %s26
      %s36 = scalar_select %p33, %s35, %s26
      %p37 = scmp.ge.s32.totalorder %s36, 2
      %s38 = scalar_select %p37, 0, %s36
      %s39 = ssub.s32 %s26, %s38
      %p40 = scmp.eq.s32.totalorder %s39, 0
      %s42 = sadd.s32 %s41, 1
      %s43 = scalar_select %p40, %s41, %s42
      %p46 = pneg %p40
      %p47 = scmp.eq.s32.totalorder %s19, 3
      %p48 = por %p46, %p47
      %p49 = scmp.ne.s32.totalorder %s41, %s44
      %p50 = scmp.eq.s32.totalorder %s19, 0
      %p51 = por %p49, %p50
      %p52 = scmp.ne.s32.totalorder %s41, %s44
      %p53 = scmp.eq.s32.totalorder %s24, 3
      %p54 = por %p52, %p53
      %p55 = scmp.ne.s32.totalorder %s44, %s45
      %p56 = scmp.eq.s32.totalorder %s24, 0
      %p57 = por %p55, %p56
      %p58 = scmp.ne.s32.totalorder %s44, %s45
      %p59 = scmp.eq.s32.totalorder %s25, 3
      %p60 = por %p58, %p59
      %p62 = scmp.ne.s32.totalorder %s45, %s61
      %p63 = scmp.eq.s32.totalorder %s25, 0
      %p64 = por %p62, %p63
      %s66 = sadd.s32 %s65, 1
      %p69 = scmp.eq.s32.totalorder %s19, 3
      %p70 = scmp.ne.s32.totalorder %s65, %s67
      %p71 = scmp.eq.s32.totalorder %s19, 0
      %p72 = por %p70, %p71
      %p73 = scmp.ne.s32.totalorder %s65, %s67
      %p74 = scmp.eq.s32.totalorder %s24, 3
      %p75 = por %p73, %p74
      %p76 = scmp.ne.s32.totalorder %s67, %s68
      %p77 = scmp.eq.s32.totalorder %s24, 0
      %p78 = por %p76, %p77
      %p79 = scmp.ne.s32.totalorder %s67, %s68
      %p80 = scmp.eq.s32.totalorder %s25, 3
      %p81 = por %p79, %p80
      %p83 = scmp.ne.s32.totalorder %s68, %s82
      %p84 = scmp.eq.s32.totalorder %s25, 0
      %p85 = por %p83, %p84
      %s87 = sadd.s32 %s86, 1
      %p90 = scmp.eq.s32.totalorder %s19, 3
      %p91 = scmp.ne.s32.totalorder %s86, %s88
      %p92 = scmp.eq.s32.totalorder %s19, 0
      %p93 = por %p91, %p92
      %p94 = scmp.ne.s32.totalorder %s86, %s88
      %p95 = scmp.eq.s32.totalorder %s24, 3
      %p96 = por %p94, %p95
      %p97 = scmp.ne.s32.totalorder %s88, %s89
      %p98 = scmp.eq.s32.totalorder %s24, 0
      %p99 = por %p97, %p98
      %p100 = scmp.ne.s32.totalorder %s88, %s89
      %p101 = scmp.eq.s32.totalorder %s25, 3
      %p102 = por %p100, %p101
      %p104 = scmp.ne.s32.totalorder %s89, %s103
      %p105 = scmp.eq.s32.totalorder %s25, 0
      %p106 = por %p104, %p105
      %s108 = sadd.s32 %s107, 1
      %p111 = scmp.eq.s32.totalorder %s19, 3
      %p112 = scmp.ne.s32.totalorder %s107, %s109
      %p113 = scmp.eq.s32.totalorder %s19, 0
      %p114 = por %p112, %p113
      %p115 = scmp.ne.s32.totalorder %s107, %s109
      %p116 = scmp.eq.s32.totalorder %s24, 3
      %p117 = por %p115, %p116
      %p118 = scmp.ne.s32.totalorder %s109, %s110
      %p119 = scmp.eq.s32.totalorder %s24, 0
      %p120 = por %p118, %p119
      %p121 = scmp.ne.s32.totalorder %s109, %s110
      %p122 = scmp.eq.s32.totalorder %s25, 3
      %p123 = por %p121, %p122
      %p125 = scmp.ne.s32.totalorder %s110, %s124
      %p126 = scmp.eq.s32.totalorder %s25, 0
      %p127 = por %p125, %p126
      %s129 = sadd.s32 %s128, 1
      %p132 = scmp.eq.s32.totalorder %s19, 3
      %p133 = scmp.ne.s32.totalorder %s128, %s130
      %p134 = scmp.eq.s32.totalorder %s19, 0
      %p135 = por %p133, %p134
      %p136 = scmp.ne.s32.totalorder %s128, %s130
      %p137 = scmp.eq.s32.totalorder %s24, 3
      %p138 = por %p136, %p137
      %p139 = scmp.ne.s32.totalorder %s130, %s131
      %p140 = scmp.eq.s32.totalorder %s24, 0
      %p141 = por %p139, %p140
      %p142 = scmp.ne.s32.totalorder %s130, %s131
      %p143 = scmp.eq.s32.totalorder %s25, 3
      %p144 = por %p142, %p143
      %p146 = scmp.ne.s32.totalorder %s131, %s145
      %p147 = scmp.eq.s32.totalorder %s25, 0
      %p148 = por %p146, %p147
      %s150 = sadd.s32 %s149, 1
      %p153 = scmp.eq.s32.totalorder %s19, 3
      %p154 = scmp.ne.s32.totalorder %s149, %s151
      %p155 = scmp.eq.s32.totalorder %s19, 0
      %p156 = por %p154, %p155
      %p157 = scmp.ne.s32.totalorder %s149, %s151
      %p158 = scmp.eq.s32.totalorder %s24, 3
      %p159 = por %p157, %p158
      %p160 = scmp.ne.s32.totalorder %s151, %s152
      %p161 = scmp.eq.s32.totalorder %s24, 0
      %p162 = por %p160, %p161
      %p163 = scmp.ne.s32.totalorder %s151, %s152
      %p164 = scmp.eq.s32.totalorder %s25, 3
      %p165 = por %p163, %p164
      %p167 = scmp.ne.s32.totalorder %s152, %s166
      %p168 = scmp.eq.s32.totalorder %s25, 0
      %p169 = por %p167, %p168
      %s171 = sadd.s32 %s170, 1
      %p174 = scmp.eq.s32.totalorder %s19, 3
      %p175 = scmp.ne.s32.totalorder %s170, %s172
      %p176 = scmp.eq.s32.totalorder %s19, 0
      %p177 = por %p175, %p176
      %p178 = scmp.ne.s32.totalorder %s170, %s172
      %p179 = scmp.eq.s32.totalorder %s24, 3
      %p180 = por %p178, %p179
      %p181 = scmp.ne.s32.totalorder %s172, %s173
      %p182 = scmp.eq.s32.totalorder %s24, 0
      %p183 = por %p181, %p182
      %p184 = scmp.ne.s32.totalorder %s172, %s173
      %p185 = scmp.eq.s32.totalorder %s25, 3
      %p186 = por %p184, %p185
      %p188 = scmp.ne.s32.totalorder %s173, %s187
      %p189 = scmp.eq.s32.totalorder %s25, 0
      %p190 = por %p188, %p189
      %s192 = sadd.s32 %s191, 1
      %p195 = scmp.eq.s32.totalorder %s19, 3
      %p196 = scmp.ne.s32.totalorder %s191, %s193
      %p197 = scmp.eq.s32.totalorder %s19, 0
      %p198 = por %p196, %p197
      %p199 = scmp.ne.s32.totalorder %s191, %s193
      %p200 = scmp.eq.s32.totalorder %s24, 3
      %p201 = por %p199, %p200
      %p202 = scmp.ne.s32.totalorder %s193, %s194
      %p203 = scmp.eq.s32.totalorder %s24, 0
      %p204 = por %p202, %p203
      %p205 = scmp.ne.s32.totalorder %s193, %s194
      %p206 = scmp.eq.s32.totalorder %s25, 3
      %p207 = por %p205, %p206
      %p209 = scmp.ne.s32.totalorder %s194, %s208
      %p210 = scmp.eq.s32.totalorder %s25, 0
      %p211 = por %p209, %p210
      %s213 = sadd.s32 %s212, 1
      %p216 = scmp.eq.s32.totalorder %s19, 3
      %p217 = scmp.ne.s32.totalorder %s212, %s214
      %p218 = scmp.eq.s32.totalorder %s19, 0
      %p219 = por %p217, %p218
      %p220 = scmp.ne.s32.totalorder %s212, %s214
      %p221 = scmp.eq.s32.totalorder %s24, 3
      %p222 = por %p220, %p221
      %p223 = scmp.ne.s32.totalorder %s214, %s215
      %p224 = scmp.eq.s32.totalorder %s24, 0
      %p225 = por %p223, %p224
      %p226 = scmp.ne.s32.totalorder %s214, %s215
      %p227 = scmp.eq.s32.totalorder %s25, 3
      %p228 = por %p226, %p227
      %p230 = scmp.ne.s32.totalorder %s215, %s229
      %p231 = scmp.eq.s32.totalorder %s25, 0
      %p232 = por %p230, %p231
      %s234 = sadd.s32 %s233, 1
      %p237 = scmp.eq.s32.totalorder %s19, 3
      %p238 = scmp.ne.s32.totalorder %s233, %s235
      %p239 = scmp.eq.s32.totalorder %s19, 0
      %p240 = por %p238, %p239
      %p241 = scmp.ne.s32.totalorder %s233, %s235
      %p242 = scmp.eq.s32.totalorder %s24, 3
      %p243 = por %p241, %p242
      %p244 = scmp.ne.s32.totalorder %s235, %s236
      %p245 = scmp.eq.s32.totalorder %s24, 0
      %p246 = por %p244, %p245
      %p247 = scmp.ne.s32.totalorder %s235, %s236
      %p248 = scmp.eq.s32.totalorder %s25, 3
      %p249 = por %p247, %p248
      %p251 = scmp.ne.s32.totalorder %s236, %s250
      %p252 = scmp.eq.s32.totalorder %s25, 0
      %p253 = por %p251, %p252
      %s255 = sadd.s32 %s254, 1
      %p258 = scmp.eq.s32.totalorder %s19, 3
      %p259 = scmp.ne.s32.totalorder %s254, %s256
      %p260 = scmp.eq.s32.totalorder %s19, 0
      %p261 = por %p259, %p260
      %p262 = scmp.ne.s32.totalorder %s254, %s256
      %p263 = scmp.eq.s32.totalorder %s24, 3
      %p264 = por %p262, %p263
      %p265 = scmp.ne.s32.totalorder %s256, %s257
      %p266 = scmp.eq.s32.totalorder %s24, 0
      %p267 = por %p265, %p266
      %p268 = scmp.ne.s32.totalorder %s256, %s257
      %p269 = scmp.eq.s32.totalorder %s25, 3
      %p270 = por %p268, %p269
      %p272 = scmp.ne.s32.totalorder %s257, %s271
      %p273 = scmp.eq.s32.totalorder %s25, 0
      %p274 = por %p272, %p273
      %s275 = ssub.s32 %s27, %s34
      %p276 = scmp.eq.s32.totalorder %s275, 0
      %s278 = sadd.s32 %s277, 1
      %s279 = scalar_select %p276, %s277, %s278
      %p282 = pneg %p276
      %p283 = scmp.eq.s32.totalorder %s19, 3
      %p284 = por %p282, %p283
      %p285 = scmp.ne.s32.totalorder %s277, %s280
      %p286 = scmp.eq.s32.totalorder %s19, 0
      %p287 = por %p285, %p286
      %p288 = scmp.ne.s32.totalorder %s277, %s280
      %p289 = scmp.eq.s32.totalorder %s24, 3
      %p290 = por %p288, %p289
      %p291 = scmp.ne.s32.totalorder %s280, %s281
      %p292 = scmp.eq.s32.totalorder %s24, 0
      %p293 = por %p291, %p292
      %p294 = scmp.ne.s32.totalorder %s280, %s281
      %p295 = scmp.eq.s32.totalorder %s25, 3
      %p296 = por %p294, %p295
      %p298 = scmp.ne.s32.totalorder %s281, %s297
      %p299 = scmp.eq.s32.totalorder %s25, 0
      %p300 = por %p298, %p299
      %s301 = ssub.s32 %s27, %s34
      %p302 = scmp.eq.s32.totalorder %s301, 0
      %s304 = sadd.s32 %s303, 1
      %s305 = scalar_select %p302, %s303, %s304
      %p308 = pneg %p302
      %p309 = scmp.eq.s32.totalorder %s19, 3
      %p310 = por %p308, %p309
      %p311 = scmp.ne.s32.totalorder %s303, %s306
      %p312 = scmp.eq.s32.totalorder %s19, 0
      %p313 = por %p311, %p312
      %p314 = scmp.ne.s32.totalorder %s303, %s306
      %p315 = scmp.eq.s32.totalorder %s24, 3
      %p316 = por %p314, %p315
      %p317 = scmp.ne.s32.totalorder %s306, %s307
      %p318 = scmp.eq.s32.totalorder %s24, 0
      %p319 = por %p317, %p318
      %p320 = scmp.ne.s32.totalorder %s306, %s307
      %p321 = scmp.eq.s32.totalorder %s25, 3
      %p322 = por %p320, %p321
      %p324 = scmp.ne.s32.totalorder %s307, %s323
      %p325 = scmp.eq.s32.totalorder %s25, 0
      %p326 = por %p324, %p325
      %s327 = ssub.s32 %s26, %s38
      %s328 = ssub.s32 %s27, %s34
      %s329 = sor.u32 %s327, %s328
      %p330 = scmp.eq.s32.totalorder %s329, 0
      %s332 = sadd.s32 %s331, 1
      %s333 = scalar_select %p330, %s331, %s332
      %p336 = pneg %p330
      %p337 = scmp.eq.s32.totalorder %s19, 3
      %p338 = por %p336, %p337
      %p339 = scmp.ne.s32.totalorder %s331, %s334
      %p340 = scmp.eq.s32.totalorder %s19, 0
      %p341 = por %p339, %p340
      %p342 = scmp.ne.s32.totalorder %s331, %s334
      %p343 = scmp.eq.s32.totalorder %s24, 3
      %p344 = por %p342, %p343
      %p345 = scmp.ne.s32.totalorder %s334, %s335
      %p346 = scmp.eq.s32.totalorder %s24, 0
      %p347 = por %p345, %p346
      %p348 = scmp.ne.s32.totalorder %s334, %s335
      %p349 = scmp.eq.s32.totalorder %s25, 3
      %p350 = por %p348, %p349
      %p352 = scmp.ne.s32.totalorder %s335, %s351
      %p353 = scmp.eq.s32.totalorder %s25, 0
      %p354 = por %p352, %p353
      %p355 = scmp.le.s32.totalorder 1, %s19
      %p356 = scmp.lt.s32.totalorder %s19, 5
      %p357 = pnand %p355, %p356
      %p358 = pneg %p357
      // Predicated region
      $region9: #{_mlp_medium_forward.1} parent=5 // pred_check
        _
      $region10: #{_mlp_medium_forward.1} parent=5 // pred_check_branch
        %360 = sbr.rel (%p357) target = $region12
      $region11: #{_mlp_medium_forward.1} parent=5 // pred_region
        %s361 = ssub.s32 %s19, 1
        // Predicated region
        $region13: #{_mlp_medium_forward.1} parent=11 // pred_check
          %p362 = pneg %p78
        $region14: #{_mlp_medium_forward.1} parent=11 // pred_check_branch
          %364 = sbr.rel (%p362) target = $region16
        $region15: #{_mlp_medium_forward.1} parent=11 // pred_region
          _
        $region16: #{_mlp_medium_forward.1} parent=11 // pred_fallthru
          _
        // Predicated region
        $region17: #{_mlp_medium_forward.1} parent=11 // pred_check
          %p365 = pneg %p99
        $region18: #{_mlp_medium_forward.1} parent=11 // pred_check_branch
          %367 = sbr.rel (%p365) target = $region20
        $region19: #{_mlp_medium_forward.1} parent=11 // pred_region
          _
        $region20: #{_mlp_medium_forward.1} parent=11 // pred_fallthru
          _
        // Predicated region
        $region21: #{_mlp_medium_forward.1} parent=11 // pred_check
          %p368 = pneg %p120
        $region22: #{_mlp_medium_forward.1} parent=11 // pred_check_branch
          %370 = sbr.rel (%p368) target = $region24
        $region23: #{_mlp_medium_forward.1} parent=11 // pred_region
          _
        $region24: #{_mlp_medium_forward.1} parent=11 // pred_fallthru
          _
        // Predicated region
        $region25: #{_mlp_medium_forward.1} parent=11 // pred_check
          %p371 = pneg %p141
        $region26: #{_mlp_medium_forward.1} parent=11 // pred_check_branch
          %373 = sbr.rel (%p371) target = $region28
        $region27: #{_mlp_medium_forward.1} parent=11 // pred_region
          _
        $region28: #{_mlp_medium_forward.1} parent=11 // pred_fallthru
          _
        // Predicated region
        $region29: #{_mlp_medium_forward.1} parent=11 // pred_check
          %p374 = pneg %p162
        $region30: #{_mlp_medium_forward.1} parent=11 // pred_check_branch
          %376 = sbr.rel (%p374) target = $region32
        $region31: #{_mlp_medium_forward.1} parent=11 // pred_region
          _
        $region32: #{_mlp_medium_forward.1} parent=11 // pred_fallthru
          _
        // Predicated region
        $region33: #{_mlp_medium_forward.1} parent=11 // pred_check
          %p377 = pneg %p183
        $region34: #{_mlp_medium_forward.1} parent=11 // pred_check_branch
          %379 = sbr.rel (%p377) target = $region36
        $region35: #{_mlp_medium_forward.1} parent=11 // pred_region
          _
        $region36: #{_mlp_medium_forward.1} parent=11 // pred_fallthru
          _
        // Predicated region
        $region37: #{_mlp_medium_forward.1} parent=11 // pred_check
          %p380 = pneg %p204
        $region38: #{_mlp_medium_forward.1} parent=11 // pred_check_branch
          %382 = sbr.rel (%p380) target = $region40
        $region39: #{_mlp_medium_forward.1} parent=11 // pred_region
          _
        $region40: #{_mlp_medium_forward.1} parent=11 // pred_fallthru
          _
        // Predicated region
        $region41: #{_mlp_medium_forward.1} parent=11 // pred_check
          %p383 = pneg %p225
        $region42: #{_mlp_medium_forward.1} parent=11 // pred_check_branch
          %385 = sbr.rel (%p383) target = $region44
        $region43: #{_mlp_medium_forward.1} parent=11 // pred_region
          _
        $region44: #{_mlp_medium_forward.1} parent=11 // pred_fallthru
          _
        // Predicated region
        $region45: #{_mlp_medium_forward.1} parent=11 // pred_check
          %p386 = pneg %p246
        $region46: #{_mlp_medium_forward.1} parent=11 // pred_check_branch
          %388 = sbr.rel (%p386) target = $region48
        $region47: #{_mlp_medium_forward.1} parent=11 // pred_region
          _
        $region48: #{_mlp_medium_forward.1} parent=11 // pred_fallthru
          _
        // Predicated region
        $region49: #{_mlp_medium_forward.1} parent=11 // pred_check
          %p389 = pneg %p267
        $region50: #{_mlp_medium_forward.1} parent=11 // pred_check_branch
          %391 = sbr.rel (%p389) target = $region52
        $region51: #{_mlp_medium_forward.1} parent=11 // pred_region
          _
        $region52: #{_mlp_medium_forward.1} parent=11 // pred_fallthru
          _
      $region12: #{_mlp_medium_forward.1} parent=5 // pred_fallthru
        _
      %p392 = scmp.lt.s32.totalorder %s19, 4
      // Predicated region
      $region53: #{_mlp_medium_forward.1} parent=5 // pred_check
        %p393 = pneg %p392
      $region54: #{_mlp_medium_forward.1} parent=5 // pred_check_branch
        %395 = sbr.rel (%p393) target = $region56
      $region55: #{_mlp_medium_forward.1} parent=5 // pred_region
        // Predicated region
        $region57: #{_mlp_medium_forward.1} parent=55 // pred_check
          %p396 = pneg %p51
        $region58: #{_mlp_medium_forward.1} parent=55 // pred_check_branch
          %398 = sbr.rel (%p396) target = $region60
        $region59: #{_mlp_medium_forward.1} parent=55 // pred_region
          %s399 = smul.u32 16, %s26
          %p400 = scmp.lt.s32.totalorder %s399, 31
          %s401 = scalar_select %p400, %s399, 31
          %s402 = smul.addr %s401, 4
          %s403 = scalar_lea.vmem %s0, %s402
          %s404 = smul.u32 16, %s26
        $region60: #{_mlp_medium_forward.1} parent=55 // pred_fallthru
          _
        // Predicated region
        $region61: #{_mlp_medium_forward.1} parent=55 // pred_check
          %p405 = pneg %p287
        $region62: #{_mlp_medium_forward.1} parent=55 // pred_check_branch
          %407 = sbr.rel (%p405) target = $region64
        $region63: #{_mlp_medium_forward.1} parent=55 // pred_region
          %s408 = sand.u32 %s277, 1
          %s409 = sand.u32 %s277, 1
          %s410 = smul.addr %s409, 64
          %s411 = scalar_lea.vmem [#allocation3], %s410
          %s412 = smul.addr %s27, 4
          %s413 = scalar_lea.vmem %s11, %s412
          // Predicated region
          $region65: #{_mlp_medium_forward.1} parent=63 // pred_check
            _
          $region66: #{_mlp_medium_forward.1} parent=63 // pred_check_branch
            %415 = sbr.rel (0) target = $region68
          $region67: #{_mlp_medium_forward.1} parent=63 // pred_region
            // Predicated region
            $region69: #{_mlp_medium_forward.1} parent=67 // pred_check
              _
            $region70: #{_mlp_medium_forward.1} parent=67 // pred_check_branch
              %417 = sbr.rel target = $region72
            $region71: #{_mlp_medium_forward.1} parent=67 // pred_region
              // Predicated region
              $region84: #{_mlp_medium_forward.1} parent=71 // pred_check
                _
              $region85: #{_mlp_medium_forward.1} parent=71 // pred_check_branch
                %463 = sbr.rel (0) target = $region87
              $region86: #{_mlp_medium_forward.1} parent=71 // pred_region
                loop: start=0, step=1, limit=1
                $region88: #{_mlp_medium_forward.1} parent=86 // loop_pre_header
                  _
                $region89: #{_mlp_medium_forward.1} parent=86 // loop_header
                  %s465 = sphi 0, %s469
                  %p466 = scmp.ge.s32.totalorder %s465, 1
                  %s470 = sphi %s413, %s413
                  %s471 = sphi %s411, %s411
                $region90: #{_mlp_medium_forward.1} parent=86 // loop_header_branch
                  %468 = sbr.rel (%p466) target = $region94
                $region91: #{_mlp_medium_forward.1} parent=86 // loop_body
                  _
                $region92: #{_mlp_medium_forward.1} parent=86 // loop_footer
                  %s469 = sadd.s32 1, %s465
                $region93: #{_mlp_medium_forward.1} parent=86 // loop_footer_branch
                  %464 = sbr.rel target = $region89
                $region94: #{_mlp_medium_forward.1} parent=86 // loop_exit
                  _
                %s473 = ssub.s32 16, 1
                loop: start=0, step=1, limit=1
                $region95: #{_mlp_medium_forward.1} parent=86 // loop_pre_header
                  _
                $region96: #{_mlp_medium_forward.1} parent=86 // loop_header
                  %s475 = sphi 0, %s479
                  %p476 = scmp.ge.s32.totalorder %s475, 1
                  %s480 = sphi %s413, %s413
                  %s481 = sphi %s411, %s411
                $region97: #{_mlp_medium_forward.1} parent=86 // loop_header_branch
                  %478 = sbr.rel (%p476) target = $region101
                $region98: #{_mlp_medium_forward.1} parent=86 // loop_body
                  %v482 = vld [vmem:[%s480] sm:%s473]
                  %483 = vst [vmem:[%s481] sm:%s473] %v482
                  %v484 = vld [vmem:[%s480 + $0x8] sm:%s473]
                  %485 = vst [vmem:[%s481 + $0x4] sm:%s473] %v484
                  %v486 = vld [vmem:[%s480 + $0x10] sm:%s473]
                  %487 = vst [vmem:[%s481 + $0x8] sm:%s473] %v486
                  %v488 = vld [vmem:[%s480 + $0x18] sm:%s473]
                  %489 = vst [vmem:[%s481 + $0xc] sm:%s473] %v488
                  %v490 = vld [vmem:[%s480 + $0x20] sm:%s473]
                  %491 = vst [vmem:[%s481 + $0x10] sm:%s473] %v490
                  %v492 = vld [vmem:[%s480 + $0x28] sm:%s473]
                  %493 = vst [vmem:[%s481 + $0x14] sm:%s473] %v492
                  %v494 = vld [vmem:[%s480 + $0x30] sm:%s473]
                  %495 = vst [vmem:[%s481 + $0x18] sm:%s473] %v494
                  %v496 = vld [vmem:[%s480 + $0x38] sm:%s473]
                  %497 = vst [vmem:[%s481 + $0x1c] sm:%s473] %v496
                  %v498 = vld [vmem:[%s480 + $0x40] sm:%s473]
                  %499 = vst [vmem:[%s481 + $0x20] sm:%s473] %v498
                  %v500 = vld [vmem:[%s480 + $0x48] sm:%s473]
                  %501 = vst [vmem:[%s481 + $0x24] sm:%s473] %v500
                  %v502 = vld [vmem:[%s480 + $0x50] sm:%s473]
                  %503 = vst [vmem:[%s481 + $0x28] sm:%s473] %v502
                  %v504 = vld [vmem:[%s480 + $0x58] sm:%s473]
                  %505 = vst [vmem:[%s481 + $0x2c] sm:%s473] %v504
                  %v506 = vld [vmem:[%s480 + $0x60] sm:%s473]
                  %507 = vst [vmem:[%s481 + $0x30] sm:%s473] %v506
                  %v508 = vld [vmem:[%s480 + $0x68] sm:%s473]
                  %509 = vst [vmem:[%s481 + $0x34] sm:%s473] %v508
                  %v510 = vld [vmem:[%s480 + $0x70] sm:%s473]
                  %511 = vst [vmem:[%s481 + $0x38] sm:%s473] %v510
                  %v512 = vld [vmem:[%s480 + $0x78] sm:%s473]
                  %513 = vst [vmem:[%s481 + $0x3c] sm:%s473] %v512
                $region99: #{_mlp_medium_forward.1} parent=86 // loop_footer
                  %s479 = sadd.s32 1, %s475
                $region100: #{_mlp_medium_forward.1} parent=86 // loop_footer_branch
                  %474 = sbr.rel target = $region96
                $region101: #{_mlp_medium_forward.1} parent=86 // loop_exit
                  _
              $region87: #{_mlp_medium_forward.1} parent=71 // pred_fallthru
                _
            $region72: #{_mlp_medium_forward.1} parent=67 // pred_fallthru
              _
            // Predicated region
            $region73: #{_mlp_medium_forward.1} parent=67 // pred_check
              _
            $region74: #{_mlp_medium_forward.1} parent=67 // pred_check_branch
              %419 = sbr.rel (0) target = $region76
            $region75: #{_mlp_medium_forward.1} parent=67 // pred_region
              %s421 = ssub.s32 16, 1
              loop: start=0, step=1, limit=1
              $region77: #{_mlp_medium_forward.1} parent=75 // loop_pre_header
                _
              $region78: #{_mlp_medium_forward.1} parent=75 // loop_header
                %s423 = sphi 0, %s427
                %p424 = scmp.ge.s32.totalorder %s423, 1
                %s428 = sphi %s413, %s413
                %s429 = sphi %s411, %s411
              $region79: #{_mlp_medium_forward.1} parent=75 // loop_header_branch
                %426 = sbr.rel (%p424) target = $region83
              $region80: #{_mlp_medium_forward.1} parent=75 // loop_body
                %v430 = vld [vmem:[%s428] sm:%s421]
                %431 = vst [vmem:[%s429] sm:%s421] %v430
                %v432 = vld [vmem:[%s428 + $0x8] sm:%s421]
                %433 = vst [vmem:[%s429 + $0x4] sm:%s421] %v432
                %v434 = vld [vmem:[%s428 + $0x10] sm:%s421]
                %435 = vst [vmem:[%s429 + $0x8] sm:%s421] %v434
                %v436 = vld [vmem:[%s428 + $0x18] sm:%s421]
                %437 = vst [vmem:[%s429 + $0xc] sm:%s421] %v436
                %v438 = vld [vmem:[%s428 + $0x20] sm:%s421]
                %439 = vst [vmem:[%s429 + $0x10] sm:%s421] %v438
                %v440 = vld [vmem:[%s428 + $0x28] sm:%s421]
                %441 = vst [vmem:[%s429 + $0x14] sm:%s421] %v440
                %v442 = vld [vmem:[%s428 + $0x30] sm:%s421]
                %443 = vst [vmem:[%s429 + $0x18] sm:%s421] %v442
                %v444 = vld [vmem:[%s428 + $0x38] sm:%s421]
                %445 = vst [vmem:[%s429 + $0x1c] sm:%s421] %v444
                %v446 = vld [vmem:[%s428 + $0x40] sm:%s421]
                %447 = vst [vmem:[%s429 + $0x20] sm:%s421] %v446
                %v448 = vld [vmem:[%s428 + $0x48] sm:%s421]
                %449 = vst [vmem:[%s429 + $0x24] sm:%s421] %v448
                %v450 = vld [vmem:[%s428 + $0x50] sm:%s421]
                %451 = vst [vmem:[%s429 + $0x28] sm:%s421] %v450
                %v452 = vld [vmem:[%s428 + $0x58] sm:%s421]
                %453 = vst [vmem:[%s429 + $0x2c] sm:%s421] %v452
                %v454 = vld [vmem:[%s428 + $0x60] sm:%s421]
                %455 = vst [vmem:[%s429 + $0x30] sm:%s421] %v454
                %v456 = vld [vmem:[%s428 + $0x68] sm:%s421]
                %457 = vst [vmem:[%s429 + $0x34] sm:%s421] %v456
                %v458 = vld [vmem:[%s428 + $0x70] sm:%s421]
                %459 = vst [vmem:[%s429 + $0x38] sm:%s421] %v458
                %v460 = vld [vmem:[%s428 + $0x78] sm:%s421]
                %461 = vst [vmem:[%s429 + $0x3c] sm:%s421] %v460
              $region81: #{_mlp_medium_forward.1} parent=75 // loop_footer
                %s427 = sadd.s32 1, %s423
              $region82: #{_mlp_medium_forward.1} parent=75 // loop_footer_branch
                %422 = sbr.rel target = $region78
              $region83: #{_mlp_medium_forward.1} parent=75 // loop_exit
                _
            $region76: #{_mlp_medium_forward.1} parent=67 // pred_fallthru
              _
          $region68: #{_mlp_medium_forward.1} parent=63 // pred_fallthru
            _
          %514 = vnop
        $region64: #{_mlp_medium_forward.1} parent=55 // pred_fallthru
          _
        // Predicated region
        $region102: #{_mlp_medium_forward.1} parent=55 // pred_check
          %p515 = pneg %p313
        $region103: #{_mlp_medium_forward.1} parent=55 // pred_check_branch
          %517 = sbr.rel (%p515) target = $region105
        $region104: #{_mlp_medium_forward.1} parent=55 // pred_region
          %p518 = scmp.lt.s32.totalorder %s27, 1
          %s519 = scalar_select %p518, %s27, 1
          %s520 = scalar_lea.vmem %s12, %s519
        $region105: #{_mlp_medium_forward.1} parent=55 // pred_fallthru
          _
      $region56: #{_mlp_medium_forward.1} parent=5 // pred_fallthru
        _
      %p521 = scmp.le.s32.totalorder 1, %s19
      %p522 = scmp.lt.s32.totalorder %s19, 5
      %p523 = pnand %p521, %p522
      %p524 = pneg %p523
      // Predicated region
      $region106: #{_mlp_medium_forward.1} parent=5 // pred_check
        _
      $region107: #{_mlp_medium_forward.1} parent=5 // pred_check_branch
        %526 = sbr.rel (%p523) target = $region109
      $region108: #{_mlp_medium_forward.1} parent=5 // pred_region
        %s527 = ssub.s32 %s19, 1
        %s528 = sand.u32 %s280, 1
        %s529 = sand.u32 %s280, 1
        %s530 = smul.addr %s529, 64
        %s531 = scalar_lea.vmem [#allocation3], %s530
        // Predicated region
        $region110: #{_mlp_medium_forward.1} parent=108 // pred_check
          %p532 = pneg %p293
        $region111: #{_mlp_medium_forward.1} parent=108 // pred_check_branch
          %534 = sbr.rel (%p532) target = $region113
        $region112: #{_mlp_medium_forward.1} parent=108 // pred_region
          _
        $region113: #{_mlp_medium_forward.1} parent=108 // pred_fallthru
          _
        %s535 = smul.u32 16, %s28
        %p536 = scmp.lt.s32.totalorder %s535, 31
        %s537 = scalar_select %p536, %s535, 31
        %s538 = smul.addr %s537, 4
        %s539 = scalar_lea.vmem %s0, %s538
        %p540 = pneg %p57
        %p541 = pneg %p54
        %p542 = pneg %p78
        %p543 = pneg %p75
        %p544 = pneg %p99
        %p545 = pneg %p96
        %p546 = pneg %p120
        %p547 = pneg %p117
        %p548 = pneg %p141
        %p549 = pneg %p138
        %p550 = pneg %p162
        %p551 = pneg %p159
        %p552 = pneg %p183
        %p553 = pneg %p180
        %p554 = pneg %p204
        %p555 = pneg %p201
        %p556 = pneg %p225
        %p557 = pneg %p222
        %p558 = pneg %p246
        %p559 = pneg %p243
        %p560 = pneg %p267
        %p561 = pneg %p264
        %s562 = sand.u32 %s280, 1
        %s563 = sand.u32 %s280, 1
        %s564 = smul.addr %s563, 64
        %s565 = scalar_lea.vmem [#allocation3], %s564
        %p566 = pneg %p293
        %p567 = pneg %p290
        %p568 = scmp.lt.s32.totalorder %s29, 1
        %s569 = scalar_select %p568, %s29, 1
        %s570 = scalar_lea.vmem %s12, %s569
        %p571 = pneg %p319
        %p572 = pneg %p316
        %p573 = pneg %p347
        %p574 = pneg %p344
        %s575 = sand.u32 %s334, 1
        %s576 = sand.u32 %s334, 1
        %s577 = smul.addr %s576, 128
        %s578 = scalar_lea.vmem [#allocation4], %s577
        %s579 = smul.u32 16, %s28
        %p580 = scmp.lt.s32.totalorder %s579, 31
        %s581 = scalar_select %p580, %s579, 31
        %s582 = smul.addr %s581, 4
        %s583 = scalar_lea.vmem %s0, %s582
        %s584 = smul.u32 16, %s28
        %p585 = scmp.lt.s32.totalorder %s29, 1
        %s586 = scalar_select %p585, %s29, 1
        %s587 = scalar_lea.vmem %s12, %s586
        %s588 = smul.u32 16, %s28
        %p589 = scmp.eq.s32.totalorder %s29, 0
        // Predicated region
        $region114: #{_mlp_medium_forward.1} parent=108 // pred_check
          %p590 = pneg %p589
        $region115: #{_mlp_medium_forward.1} parent=108 // pred_check_branch
          %592 = sbr.rel (%p590) target = $region117
        $region116: #{_mlp_medium_forward.1} parent=108 // pred_region
          %v593 = vld [vmem:[%s583] sm:$0xf]
          %v594 = vld [vmem:[%s583 + $0x4] sm:$0xf]
          %v595 = vld [vmem:[%s583 + $0x8] sm:$0xf]
          %v596 = vld [vmem:[%s583 + $0xc] sm:$0xf]
          %v597 = vld [vmem:[%s583 + $0x10] sm:$0xf]
          %v598 = vld [vmem:[%s583 + $0x14] sm:$0xf]
          %v599 = vld [vmem:[%s583 + $0x18] sm:$0xf]
          %v600 = vld [vmem:[%s583 + $0x1c] sm:$0xf]
          %v601 = vld [vmem:[%s583 + $0x20] sm:$0xf]
          %v602 = vld [vmem:[%s583 + $0x24] sm:$0xf]
          %v603 = vld [vmem:[%s583 + $0x28] sm:$0xf]
          %v604 = vld [vmem:[%s583 + $0x2c] sm:$0xf]
          %v605 = vld [vmem:[%s583 + $0x30] sm:$0xf]
          %v606 = vld [vmem:[%s583 + $0x34] sm:$0xf]
          %v607 = vld [vmem:[%s583 + $0x38] sm:$0xf]
          %v608 = vld [vmem:[%s583 + $0x3c] sm:$0xf]
          %v609 = vld [vmem:[%s1] sm:$0xf]
          %v610 = vld [vmem:[%s1 + $0x4] sm:$0xf]
          %v611 = vld [vmem:[%s1 + $0x8] sm:$0xf]
          %v612 = vld [vmem:[%s1 + $0xc] sm:$0xf]
          %v613 = vld [vmem:[%s1 + $0x10] sm:$0xf]
          %v614 = vld [vmem:[%s1 + $0x14] sm:$0xf]
          %v615 = vld [vmem:[%s1 + $0x18] sm:$0xf]
          %v616 = vld [vmem:[%s1 + $0x1c] sm:$0xf]
          %v617 = vld [vmem:[%s1 + $0x20] sm:$0xf]
          %v618 = vld [vmem:[%s1 + $0x24] sm:$0xf]
          %v619 = vld [vmem:[%s1 + $0x28] sm:$0xf]
          %v620 = vld [vmem:[%s1 + $0x2c] sm:$0xf]
          %v621 = vld [vmem:[%s1 + $0x30] sm:$0xf]
          %v622 = vld [vmem:[%s1 + $0x34] sm:$0xf]
          %v623 = vld [vmem:[%s1 + $0x38] sm:$0xf]
          %v624 = vld [vmem:[%s1 + $0x3c] sm:$0xf]
          %v625 = vld [vmem:[%s2] sm:$0x1]
          %v627 = vperm.slane %v625, 0
          %v645 = vunpack.c.l.b16 %v593
          %v646 = vunpack.c.l.b16 %v594
          %v647 = vunpack.c.l.b16 %v595
          %v648 = vunpack.c.l.b16 %v596
          %v649 = vunpack.c.l.b16 %v597
          %v650 = vunpack.c.l.b16 %v598
          %v651 = vunpack.c.l.b16 %v599
          %v652 = vunpack.c.l.b16 %v600
          %v653 = vunpack.c.l.b16 %v601
          %v654 = vunpack.c.l.b16 %v602
          %v655 = vunpack.c.l.b16 %v603
          %v656 = vunpack.c.l.b16 %v604
          %v657 = vunpack.c.l.b16 %v605
          %v658 = vunpack.c.l.b16 %v606
          %v659 = vunpack.c.l.b16 %v607
          %v660 = vunpack.c.l.b16 %v608
          %v661 = vpack.c.b16 %v646, %v645
          %v662 = vpack.c.b16 %v648, %v647
          %v663 = vpack.c.b16 %v650, %v649
          %v664 = vpack.c.b16 %v652, %v651
          %v665 = vpack.c.b16 %v654, %v653
          %v666 = vpack.c.b16 %v656, %v655
          %v667 = vpack.c.b16 %v658, %v657
          %v668 = vpack.c.b16 %v660, %v659
          %v693 = vunpack.c.l.b16 %v609
          %v694 = vunpack.c.l.b16 %v610
          %v695 = vunpack.c.l.b16 %v611
          %v696 = vunpack.c.l.b16 %v612
          %v697 = vunpack.c.l.b16 %v613
          %v698 = vunpack.c.l.b16 %v614
          %v699 = vunpack.c.l.b16 %v615
          %v700 = vunpack.c.l.b16 %v616
          %v701 = vunpack.c.l.b16 %v617
          %v702 = vunpack.c.l.b16 %v618
          %v703 = vunpack.c.l.b16 %v619
          %v704 = vunpack.c.l.b16 %v620
          %v705 = vunpack.c.l.b16 %v621
          %v706 = vunpack.c.l.b16 %v622
          %v707 = vunpack.c.l.b16 %v623
          %v708 = vunpack.c.l.b16 %v624
          %v709 = vpack.c.b16 %v694, %v693
          %v710 = vpack.c.b16 %v696, %v695
          %v711 = vpack.c.b16 %v698, %v697
          %v712 = vpack.c.b16 %v700, %v699
          %v713 = vpack.c.b16 %v702, %v701
          %v714 = vpack.c.b16 %v704, %v703
          %v715 = vpack.c.b16 %v706, %v705
          %v716 = vpack.c.b16 %v708, %v707
          %725 = vmatpush.bf16.msra.mxu0 %v716
          %726 = vmatpush.bf16.msra.mxu0 %v715
          %727 = vmatpush.bf16.msra.mxu0 %v714
          %728 = vmatpush.bf16.msra.mxu0 %v713
          %729 = vmatpush.bf16.msra.mxu0 %v712
          %730 = vmatpush.bf16.msra.mxu0 %v711
          %731 = vmatpush.bf16.msra.mxu0 %v710
          %732 = vmatpush.bf16.msra.mxu0 %v709
          %733 = vmatmul.bf16.gmra.mxu0 %v661
          %v734 = vpop.f32.mrf.mxu0
          %v735 = vadd.f32 %v627, %v734
          %v736 = vpop.f32.mrf.mxu0
          %v737 = vadd.f32 %v627, %v736
          %738 = vmatmul.bf16.gmra.mxu0 %v662
          %v739 = vpop.f32.mrf.mxu0
          %v740 = vadd.f32 %v627, %v739
          %v741 = vpop.f32.mrf.mxu0
          %v742 = vadd.f32 %v627, %v741
          %743 = vmatmul.bf16.gmra.mxu0 %v663
          %v744 = vpop.f32.mrf.mxu0
          %v745 = vadd.f32 %v627, %v744
          %v746 = vpop.f32.mrf.mxu0
          %v747 = vadd.f32 %v627, %v746
          %748 = vmatmul.bf16.gmra.mxu0 %v664
          %v749 = vpop.f32.mrf.mxu0
          %v750 = vadd.f32 %v627, %v749
          %v751 = vpop.f32.mrf.mxu0
          %v752 = vadd.f32 %v627, %v751
          %753 = vmatmul.bf16.gmra.mxu0 %v665
          %v754 = vpop.f32.mrf.mxu0
          %v755 = vadd.f32 %v627, %v754
          %v756 = vpop.f32.mrf.mxu0
          %v757 = vadd.f32 %v627, %v756
          %758 = vmatmul.bf16.gmra.mxu0 %v666
          %v759 = vpop.f32.mrf.mxu0
          %v760 = vadd.f32 %v627, %v759
          %v761 = vpop.f32.mrf.mxu0
          %v762 = vadd.f32 %v627, %v761
          %763 = vmatmul.bf16.gmra.mxu0 %v667
          %v764 = vpop.f32.mrf.mxu0
          %v765 = vadd.f32 %v627, %v764
          %v766 = vpop.f32.mrf.mxu0
          %v767 = vadd.f32 %v627, %v766
          %768 = vmatmul.bf16.gmra.mxu0 %v668
          %v769 = vpop.f32.mrf.mxu0
          %v770 = vadd.f32 %v627, %v769
          %v771 = vpop.f32.mrf.mxu0
          %v772 = vadd.f32 %v627, %v771
          %773 = vdwg.mxu0
          %v774 = vmax.f32 %v735, 0.0
          %v775 = vmax.f32 %v737, 0.0
          %v776 = vmax.f32 %v740, 0.0
          %v777 = vmax.f32 %v742, 0.0
          %v778 = vmax.f32 %v745, 0.0
          %v779 = vmax.f32 %v747, 0.0
          %v780 = vmax.f32 %v750, 0.0
          %v781 = vmax.f32 %v752, 0.0
          %v782 = vmax.f32 %v755, 0.0
          %v783 = vmax.f32 %v757, 0.0
          %v784 = vmax.f32 %v760, 0.0
          %v785 = vmax.f32 %v762, 0.0
          %v786 = vmax.f32 %v765, 0.0
          %v787 = vmax.f32 %v767, 0.0
          %v788 = vmax.f32 %v770, 0.0
          %v789 = vmax.f32 %v772, 0.0
          %v790 = vpack.c.bf16 %v775, %v774
          %v791 = vpack.c.bf16 %v777, %v776
          %v792 = vpack.c.bf16 %v779, %v778
          %v793 = vpack.c.bf16 %v781, %v780
          %v794 = vpack.c.bf16 %v783, %v782
          %v795 = vpack.c.bf16 %v785, %v784
          %v796 = vpack.c.bf16 %v787, %v786
          %v797 = vpack.c.bf16 %v789, %v788
          %v798 = vld [vmem:[%s3] sm:$0xf]
          %v799 = vld [vmem:[%s3 + $0x4] sm:$0xf]
          %v800 = vld [vmem:[%s3 + $0x8] sm:$0xf]
          %v801 = vld [vmem:[%s3 + $0xc] sm:$0xf]
          %v802 = vld [vmem:[%s3 + $0x10] sm:$0xf]
          %v803 = vld [vmem:[%s3 + $0x14] sm:$0xf]
          %v804 = vld [vmem:[%s3 + $0x18] sm:$0xf]
          %v805 = vld [vmem:[%s3 + $0x1c] sm:$0xf]
          %v806 = vld [vmem:[%s3 + $0x20] sm:$0xf]
          %v807 = vld [vmem:[%s3 + $0x24] sm:$0xf]
          %v808 = vld [vmem:[%s3 + $0x28] sm:$0xf]
          %v809 = vld [vmem:[%s3 + $0x2c] sm:$0xf]
          %v810 = vld [vmem:[%s3 + $0x30] sm:$0xf]
          %v811 = vld [vmem:[%s3 + $0x34] sm:$0xf]
          %v812 = vld [vmem:[%s3 + $0x38] sm:$0xf]
          %v813 = vld [vmem:[%s3 + $0x3c] sm:$0xf]
          %v814 = vld [vmem:[%s4] sm:$0x1]
          %v816 = vperm.slane %v814, 0
          %v834 = vunpack.c.l.b16 %v798
          %v835 = vunpack.c.l.b16 %v799
          %v836 = vunpack.c.l.b16 %v800
          %v837 = vunpack.c.l.b16 %v801
          %v838 = vunpack.c.l.b16 %v802
          %v839 = vunpack.c.l.b16 %v803
          %v840 = vunpack.c.l.b16 %v804
          %v841 = vunpack.c.l.b16 %v805
          %v842 = vunpack.c.l.b16 %v806
          %v843 = vunpack.c.l.b16 %v807
          %v844 = vunpack.c.l.b16 %v808
          %v845 = vunpack.c.l.b16 %v809
          %v846 = vunpack.c.l.b16 %v810
          %v847 = vunpack.c.l.b16 %v811
          %v848 = vunpack.c.l.b16 %v812
          %v849 = vunpack.c.l.b16 %v813
          %v850 = vpack.c.b16 %v835, %v834
          %v851 = vpack.c.b16 %v837, %v836
          %v852 = vpack.c.b16 %v839, %v838
          %v853 = vpack.c.b16 %v841, %v840
          %v854 = vpack.c.b16 %v843, %v842
          %v855 = vpack.c.b16 %v845, %v844
          %v856 = vpack.c.b16 %v847, %v846
          %v857 = vpack.c.b16 %v849, %v848
          %866 = vmatpush.bf16.msra.mxu0 %v857
          %867 = vmatpush.bf16.msra.mxu0 %v856
          %868 = vmatpush.bf16.msra.mxu0 %v855
          %869 = vmatpush.bf16.msra.mxu0 %v854
          %870 = vmatpush.bf16.msra.mxu0 %v853
          %871 = vmatpush.bf16.msra.mxu0 %v852
          %872 = vmatpush.bf16.msra.mxu0 %v851
          %873 = vmatpush.bf16.msra.mxu0 %v850
          %874 = vmatmul.bf16.gmra.mxu0 %v790
          %v875 = vpop.f32.mrf.mxu0
          %v876 = vadd.f32 %v816, %v875
          %v877 = vpop.f32.mrf.mxu0
          %v878 = vadd.f32 %v816, %v877
          %879 = vmatmul.bf16.gmra.mxu0 %v791
          %v880 = vpop.f32.mrf.mxu0
          %v881 = vadd.f32 %v816, %v880
          %v882 = vpop.f32.mrf.mxu0
          %v883 = vadd.f32 %v816, %v882
          %884 = vmatmul.bf16.gmra.mxu0 %v792
          %v885 = vpop.f32.mrf.mxu0
          %v886 = vadd.f32 %v816, %v885
          %v887 = vpop.f32.mrf.mxu0
          %v888 = vadd.f32 %v816, %v887
          %889 = vmatmul.bf16.gmra.mxu0 %v793
          %v890 = vpop.f32.mrf.mxu0
          %v891 = vadd.f32 %v816, %v890
          %v892 = vpop.f32.mrf.mxu0
          %v893 = vadd.f32 %v816, %v892
          %894 = vmatmul.bf16.gmra.mxu0 %v794
          %v895 = vpop.f32.mrf.mxu0
          %v896 = vadd.f32 %v816, %v895
          %v897 = vpop.f32.mrf.mxu0
          %v898 = vadd.f32 %v816, %v897
          %899 = vmatmul.bf16.gmra.mxu0 %v795
          %v900 = vpop.f32.mrf.mxu0
          %v901 = vadd.f32 %v816, %v900
          %v902 = vpop.f32.mrf.mxu0
          %v903 = vadd.f32 %v816, %v902
          %904 = vmatmul.bf16.gmra.mxu0 %v796
          %v905 = vpop.f32.mrf.mxu0
          %v906 = vadd.f32 %v816, %v905
          %v907 = vpop.f32.mrf.mxu0
          %v908 = vadd.f32 %v816, %v907
          %909 = vmatmul.bf16.gmra.mxu0 %v797
          %v910 = vpop.f32.mrf.mxu0
          %v911 = vadd.f32 %v816, %v910
          %v912 = vpop.f32.mrf.mxu0
          %v913 = vadd.f32 %v816, %v912
          %914 = vdwg.mxu0
          %v915 = vmax.f32 %v876, 0.0
          %v916 = vmax.f32 %v878, 0.0
          %v917 = vmax.f32 %v881, 0.0
          %v918 = vmax.f32 %v883, 0.0
          %v919 = vmax.f32 %v886, 0.0
          %v920 = vmax.f32 %v888, 0.0
          %v921 = vmax.f32 %v891, 0.0
          %v922 = vmax.f32 %v893, 0.0
          %v923 = vmax.f32 %v896, 0.0
          %v924 = vmax.f32 %v898, 0.0
          %v925 = vmax.f32 %v901, 0.0
          %v926 = vmax.f32 %v903, 0.0
          %v927 = vmax.f32 %v906, 0.0
          %v928 = vmax.f32 %v908, 0.0
          %v929 = vmax.f32 %v911, 0.0
          %v930 = vmax.f32 %v913, 0.0
          %v931 = vpack.c.bf16 %v916, %v915
          %v932 = vpack.c.bf16 %v918, %v917
          %v933 = vpack.c.bf16 %v920, %v919
          %v934 = vpack.c.bf16 %v922, %v921
          %v935 = vpack.c.bf16 %v924, %v923
          %v936 = vpack.c.bf16 %v926, %v925
          %v937 = vpack.c.bf16 %v928, %v927
          %v938 = vpack.c.bf16 %v930, %v929
          %v939 = vld [vmem:[%s5] sm:$0xf]
          %v940 = vld [vmem:[%s5 + $0x4] sm:$0xf]
          %v941 = vld [vmem:[%s5 + $0x8] sm:$0xf]
          %v942 = vld [vmem:[%s5 + $0xc] sm:$0xf]
          %v943 = vld [vmem:[%s5 + $0x10] sm:$0xf]
          %v944 = vld [vmem:[%s5 + $0x14] sm:$0xf]
          %v945 = vld [vmem:[%s5 + $0x18] sm:$0xf]
          %v946 = vld [vmem:[%s5 + $0x1c] sm:$0xf]
          %v947 = vld [vmem:[%s5 + $0x20] sm:$0xf]
          %v948 = vld [vmem:[%s5 + $0x24] sm:$0xf]
          %v949 = vld [vmem:[%s5 + $0x28] sm:$0xf]
          %v950 = vld [vmem:[%s5 + $0x2c] sm:$0xf]
          %v951 = vld [vmem:[%s5 + $0x30] sm:$0xf]
          %v952 = vld [vmem:[%s5 + $0x34] sm:$0xf]
          %v953 = vld [vmem:[%s5 + $0x38] sm:$0xf]
          %v954 = vld [vmem:[%s5 + $0x3c] sm:$0xf]
          %v955 = vld [vmem:[%s6] sm:$0x1]
          %v957 = vperm.slane %v955, 0
          %v975 = vunpack.c.l.b16 %v939
          %v976 = vunpack.c.l.b16 %v940
          %v977 = vunpack.c.l.b16 %v941
          %v978 = vunpack.c.l.b16 %v942
          %v979 = vunpack.c.l.b16 %v943
          %v980 = vunpack.c.l.b16 %v944
          %v981 = vunpack.c.l.b16 %v945
          %v982 = vunpack.c.l.b16 %v946
          %v983 = vunpack.c.l.b16 %v947
          %v984 = vunpack.c.l.b16 %v948
          %v985 = vunpack.c.l.b16 %v949
          %v986 = vunpack.c.l.b16 %v950
          %v987 = vunpack.c.l.b16 %v951
          %v988 = vunpack.c.l.b16 %v952
          %v989 = vunpack.c.l.b16 %v953
          %v990 = vunpack.c.l.b16 %v954
          %v991 = vpack.c.b16 %v976, %v975
          %v992 = vpack.c.b16 %v978, %v977
          %v993 = vpack.c.b16 %v980, %v979
          %v994 = vpack.c.b16 %v982, %v981
          %v995 = vpack.c.b16 %v984, %v983
          %v996 = vpack.c.b16 %v986, %v985
          %v997 = vpack.c.b16 %v988, %v987
          %v998 = vpack.c.b16 %v990, %v989
          %1007 = vmatpush.bf16.msra.mxu0 %v998
          %1008 = vmatpush.bf16.msra.mxu0 %v997
          %1009 = vmatpush.bf16.msra.mxu0 %v996
          %1010 = vmatpush.bf16.msra.mxu0 %v995
          %1011 = vmatpush.bf16.msra.mxu0 %v994
          %1012 = vmatpush.bf16.msra.mxu0 %v993
          %1013 = vmatpush.bf16.msra.mxu0 %v992
          %1014 = vmatpush.bf16.msra.mxu0 %v991
          %1015 = vmatmul.bf16.gmra.mxu0 %v931
          %v1016 = vpop.f32.mrf.mxu0
          %v1017 = vadd.f32 %v957, %v1016
          %v1018 = vpop.f32.mrf.mxu0
          %v1019 = vadd.f32 %v957, %v1018
          %1020 = vmatmul.bf16.gmra.mxu0 %v932
          %v1021 = vpop.f32.mrf.mxu0
          %v1022 = vadd.f32 %v957, %v1021
          %v1023 = vpop.f32.mrf.mxu0
          %v1024 = vadd.f32 %v957, %v1023
          %1025 = vmatmul.bf16.gmra.mxu0 %v933
          %v1026 = vpop.f32.mrf.mxu0
          %v1027 = vadd.f32 %v957, %v1026
          %v1028 = vpop.f32.mrf.mxu0
          %v1029 = vadd.f32 %v957, %v1028
          %1030 = vmatmul.bf16.gmra.mxu0 %v934
          %v1031 = vpop.f32.mrf.mxu0
          %v1032 = vadd.f32 %v957, %v1031
          %v1033 = vpop.f32.mrf.mxu0
          %v1034 = vadd.f32 %v957, %v1033
          %1035 = vmatmul.bf16.gmra.mxu0 %v935
          %v1036 = vpop.f32.mrf.mxu0
          %v1037 = vadd.f32 %v957, %v1036
          %v1038 = vpop.f32.mrf.mxu0
          %v1039 = vadd.f32 %v957, %v1038
          %1040 = vmatmul.bf16.gmra.mxu0 %v936
          %v1041 = vpop.f32.mrf.mxu0
          %v1042 = vadd.f32 %v957, %v1041
          %v1043 = vpop.f32.mrf.mxu0
          %v1044 = vadd.f32 %v957, %v1043
          %1045 = vmatmul.bf16.gmra.mxu0 %v937
          %v1046 = vpop.f32.mrf.mxu0
          %v1047 = vadd.f32 %v957, %v1046
          %v1048 = vpop.f32.mrf.mxu0
          %v1049 = vadd.f32 %v957, %v1048
          %1050 = vmatmul.bf16.gmra.mxu0 %v938
          %v1051 = vpop.f32.mrf.mxu0
          %v1052 = vadd.f32 %v957, %v1051
          %v1053 = vpop.f32.mrf.mxu0
          %v1054 = vadd.f32 %v957, %v1053
          %1055 = vdwg.mxu0
          %v1056 = vmax.f32 %v1017, 0.0
          %v1057 = vmax.f32 %v1019, 0.0
          %v1058 = vmax.f32 %v1022, 0.0
          %v1059 = vmax.f32 %v1024, 0.0
          %v1060 = vmax.f32 %v1027, 0.0
          %v1061 = vmax.f32 %v1029, 0.0
          %v1062 = vmax.f32 %v1032, 0.0
          %v1063 = vmax.f32 %v1034, 0.0
          %v1064 = vmax.f32 %v1037, 0.0
          %v1065 = vmax.f32 %v1039, 0.0
          %v1066 = vmax.f32 %v1042, 0.0
          %v1067 = vmax.f32 %v1044, 0.0
          %v1068 = vmax.f32 %v1047, 0.0
          %v1069 = vmax.f32 %v1049, 0.0
          %v1070 = vmax.f32 %v1052, 0.0
          %v1071 = vmax.f32 %v1054, 0.0
          %v1072 = vpack.c.bf16 %v1057, %v1056
          %v1073 = vpack.c.bf16 %v1059, %v1058
          %v1074 = vpack.c.bf16 %v1061, %v1060
          %v1075 = vpack.c.bf16 %v1063, %v1062
          %v1076 = vpack.c.bf16 %v1065, %v1064
          %v1077 = vpack.c.bf16 %v1067, %v1066
          %v1078 = vpack.c.bf16 %v1069, %v1068
          %v1079 = vpack.c.bf16 %v1071, %v1070
          %v1080 = vld [vmem:[%s7] sm:$0xf]
          %v1081 = vld [vmem:[%s7 + $0x4] sm:$0xf]
          %v1082 = vld [vmem:[%s7 + $0x8] sm:$0xf]
          %v1083 = vld [vmem:[%s7 + $0xc] sm:$0xf]
          %v1084 = vld [vmem:[%s7 + $0x10] sm:$0xf]
          %v1085 = vld [vmem:[%s7 + $0x14] sm:$0xf]
          %v1086 = vld [vmem:[%s7 + $0x18] sm:$0xf]
          %v1087 = vld [vmem:[%s7 + $0x1c] sm:$0xf]
          %v1088 = vld [vmem:[%s7 + $0x20] sm:$0xf]
          %v1089 = vld [vmem:[%s7 + $0x24] sm:$0xf]
          %v1090 = vld [vmem:[%s7 + $0x28] sm:$0xf]
          %v1091 = vld [vmem:[%s7 + $0x2c] sm:$0xf]
          %v1092 = vld [vmem:[%s7 + $0x30] sm:$0xf]
          %v1093 = vld [vmem:[%s7 + $0x34] sm:$0xf]
          %v1094 = vld [vmem:[%s7 + $0x38] sm:$0xf]
          %v1095 = vld [vmem:[%s7 + $0x3c] sm:$0xf]
          %v1096 = vld [vmem:[%s8] sm:$0x1]
          %v1098 = vperm.slane %v1096, 0
          %v1116 = vunpack.c.l.b16 %v1080
          %v1117 = vunpack.c.l.b16 %v1081
          %v1118 = vunpack.c.l.b16 %v1082
          %v1119 = vunpack.c.l.b16 %v1083
          %v1120 = vunpack.c.l.b16 %v1084
          %v1121 = vunpack.c.l.b16 %v1085
          %v1122 = vunpack.c.l.b16 %v1086
          %v1123 = vunpack.c.l.b16 %v1087
          %v1124 = vunpack.c.l.b16 %v1088
          %v1125 = vunpack.c.l.b16 %v1089
          %v1126 = vunpack.c.l.b16 %v1090
          %v1127 = vunpack.c.l.b16 %v1091
          %v1128 = vunpack.c.l.b16 %v1092
          %v1129 = vunpack.c.l.b16 %v1093
          %v1130 = vunpack.c.l.b16 %v1094
          %v1131 = vunpack.c.l.b16 %v1095
          %v1132 = vpack.c.b16 %v1117, %v1116
          %v1133 = vpack.c.b16 %v1119, %v1118
          %v1134 = vpack.c.b16 %v1121, %v1120
          %v1135 = vpack.c.b16 %v1123, %v1122
          %v1136 = vpack.c.b16 %v1125, %v1124
          %v1137 = vpack.c.b16 %v1127, %v1126
          %v1138 = vpack.c.b16 %v1129, %v1128
          %v1139 = vpack.c.b16 %v1131, %v1130
          %1148 = vmatpush.bf16.msra.mxu0 %v1139
          %1149 = vmatpush.bf16.msra.mxu0 %v1138
          %1150 = vmatpush.bf16.msra.mxu0 %v1137
          %1151 = vmatpush.bf16.msra.mxu0 %v1136
          %1152 = vmatpush.bf16.msra.mxu0 %v1135
          %1153 = vmatpush.bf16.msra.mxu0 %v1134
          %1154 = vmatpush.bf16.msra.mxu0 %v1133
          %1155 = vmatpush.bf16.msra.mxu0 %v1132
          %1156 = vmatmul.bf16.gmra.mxu0 %v1072
          %v1157 = vpop.f32.mrf.mxu0
          %v1158 = vadd.f32 %v1098, %v1157
          %v1159 = vpop.f32.mrf.mxu0
          %v1160 = vadd.f32 %v1098, %v1159
          %1161 = vmatmul.bf16.gmra.mxu0 %v1073
          %v1162 = vpop.f32.mrf.mxu0
          %v1163 = vadd.f32 %v1098, %v1162
          %v1164 = vpop.f32.mrf.mxu0
          %v1165 = vadd.f32 %v1098, %v1164
          %1166 = vmatmul.bf16.gmra.mxu0 %v1074
          %v1167 = vpop.f32.mrf.mxu0
          %v1168 = vadd.f32 %v1098, %v1167
          %v1169 = vpop.f32.mrf.mxu0
          %v1170 = vadd.f32 %v1098, %v1169
          %1171 = vmatmul.bf16.gmra.mxu0 %v1075
          %v1172 = vpop.f32.mrf.mxu0
          %v1173 = vadd.f32 %v1098, %v1172
          %v1174 = vpop.f32.mrf.mxu0
          %v1175 = vadd.f32 %v1098, %v1174
          %1176 = vmatmul.bf16.gmra.mxu0 %v1076
          %v1177 = vpop.f32.mrf.mxu0
          %v1178 = vadd.f32 %v1098, %v1177
          %v1179 = vpop.f32.mrf.mxu0
          %v1180 = vadd.f32 %v1098, %v1179
          %1181 = vmatmul.bf16.gmra.mxu0 %v1077
          %v1182 = vpop.f32.mrf.mxu0
          %v1183 = vadd.f32 %v1098, %v1182
          %v1184 = vpop.f32.mrf.mxu0
          %v1185 = vadd.f32 %v1098, %v1184
          %1186 = vmatmul.bf16.gmra.mxu0 %v1078
          %v1187 = vpop.f32.mrf.mxu0
          %v1188 = vadd.f32 %v1098, %v1187
          %v1189 = vpop.f32.mrf.mxu0
          %v1190 = vadd.f32 %v1098, %v1189
          %1191 = vmatmul.bf16.gmra.mxu0 %v1079
          %v1192 = vpop.f32.mrf.mxu0
          %v1193 = vadd.f32 %v1098, %v1192
          %v1194 = vpop.f32.mrf.mxu0
          %v1195 = vadd.f32 %v1098, %v1194
          %1196 = vdwg.mxu0
          %v1197 = vmax.f32 %v1158, 0.0
          %v1198 = vmax.f32 %v1160, 0.0
          %v1199 = vmax.f32 %v1163, 0.0
          %v1200 = vmax.f32 %v1165, 0.0
          %v1201 = vmax.f32 %v1168, 0.0
          %v1202 = vmax.f32 %v1170, 0.0
          %v1203 = vmax.f32 %v1173, 0.0
          %v1204 = vmax.f32 %v1175, 0.0
          %v1205 = vmax.f32 %v1178, 0.0
          %v1206 = vmax.f32 %v1180, 0.0
          %v1207 = vmax.f32 %v1183, 0.0
          %v1208 = vmax.f32 %v1185, 0.0
          %v1209 = vmax.f32 %v1188, 0.0
          %v1210 = vmax.f32 %v1190, 0.0
          %v1211 = vmax.f32 %v1193, 0.0
          %v1212 = vmax.f32 %v1195, 0.0
          %v1213 = vpack.c.bf16 %v1198, %v1197
          %v1214 = vpack.c.bf16 %v1200, %v1199
          %v1215 = vpack.c.bf16 %v1202, %v1201
          %v1216 = vpack.c.bf16 %v1204, %v1203
          %v1217 = vpack.c.bf16 %v1206, %v1205
          %v1218 = vpack.c.bf16 %v1208, %v1207
          %v1219 = vpack.c.bf16 %v1210, %v1209
          %v1220 = vpack.c.bf16 %v1212, %v1211
          %v1221 = vld [vmem:[%s9] sm:$0xf]
          %v1222 = vld [vmem:[%s9 + $0x4] sm:$0xf]
          %v1223 = vld [vmem:[%s9 + $0x8] sm:$0xf]
          %v1224 = vld [vmem:[%s9 + $0xc] sm:$0xf]
          %v1225 = vld [vmem:[%s9 + $0x10] sm:$0xf]
          %v1226 = vld [vmem:[%s9 + $0x14] sm:$0xf]
          %v1227 = vld [vmem:[%s9 + $0x18] sm:$0xf]
          %v1228 = vld [vmem:[%s9 + $0x1c] sm:$0xf]
          %v1229 = vld [vmem:[%s9 + $0x20] sm:$0xf]
          %v1230 = vld [vmem:[%s9 + $0x24] sm:$0xf]
          %v1231 = vld [vmem:[%s9 + $0x28] sm:$0xf]
          %v1232 = vld [vmem:[%s9 + $0x2c] sm:$0xf]
          %v1233 = vld [vmem:[%s9 + $0x30] sm:$0xf]
          %v1234 = vld [vmem:[%s9 + $0x34] sm:$0xf]
          %v1235 = vld [vmem:[%s9 + $0x38] sm:$0xf]
          %v1236 = vld [vmem:[%s9 + $0x3c] sm:$0xf]
          %v1237 = vld [vmem:[%s10] sm:$0x1]
          %v1239 = vperm.slane %v1237, 0
          %v1257 = vunpack.c.l.b16 %v1221
          %v1258 = vunpack.c.l.b16 %v1222
          %v1259 = vunpack.c.l.b16 %v1223
          %v1260 = vunpack.c.l.b16 %v1224
          %v1261 = vunpack.c.l.b16 %v1225
          %v1262 = vunpack.c.l.b16 %v1226
          %v1263 = vunpack.c.l.b16 %v1227
          %v1264 = vunpack.c.l.b16 %v1228
          %v1265 = vunpack.c.l.b16 %v1229
          %v1266 = vunpack.c.l.b16 %v1230
          %v1267 = vunpack.c.l.b16 %v1231
          %v1268 = vunpack.c.l.b16 %v1232
          %v1269 = vunpack.c.l.b16 %v1233
          %v1270 = vunpack.c.l.b16 %v1234
          %v1271 = vunpack.c.l.b16 %v1235
          %v1272 = vunpack.c.l.b16 %v1236
          %v1273 = vpack.c.b16 %v1258, %v1257
          %v1274 = vpack.c.b16 %v1260, %v1259
          %v1275 = vpack.c.b16 %v1262, %v1261
          %v1276 = vpack.c.b16 %v1264, %v1263
          %v1277 = vpack.c.b16 %v1266, %v1265
          %v1278 = vpack.c.b16 %v1268, %v1267
          %v1279 = vpack.c.b16 %v1270, %v1269
          %v1280 = vpack.c.b16 %v1272, %v1271
          %1289 = vmatpush.bf16.msra.mxu0 %v1280
          %1290 = vmatpush.bf16.msra.mxu0 %v1279
          %1291 = vmatpush.bf16.msra.mxu0 %v1278
          %1292 = vmatpush.bf16.msra.mxu0 %v1277
          %1293 = vmatpush.bf16.msra.mxu0 %v1276
          %1294 = vmatpush.bf16.msra.mxu0 %v1275
          %1295 = vmatpush.bf16.msra.mxu0 %v1274
          %1296 = vmatpush.bf16.msra.mxu0 %v1273
          %1297 = vmatmul.bf16.gmra.mxu0 %v1213
          %v1298 = vpop.f32.mrf.mxu0
          %v1299 = vadd.f32 %v1239, %v1298
          %v1300 = vpop.f32.mrf.mxu0
          %v1301 = vadd.f32 %v1239, %v1300
          %1302 = vmatmul.bf16.gmra.mxu0 %v1214
          %v1303 = vpop.f32.mrf.mxu0
          %v1304 = vadd.f32 %v1239, %v1303
          %v1305 = vpop.f32.mrf.mxu0
          %v1306 = vadd.f32 %v1239, %v1305
          %1307 = vmatmul.bf16.gmra.mxu0 %v1215
          %v1308 = vpop.f32.mrf.mxu0
          %v1309 = vadd.f32 %v1239, %v1308
          %v1310 = vpop.f32.mrf.mxu0
          %v1311 = vadd.f32 %v1239, %v1310
          %1312 = vmatmul.bf16.gmra.mxu0 %v1216
          %v1313 = vpop.f32.mrf.mxu0
          %v1314 = vadd.f32 %v1239, %v1313
          %v1315 = vpop.f32.mrf.mxu0
          %v1316 = vadd.f32 %v1239, %v1315
          %1317 = vmatmul.bf16.gmra.mxu0 %v1217
          %v1318 = vpop.f32.mrf.mxu0
          %v1319 = vadd.f32 %v1239, %v1318
          %v1320 = vpop.f32.mrf.mxu0
          %v1321 = vadd.f32 %v1239, %v1320
          %1322 = vmatmul.bf16.gmra.mxu0 %v1218
          %v1323 = vpop.f32.mrf.mxu0
          %v1324 = vadd.f32 %v1239, %v1323
          %v1325 = vpop.f32.mrf.mxu0
          %v1326 = vadd.f32 %v1239, %v1325
          %1327 = vmatmul.bf16.gmra.mxu0 %v1219
          %v1328 = vpop.f32.mrf.mxu0
          %v1329 = vadd.f32 %v1239, %v1328
          %v1330 = vpop.f32.mrf.mxu0
          %v1331 = vadd.f32 %v1239, %v1330
          %1332 = vmatmul.bf16.gmra.mxu0 %v1220
          %v1333 = vpop.f32.mrf.mxu0
          %v1334 = vadd.f32 %v1239, %v1333
          %v1335 = vpop.f32.mrf.mxu0
          %v1336 = vadd.f32 %v1239, %v1335
          %1337 = vdwg.mxu0
          %v1338 = vmax.f32 %v1299, 0.0
          %v1339 = vmax.f32 %v1301, 0.0
          %v1340 = vmax.f32 %v1304, 0.0
          %v1341 = vmax.f32 %v1306, 0.0
          %v1342 = vmax.f32 %v1309, 0.0
          %v1343 = vmax.f32 %v1311, 0.0
          %v1344 = vmax.f32 %v1314, 0.0
          %v1345 = vmax.f32 %v1316, 0.0
          %v1346 = vmax.f32 %v1319, 0.0
          %v1347 = vmax.f32 %v1321, 0.0
          %v1348 = vmax.f32 %v1324, 0.0
          %v1349 = vmax.f32 %v1326, 0.0
          %v1350 = vmax.f32 %v1329, 0.0
          %v1351 = vmax.f32 %v1331, 0.0
          %v1352 = vmax.f32 %v1334, 0.0
          %v1353 = vmax.f32 %v1336, 0.0
          %v1354 = vpack.c.bf16 %v1338, %v1338
          %v1355 = vpack.c.bf16 %v1339, %v1339
          %v1356 = vpack.c.bf16 %v1340, %v1340
          %v1357 = vpack.c.bf16 %v1341, %v1341
          %v1358 = vpack.c.bf16 %v1342, %v1342
          %v1359 = vpack.c.bf16 %v1343, %v1343
          %v1360 = vpack.c.bf16 %v1344, %v1344
          %v1361 = vpack.c.bf16 %v1345, %v1345
          %v1362 = vpack.c.bf16 %v1346, %v1346
          %v1363 = vpack.c.bf16 %v1347, %v1347
          %v1364 = vpack.c.bf16 %v1348, %v1348
          %v1365 = vpack.c.bf16 %v1349, %v1349
          %v1366 = vpack.c.bf16 %v1350, %v1350
          %v1367 = vpack.c.bf16 %v1351, %v1351
          %v1368 = vpack.c.bf16 %v1352, %v1352
          %v1369 = vpack.c.bf16 %v1353, %v1353
          %1370 = vst [vmem:[#allocation2] sm:$0xf] %v1354
          %1371 = vst [vmem:[#allocation2 + $0x4] sm:$0xf] %v1355
          %1372 = vst [vmem:[#allocation2 + $0x8] sm:$0xf] %v1356
          %1373 = vst [vmem:[#allocation2 + $0xc] sm:$0xf] %v1357
          %1374 = vst [vmem:[#allocation2 + $0x10] sm:$0xf] %v1358
          %1375 = vst [vmem:[#allocation2 + $0x14] sm:$0xf] %v1359
          %1376 = vst [vmem:[#allocation2 + $0x18] sm:$0xf] %v1360
          %1377 = vst [vmem:[#allocation2 + $0x1c] sm:$0xf] %v1361
          %1378 = vst [vmem:[#allocation2 + $0x20] sm:$0xf] %v1362
          %1379 = vst [vmem:[#allocation2 + $0x24] sm:$0xf] %v1363
          %1380 = vst [vmem:[#allocation2 + $0x28] sm:$0xf] %v1364
          %1381 = vst [vmem:[#allocation2 + $0x2c] sm:$0xf] %v1365
          %1382 = vst [vmem:[#allocation2 + $0x30] sm:$0xf] %v1366
          %1383 = vst [vmem:[#allocation2 + $0x34] sm:$0xf] %v1367
          %1384 = vst [vmem:[#allocation2 + $0x38] sm:$0xf] %v1368
          %1385 = vst [vmem:[#allocation2 + $0x3c] sm:$0xf] %v1369
        $region117: #{_mlp_medium_forward.1} parent=108 // pred_fallthru
          _
        %v1386 = vld [vmem:[#allocation2] sm:$0xf]
        %v1387 = vld [vmem:[#allocation2 + $0x4] sm:$0xf]
        %v1388 = vld [vmem:[#allocation2 + $0x8] sm:$0xf]
        %v1389 = vld [vmem:[#allocation2 + $0xc] sm:$0xf]
        %v1390 = vld [vmem:[#allocation2 + $0x10] sm:$0xf]
        %v1391 = vld [vmem:[#allocation2 + $0x14] sm:$0xf]
        %v1392 = vld [vmem:[#allocation2 + $0x18] sm:$0xf]
        %v1393 = vld [vmem:[#allocation2 + $0x1c] sm:$0xf]
        %v1394 = vld [vmem:[#allocation2 + $0x20] sm:$0xf]
        %v1395 = vld [vmem:[#allocation2 + $0x24] sm:$0xf]
        %v1396 = vld [vmem:[#allocation2 + $0x28] sm:$0xf]
        %v1397 = vld [vmem:[#allocation2 + $0x2c] sm:$0xf]
        %v1398 = vld [vmem:[#allocation2 + $0x30] sm:$0xf]
        %v1399 = vld [vmem:[#allocation2 + $0x34] sm:$0xf]
        %v1400 = vld [vmem:[#allocation2 + $0x38] sm:$0xf]
        %v1401 = vld [vmem:[#allocation2 + $0x3c] sm:$0xf]
        %v1402 = vld [vmem:[%s531] sm:$0xf]
        %v1403 = vld [vmem:[%s531 + $0x4] sm:$0xf]
        %v1404 = vld [vmem:[%s531 + $0x8] sm:$0xf]
        %v1405 = vld [vmem:[%s531 + $0xc] sm:$0xf]
        %v1406 = vld [vmem:[%s531 + $0x10] sm:$0xf]
        %v1407 = vld [vmem:[%s531 + $0x14] sm:$0xf]
        %v1408 = vld [vmem:[%s531 + $0x18] sm:$0xf]
        %v1409 = vld [vmem:[%s531 + $0x1c] sm:$0xf]
        %v1410 = vld [vmem:[%s531 + $0x20] sm:$0xf]
        %v1411 = vld [vmem:[%s531 + $0x24] sm:$0xf]
        %v1412 = vld [vmem:[%s531 + $0x28] sm:$0xf]
        %v1413 = vld [vmem:[%s531 + $0x2c] sm:$0xf]
        %v1414 = vld [vmem:[%s531 + $0x30] sm:$0xf]
        %v1415 = vld [vmem:[%s531 + $0x34] sm:$0xf]
        %v1416 = vld [vmem:[%s531 + $0x38] sm:$0xf]
        %v1417 = vld [vmem:[%s531 + $0x3c] sm:$0xf]
        %v1418 = vld [vmem:[%s587] sm:$0x1]
        %v1420 = vperm.slane %v1418, 0
        %v1438 = vunpack.c.l.b16 %v1386
        %v1439 = vunpack.c.l.b16 %v1387
        %v1440 = vunpack.c.l.b16 %v1388
        %v1441 = vunpack.c.l.b16 %v1389
        %v1442 = vunpack.c.l.b16 %v1390
        %v1443 = vunpack.c.l.b16 %v1391
        %v1444 = vunpack.c.l.b16 %v1392
        %v1445 = vunpack.c.l.b16 %v1393
        %v1446 = vunpack.c.l.b16 %v1394
        %v1447 = vunpack.c.l.b16 %v1395
        %v1448 = vunpack.c.l.b16 %v1396
        %v1449 = vunpack.c.l.b16 %v1397
        %v1450 = vunpack.c.l.b16 %v1398
        %v1451 = vunpack.c.l.b16 %v1399
        %v1452 = vunpack.c.l.b16 %v1400
        %v1453 = vunpack.c.l.b16 %v1401
        %v1454 = vpack.c.b16 %v1439, %v1438
        %v1455 = vpack.c.b16 %v1441, %v1440
        %v1456 = vpack.c.b16 %v1443, %v1442
        %v1457 = vpack.c.b16 %v1445, %v1444
        %v1458 = vpack.c.b16 %v1447, %v1446
        %v1459 = vpack.c.b16 %v1449, %v1448
        %v1460 = vpack.c.b16 %v1451, %v1450
        %v1461 = vpack.c.b16 %v1453, %v1452
        %v1486 = vunpack.c.l.b16 %v1402
        %v1487 = vunpack.c.l.b16 %v1403
        %v1488 = vunpack.c.l.b16 %v1404
        %v1489 = vunpack.c.l.b16 %v1405
        %v1490 = vunpack.c.l.b16 %v1406
        %v1491 = vunpack.c.l.b16 %v1407
        %v1492 = vunpack.c.l.b16 %v1408
        %v1493 = vunpack.c.l.b16 %v1409
        %v1494 = vunpack.c.l.b16 %v1410
        %v1495 = vunpack.c.l.b16 %v1411
        %v1496 = vunpack.c.l.b16 %v1412
        %v1497 = vunpack.c.l.b16 %v1413
        %v1498 = vunpack.c.l.b16 %v1414
        %v1499 = vunpack.c.l.b16 %v1415
        %v1500 = vunpack.c.l.b16 %v1416
        %v1501 = vunpack.c.l.b16 %v1417
        %v1502 = vpack.c.b16 %v1487, %v1486
        %v1503 = vpack.c.b16 %v1489, %v1488
        %v1504 = vpack.c.b16 %v1491, %v1490
        %v1505 = vpack.c.b16 %v1493, %v1492
        %v1506 = vpack.c.b16 %v1495, %v1494
        %v1507 = vpack.c.b16 %v1497, %v1496
        %v1508 = vpack.c.b16 %v1499, %v1498
        %v1509 = vpack.c.b16 %v1501, %v1500
        %1518 = vmatpush.bf16.msra.mxu0 %v1509
        %1519 = vmatpush.bf16.msra.mxu0 %v1508
        %1520 = vmatpush.bf16.msra.mxu0 %v1507
        %1521 = vmatpush.bf16.msra.mxu0 %v1506
        %1522 = vmatpush.bf16.msra.mxu0 %v1505
        %1523 = vmatpush.bf16.msra.mxu0 %v1504
        %1524 = vmatpush.bf16.msra.mxu0 %v1503
        %1525 = vmatpush.bf16.msra.mxu0 %v1502
        %1526 = vmatmul.bf16.gmra.mxu0 %v1454
        %v1527 = vpop.f32.mrf.mxu0
        %v1528 = vadd.f32 %v1420, %v1527
        %v1529 = vpop.f32.mrf.mxu0
        %v1530 = vadd.f32 %v1420, %v1529
        %1531 = vmatmul.bf16.gmra.mxu0 %v1455
        %v1532 = vpop.f32.mrf.mxu0
        %v1533 = vadd.f32 %v1420, %v1532
        %v1534 = vpop.f32.mrf.mxu0
        %v1535 = vadd.f32 %v1420, %v1534
        %1536 = vmatmul.bf16.gmra.mxu0 %v1456
        %v1537 = vpop.f32.mrf.mxu0
        %v1538 = vadd.f32 %v1420, %v1537
        %v1539 = vpop.f32.mrf.mxu0
        %v1540 = vadd.f32 %v1420, %v1539
        %1541 = vmatmul.bf16.gmra.mxu0 %v1457
        %v1542 = vpop.f32.mrf.mxu0
        %v1543 = vadd.f32 %v1420, %v1542
        %v1544 = vpop.f32.mrf.mxu0
        %v1545 = vadd.f32 %v1420, %v1544
        %1546 = vmatmul.bf16.gmra.mxu0 %v1458
        %v1547 = vpop.f32.mrf.mxu0
        %v1548 = vadd.f32 %v1420, %v1547
        %v1549 = vpop.f32.mrf.mxu0
        %v1550 = vadd.f32 %v1420, %v1549
        %1551 = vmatmul.bf16.gmra.mxu0 %v1459
        %v1552 = vpop.f32.mrf.mxu0
        %v1553 = vadd.f32 %v1420, %v1552
        %v1554 = vpop.f32.mrf.mxu0
        %v1555 = vadd.f32 %v1420, %v1554
        %1556 = vmatmul.bf16.gmra.mxu0 %v1460
        %v1557 = vpop.f32.mrf.mxu0
        %v1558 = vadd.f32 %v1420, %v1557
        %v1559 = vpop.f32.mrf.mxu0
        %v1560 = vadd.f32 %v1420, %v1559
        %1561 = vmatmul.bf16.gmra.mxu0 %v1461
        %v1562 = vpop.f32.mrf.mxu0
        %v1563 = vadd.f32 %v1420, %v1562
        %v1564 = vpop.f32.mrf.mxu0
        %v1565 = vadd.f32 %v1420, %v1564
        %1566 = vdwg.mxu0
        %1567 = vst [vmem:[%s578] sm:$0xff] %v1528
        %1568 = vst [vmem:[%s578 + $0x8] sm:$0xff] %v1530
        %1569 = vst [vmem:[%s578 + $0x10] sm:$0xff] %v1533
        %1570 = vst [vmem:[%s578 + $0x18] sm:$0xff] %v1535
        %1571 = vst [vmem:[%s578 + $0x20] sm:$0xff] %v1538
        %1572 = vst [vmem:[%s578 + $0x28] sm:$0xff] %v1540
        %1573 = vst [vmem:[%s578 + $0x30] sm:$0xff] %v1543
        %1574 = vst [vmem:[%s578 + $0x38] sm:$0xff] %v1545
        %1575 = vst [vmem:[%s578 + $0x40] sm:$0xff] %v1548
        %1576 = vst [vmem:[%s578 + $0x48] sm:$0xff] %v1550
        %1577 = vst [vmem:[%s578 + $0x50] sm:$0xff] %v1553
        %1578 = vst [vmem:[%s578 + $0x58] sm:$0xff] %v1555
        %1579 = vst [vmem:[%s578 + $0x60] sm:$0xff] %v1558
        %1580 = vst [vmem:[%s578 + $0x68] sm:$0xff] %v1560
        %1581 = vst [vmem:[%s578 + $0x70] sm:$0xff] %v1563
        %1582 = vst [vmem:[%s578 + $0x78] sm:$0xff] %v1565
        %s1583 = sand.u32 %s334, 1
        %s1584 = sand.u32 %s334, 1
        %s1585 = smul.addr %s1584, 128
        %s1586 = scalar_lea.vmem [#allocation4], %s1585
        // Predicated region
        $region118: #{_mlp_medium_forward.1} parent=108 // pred_check
          %p1587 = pneg %p344
        $region119: #{_mlp_medium_forward.1} parent=108 // pred_check_branch
          %1589 = sbr.rel (%p1587) target = $region121
        $region120: #{_mlp_medium_forward.1} parent=108 // pred_region
          %s1590 = smul.u32 16, %s28
          %s1591 = smul.addr %s1590, 2
          %s1592 = sadd.s32 %s29, %s1591
          %s1593 = smul.addr %s1592, 8
          %s1594 = scalar_lea.vmem %s13, %s1593
          // Predicated region
          $region122: #{_mlp_medium_forward.1} parent=120 // pred_check
            _
          $region123: #{_mlp_medium_forward.1} parent=120 // pred_check_branch
            %1596 = sbr.rel (0) target = $region125
          $region124: #{_mlp_medium_forward.1} parent=120 // pred_region
            // Predicated region
            $region126: #{_mlp_medium_forward.1} parent=124 // pred_check
              _
            $region127: #{_mlp_medium_forward.1} parent=124 // pred_check_branch
              %1598 = sbr.rel (0) target = $region129
            $region128: #{_mlp_medium_forward.1} parent=124 // pred_region
              // Predicated region
              $region141: #{_mlp_medium_forward.1} parent=128 // pred_check
                _
              $region142: #{_mlp_medium_forward.1} parent=128 // pred_check_branch
                %1644 = sbr.rel (0) target = $region144
              $region143: #{_mlp_medium_forward.1} parent=128 // pred_region
                loop: start=0, step=1, limit=1
                $region145: #{_mlp_medium_forward.1} parent=143 // loop_pre_header
                  _
                $region146: #{_mlp_medium_forward.1} parent=143 // loop_header
                  %s1646 = sphi 0, %s1650
                  %p1647 = scmp.ge.s32.totalorder %s1646, 1
                  %s1651 = sphi %s1586, %s1586
                  %s1652 = sphi %s1594, %s1594
                $region147: #{_mlp_medium_forward.1} parent=143 // loop_header_branch
                  %1649 = sbr.rel (%p1647) target = $region151
                $region148: #{_mlp_medium_forward.1} parent=143 // loop_body
                  %v1653 = vld [vmem:[%s1651] sm:$0xff]
                  %1654 = vst [vmem:[%s1652] sm:$0xff] %v1653
                  %v1655 = vld [vmem:[%s1651 + $0x8] sm:$0xff]
                  %1656 = vst [vmem:[%s1652 + $0x10] sm:$0xff] %v1655
                  %v1657 = vld [vmem:[%s1651 + $0x10] sm:$0xff]
                  %1658 = vst [vmem:[%s1652 + $0x20] sm:$0xff] %v1657
                  %v1659 = vld [vmem:[%s1651 + $0x18] sm:$0xff]
                  %1660 = vst [vmem:[%s1652 + $0x30] sm:$0xff] %v1659
                  %v1661 = vld [vmem:[%s1651 + $0x20] sm:$0xff]
                  %1662 = vst [vmem:[%s1652 + $0x40] sm:$0xff] %v1661
                  %v1663 = vld [vmem:[%s1651 + $0x28] sm:$0xff]
                  %1664 = vst [vmem:[%s1652 + $0x50] sm:$0xff] %v1663
                  %v1665 = vld [vmem:[%s1651 + $0x30] sm:$0xff]
                  %1666 = vst [vmem:[%s1652 + $0x60] sm:$0xff] %v1665
                  %v1667 = vld [vmem:[%s1651 + $0x38] sm:$0xff]
                  %1668 = vst [vmem:[%s1652 + $0x70] sm:$0xff] %v1667
                  %v1669 = vld [vmem:[%s1651 + $0x40] sm:$0xff]
                  %1670 = vst [vmem:[%s1652 + $0x80] sm:$0xff] %v1669
                  %v1671 = vld [vmem:[%s1651 + $0x48] sm:$0xff]
                  %1672 = vst [vmem:[%s1652 + $0x90] sm:$0xff] %v1671
                  %v1673 = vld [vmem:[%s1651 + $0x50] sm:$0xff]
                  %1674 = vst [vmem:[%s1652 + $0xa0] sm:$0xff] %v1673
                  %v1675 = vld [vmem:[%s1651 + $0x58] sm:$0xff]
                  %1676 = vst [vmem:[%s1652 + $0xb0] sm:$0xff] %v1675
                  %v1677 = vld [vmem:[%s1651 + $0x60] sm:$0xff]
                  %1678 = vst [vmem:[%s1652 + $0xc0] sm:$0xff] %v1677
                  %v1679 = vld [vmem:[%s1651 + $0x68] sm:$0xff]
                  %1680 = vst [vmem:[%s1652 + $0xd0] sm:$0xff] %v1679
                  %v1681 = vld [vmem:[%s1651 + $0x70] sm:$0xff]
                  %1682 = vst [vmem:[%s1652 + $0xe0] sm:$0xff] %v1681
                  %v1683 = vld [vmem:[%s1651 + $0x78] sm:$0xff]
                  %1684 = vst [vmem:[%s1652 + $0xf0] sm:$0xff] %v1683
                $region149: #{_mlp_medium_forward.1} parent=143 // loop_footer
                  %s1650 = sadd.s32 1, %s1646
                $region150: #{_mlp_medium_forward.1} parent=143 // loop_footer_branch
                  %1645 = sbr.rel target = $region146
                $region151: #{_mlp_medium_forward.1} parent=143 // loop_exit
                  _
              $region144: #{_mlp_medium_forward.1} parent=128 // pred_fallthru
                _
              // Predicated region
              $region152: #{_mlp_medium_forward.1} parent=128 // pred_check
                _
              $region153: #{_mlp_medium_forward.1} parent=128 // pred_check_branch
                %1686 = sbr.rel target = $region155
              $region154: #{_mlp_medium_forward.1} parent=128 // pred_region
                _
              $region155: #{_mlp_medium_forward.1} parent=128 // pred_fallthru
                _
            $region129: #{_mlp_medium_forward.1} parent=124 // pred_fallthru
              _
            // Predicated region
            $region130: #{_mlp_medium_forward.1} parent=124 // pred_check
              _
            $region131: #{_mlp_medium_forward.1} parent=124 // pred_check_branch
              %1600 = sbr.rel target = $region133
            $region132: #{_mlp_medium_forward.1} parent=124 // pred_region
              %s1602 = ssub.s32 256, 1
              loop: start=0, step=1, limit=1
              $region134: #{_mlp_medium_forward.1} parent=132 // loop_pre_header
                _
              $region135: #{_mlp_medium_forward.1} parent=132 // loop_header
                %s1604 = sphi 0, %s1608
                %p1605 = scmp.ge.s32.totalorder %s1604, 1
                %s1609 = sphi %s1586, %s1586
                %s1610 = sphi %s1594, %s1594
              $region136: #{_mlp_medium_forward.1} parent=132 // loop_header_branch
                %1607 = sbr.rel (%p1605) target = $region140
              $region137: #{_mlp_medium_forward.1} parent=132 // loop_body
                %v1611 = vld [vmem:[%s1609] sm:%s1602]
                %1612 = vst [vmem:[%s1610] sm:%s1602] %v1611
                %v1613 = vld [vmem:[%s1609 + $0x8] sm:%s1602]
                %1614 = vst [vmem:[%s1610 + $0x10] sm:%s1602] %v1613
                %v1615 = vld [vmem:[%s1609 + $0x10] sm:%s1602]
                %1616 = vst [vmem:[%s1610 + $0x20] sm:%s1602] %v1615
                %v1617 = vld [vmem:[%s1609 + $0x18] sm:%s1602]
                %1618 = vst [vmem:[%s1610 + $0x30] sm:%s1602] %v1617
                %v1619 = vld [vmem:[%s1609 + $0x20] sm:%s1602]
                %1620 = vst [vmem:[%s1610 + $0x40] sm:%s1602] %v1619
                %v1621 = vld [vmem:[%s1609 + $0x28] sm:%s1602]
                %1622 = vst [vmem:[%s1610 + $0x50] sm:%s1602] %v1621
                %v1623 = vld [vmem:[%s1609 + $0x30] sm:%s1602]
                %1624 = vst [vmem:[%s1610 + $0x60] sm:%s1602] %v1623
                %v1625 = vld [vmem:[%s1609 + $0x38] sm:%s1602]
                %1626 = vst [vmem:[%s1610 + $0x70] sm:%s1602] %v1625
                %v1627 = vld [vmem:[%s1609 + $0x40] sm:%s1602]
                %1628 = vst [vmem:[%s1610 + $0x80] sm:%s1602] %v1627
                %v1629 = vld [vmem:[%s1609 + $0x48] sm:%s1602]
                %1630 = vst [vmem:[%s1610 + $0x90] sm:%s1602] %v1629
                %v1631 = vld [vmem:[%s1609 + $0x50] sm:%s1602]
                %1632 = vst [vmem:[%s1610 + $0xa0] sm:%s1602] %v1631
                %v1633 = vld [vmem:[%s1609 + $0x58] sm:%s1602]
                %1634 = vst [vmem:[%s1610 + $0xb0] sm:%s1602] %v1633
                %v1635 = vld [vmem:[%s1609 + $0x60] sm:%s1602]
                %1636 = vst [vmem:[%s1610 + $0xc0] sm:%s1602] %v1635
                %v1637 = vld [vmem:[%s1609 + $0x68] sm:%s1602]
                %1638 = vst [vmem:[%s1610 + $0xd0] sm:%s1602] %v1637
                %v1639 = vld [vmem:[%s1609 + $0x70] sm:%s1602]
                %1640 = vst [vmem:[%s1610 + $0xe0] sm:%s1602] %v1639
                %v1641 = vld [vmem:[%s1609 + $0x78] sm:%s1602]
                %1642 = vst [vmem:[%s1610 + $0xf0] sm:%s1602] %v1641
              $region138: #{_mlp_medium_forward.1} parent=132 // loop_footer
                %s1608 = sadd.s32 1, %s1604
              $region139: #{_mlp_medium_forward.1} parent=132 // loop_footer_branch
                %1603 = sbr.rel target = $region135
              $region140: #{_mlp_medium_forward.1} parent=132 // loop_exit
                _
            $region133: #{_mlp_medium_forward.1} parent=124 // pred_fallthru
              _
          $region125: #{_mlp_medium_forward.1} parent=120 // pred_fallthru
            _
          %1687 = vnop
        $region121: #{_mlp_medium_forward.1} parent=108 // pred_fallthru
          _
      $region109: #{_mlp_medium_forward.1} parent=5 // pred_fallthru
        _
      %p1688 = scmp.le.s32.totalorder 2, %s19
      // Predicated region
      $region156: #{_mlp_medium_forward.1} parent=5 // pred_check
        %p1689 = pneg %p1688
      $region157: #{_mlp_medium_forward.1} parent=5 // pred_check_branch
        %1691 = sbr.rel (%p1689) target = $region159
      $region158: #{_mlp_medium_forward.1} parent=5 // pred_region
        %s1692 = ssub.s32 %s19, 2
        // Predicated region
        $region160: #{_mlp_medium_forward.1} parent=158 // pred_check
          %p1693 = pneg %p350
        $region161: #{_mlp_medium_forward.1} parent=158 // pred_check_branch
          %1695 = sbr.rel (%p1693) target = $region163
        $region162: #{_mlp_medium_forward.1} parent=158 // pred_region
          %s1696 = sand.u32 %s335, 1
          %s1697 = sand.u32 %s335, 1
          %s1698 = smul.addr %s1697, 128
          %s1699 = scalar_lea.vmem [#allocation4], %s1698
        $region163: #{_mlp_medium_forward.1} parent=158 // pred_fallthru
          _
      $region159: #{_mlp_medium_forward.1} parent=5 // pred_fallthru
        _
    $region6: #{_mlp_medium_forward.1} parent=1 // loop_footer
      %s23 = sadd.s32 1, %s19
    $region7: #{_mlp_medium_forward.1} parent=1 // loop_footer_branch
      %18 = sbr.rel target = $region3
    $region8: #{_mlp_medium_forward.1} parent=1 // loop_exit
      _

// kernel: _mlp_medium_forward.1
$region0: #{_mlp_medium_forward.1}
  #allocation0 [shape = 'u32[]', space=smem, size = 0x4, offset = 0x4, fixed_abs, tag = 'smem constant byte address 0x4 - core index']
  #allocation1 [shape = 'u32[72,128]{1,0:T(1,128)}', space=vmem, size = 0x9000, scoped, tag = 'internal scratch']
  #allocation2 [shape = 'bf16[128,128]{1,0:T(8,128)(2,1)}', space=vmem, size = 0x8000, scoped, tag = 'scratch operand']
  %s0 = inlined_call_operand.vmem [shape: bf16[256,128], index: 0, kind: input, shape index: {}]
  %s1 = inlined_call_operand.vmem [shape: bf16[128,128], index: 1, kind: input, shape index: {}]
  %s2 = inlined_call_operand.vmem [shape: f32[1,128], index: 2, kind: input, shape index: {}]
  %s3 = inlined_call_operand.vmem [shape: bf16[128,128], index: 3, kind: input, shape index: {}]
  %s4 = inlined_call_operand.vmem [shape: f32[1,128], index: 4, kind: input, shape index: {}]
  %s5 = inlined_call_operand.vmem [shape: bf16[128,128], index: 5, kind: input, shape index: {}]
  %s6 = inlined_call_operand.vmem [shape: f32[1,128], index: 6, kind: input, shape index: {}]
  %s7 = inlined_call_operand.vmem [shape: bf16[128,128], index: 7, kind: input, shape index: {}]
  %s8 = inlined_call_operand.vmem [shape: f32[1,128], index: 8, kind: input, shape index: {}]
  %s9 = inlined_call_operand.vmem [shape: bf16[128,128], index: 9, kind: input, shape index: {}]
  %s10 = inlined_call_operand.vmem [shape: f32[1,128], index: 10, kind: input, shape index: {}]
  %s11 = inlined_call_operand.vmem [shape: bf16[128,256], index: 11, kind: input, shape index: {}]
  %s12 = inlined_call_operand.vmem [shape: f32[1,256], index: 12, kind: input, shape index: {}]
  %s13 = inlined_call_operand.vmem [shape: f32[256,256], index: 13, kind: output, shape index: {}]
  %s14 = sld [smem:[#allocation0]]
  $region164: #{_mlp_medium_forward.1} parent=0
    _
  %s16 = ssub.s32 1, %s14
  %s17 = scalar_select 0, %s16, %s14
  $region1: #{_mlp_medium_forward.1} parent=0
    #allocation3 [shape = 'u8[65536]{0}', space=vmem, size = 0x10000, scoped, tag = 'input window, operand 11']
    #allocation4 [shape = 'u8[131072]{0}', space=vmem, size = 0x20000, scoped, tag = 'output window, operand 0']
    loop: start=0, step=1, limit=6
    $region2: #{_mlp_medium_forward.1} parent=1 // loop_pre_header
      _
    $region3: #{_mlp_medium_forward.1} parent=1 // loop_header
      %s19 = sphi 0, %s23
      %p20 = scmp.ge.s32.totalorder %s19, 6
      %s26 = sphi 0, %s38
      %s27 = sphi 0, %s34
      %s28 = sphi 0, %s26
      %s29 = sphi 0, %s27
      %s30 = sphi 0, %s28
      %s31 = sphi 0, %s29
      %s41 = sphi 0, %s43
      %s44 = sphi 0, %s41
      %s45 = sphi 0, %s44
      %s61 = sphi 0, %s45
      %s65 = sphi 0, %s65
      %s67 = sphi 0, %s65
      %s68 = sphi 0, %s67
      %s82 = sphi 0, %s68
      %s86 = sphi 0, %s86
      %s88 = sphi 0, %s86
      %s89 = sphi 0, %s88
      %s103 = sphi 0, %s89
      %s107 = sphi 0, %s107
      %s109 = sphi 0, %s107
      %s110 = sphi 0, %s109
      %s124 = sphi 0, %s110
      %s128 = sphi 0, %s128
      %s130 = sphi 0, %s128
      %s131 = sphi 0, %s130
      %s145 = sphi 0, %s131
      %s149 = sphi 0, %s149
      %s151 = sphi 0, %s149
      %s152 = sphi 0, %s151
      %s166 = sphi 0, %s152
      %s170 = sphi 0, %s170
      %s172 = sphi 0, %s170
      %s173 = sphi 0, %s172
      %s187 = sphi 0, %s173
      %s191 = sphi 0, %s191
      %s193 = sphi 0, %s191
      %s194 = sphi 0, %s193
      %s208 = sphi 0, %s194
      %s212 = sphi 0, %s212
      %s214 = sphi 0, %s212
      %s215 = sphi 0, %s214
      %s229 = sphi 0, %s215
      %s233 = sphi 0, %s233
      %s235 = sphi 0, %s233
      %s236 = sphi 0, %s235
      %s250 = sphi 0, %s236
      %s254 = sphi 0, %s254
      %s256 = sphi 0, %s254
      %s257 = sphi 0, %s256
      %s271 = sphi 0, %s257
      %s277 = sphi 0, %s279
      %s280 = sphi 0, %s277
      %s281 = sphi 0, %s280
      %s297 = sphi 0, %s281
      %s303 = sphi 0, %s305
      %s306 = sphi 0, %s303
      %s307 = sphi 0, %s306
      %s323 = sphi 0, %s307
      %s331 = sphi 0, %s333
      %s334 = sphi 0, %s331
      %s335 = sphi 0, %s334
      %s351 = sphi 0, %s335
    $region4: #{_mlp_medium_forward.1} parent=1 // loop_header_branch
      %22 = sbr.rel (%p20) target = $region8
    $region5: #{_mlp_medium_forward.1} parent=1 // loop_body
      %s24 = ssub.s32 %s19, 1
      %s25 = ssub.s32 %s19, 2
      %s32 = sadd.s32 1, %s27
      %p33 = scmp.ge.s32.totalorder %s32, 2
      %s34 = scalar_select %p33, 0, %s32
      %s35 = sadd.s32 1, %s26
      %s36 = scalar_select %p33, %s35, %s26
      %p37 = scmp.ge.s32.totalorder %s36, 2
      %s38 = scalar_select %p37, 0, %s36
      %s39 = ssub.s32 %s26, %s38
      %p40 = scmp.eq.s32.totalorder %s39, 0
      %s42 = sadd.s32 %s41, 1
      %s43 = scalar_select %p40, %s41, %s42
      %p46 = pneg %p40
      %p47 = scmp.eq.s32.totalorder %s19, 3
      %p48 = por %p46, %p47
      %p49 = scmp.ne.s32.totalorder %s41, %s44
      %p50 = scmp.eq.s32.totalorder %s19, 0
      %p51 = por %p49, %p50
      %p52 = scmp.ne.s32.totalorder %s41, %s44
      %p53 = scmp.eq.s32.totalorder %s24, 3
      %p54 = por %p52, %p53
      %p55 = scmp.ne.s32.totalorder %s44, %s45
      %p56 = scmp.eq.s32.totalorder %s24, 0
      %p57 = por %p55, %p56
      %p58 = scmp.ne.s32.totalorder %s44, %s45
      %p59 = scmp.eq.s32.totalorder %s25, 3
      %p60 = por %p58, %p59
      %p62 = scmp.ne.s32.totalorder %s45, %s61
      %p63 = scmp.eq.s32.totalorder %s25, 0
      %p64 = por %p62, %p63
      %s66 = sadd.s32 %s65, 1
      %p69 = scmp.eq.s32.totalorder %s19, 3
      %p70 = scmp.ne.s32.totalorder %s65, %s67
      %p71 = scmp.eq.s32.totalorder %s19, 0
      %p72 = por %p70, %p71
      %p73 = scmp.ne.s32.totalorder %s65, %s67
      %p74 = scmp.eq.s32.totalorder %s24, 3
      %p75 = por %p73, %p74
      %p76 = scmp.ne.s32.totalorder %s67, %s68
      %p77 = scmp.eq.s32.totalorder %s24, 0
      %p78 = por %p76, %p77
      %p79 = scmp.ne.s32.totalorder %s67, %s68
      %p80 = scmp.eq.s32.totalorder %s25, 3
      %p81 = por %p79, %p80
      %p83 = scmp.ne.s32.totalorder %s68, %s82
      %p84 = scmp.eq.s32.totalorder %s25, 0
      %p85 = por %p83, %p84
      %s87 = sadd.s32 %s86, 1
      %p90 = scmp.eq.s32.totalorder %s19, 3
      %p91 = scmp.ne.s32.totalorder %s86, %s88
      %p92 = scmp.eq.s32.totalorder %s19, 0
      %p93 = por %p91, %p92
      %p94 = scmp.ne.s32.totalorder %s86, %s88
      %p95 = scmp.eq.s32.totalorder %s24, 3
      %p96 = por %p94, %p95
      %p97 = scmp.ne.s32.totalorder %s88, %s89
      %p98 = scmp.eq.s32.totalorder %s24, 0
      %p99 = por %p97, %p98
      %p100 = scmp.ne.s32.totalorder %s88, %s89
      %p101 = scmp.eq.s32.totalorder %s25, 3
      %p102 = por %p100, %p101
      %p104 = scmp.ne.s32.totalorder %s89, %s103
      %p105 = scmp.eq.s32.totalorder %s25, 0
      %p106 = por %p104, %p105
      %s108 = sadd.s32 %s107, 1
      %p111 = scmp.eq.s32.totalorder %s19, 3
      %p112 = scmp.ne.s32.totalorder %s107, %s109
      %p113 = scmp.eq.s32.totalorder %s19, 0
      %p114 = por %p112, %p113
      %p115 = scmp.ne.s32.totalorder %s107, %s109
      %p116 = scmp.eq.s32.totalorder %s24, 3
      %p117 = por %p115, %p116
      %p118 = scmp.ne.s32.totalorder %s109, %s110
      %p119 = scmp.eq.s32.totalorder %s24, 0
      %p120 = por %p118, %p119
      %p121 = scmp.ne.s32.totalorder %s109, %s110
      %p122 = scmp.eq.s32.totalorder %s25, 3
      %p123 = por %p121, %p122
      %p125 = scmp.ne.s32.totalorder %s110, %s124
      %p126 = scmp.eq.s32.totalorder %s25, 0
      %p127 = por %p125, %p126
      %s129 = sadd.s32 %s128, 1
      %p132 = scmp.eq.s32.totalorder %s19, 3
      %p133 = scmp.ne.s32.totalorder %s128, %s130
      %p134 = scmp.eq.s32.totalorder %s19, 0
      %p135 = por %p133, %p134
      %p136 = scmp.ne.s32.totalorder %s128, %s130
      %p137 = scmp.eq.s32.totalorder %s24, 3
      %p138 = por %p136, %p137
      %p139 = scmp.ne.s32.totalorder %s130, %s131
      %p140 = scmp.eq.s32.totalorder %s24, 0
      %p141 = por %p139, %p140
      %p142 = scmp.ne.s32.totalorder %s130, %s131
      %p143 = scmp.eq.s32.totalorder %s25, 3
      %p144 = por %p142, %p143
      %p146 = scmp.ne.s32.totalorder %s131, %s145
      %p147 = scmp.eq.s32.totalorder %s25, 0
      %p148 = por %p146, %p147
      %s150 = sadd.s32 %s149, 1
      %p153 = scmp.eq.s32.totalorder %s19, 3
      %p154 = scmp.ne.s32.totalorder %s149, %s151
      %p155 = scmp.eq.s32.totalorder %s19, 0
      %p156 = por %p154, %p155
      %p157 = scmp.ne.s32.totalorder %s149, %s151
      %p158 = scmp.eq.s32.totalorder %s24, 3
      %p159 = por %p157, %p158
      %p160 = scmp.ne.s32.totalorder %s151, %s152
      %p161 = scmp.eq.s32.totalorder %s24, 0
      %p162 = por %p160, %p161
      %p163 = scmp.ne.s32.totalorder %s151, %s152
      %p164 = scmp.eq.s32.totalorder %s25, 3
      %p165 = por %p163, %p164
      %p167 = scmp.ne.s32.totalorder %s152, %s166
      %p168 = scmp.eq.s32.totalorder %s25, 0
      %p169 = por %p167, %p168
      %s171 = sadd.s32 %s170, 1
      %p174 = scmp.eq.s32.totalorder %s19, 3
      %p175 = scmp.ne.s32.totalorder %s170, %s172
      %p176 = scmp.eq.s32.totalorder %s19, 0
      %p177 = por %p175, %p176
      %p178 = scmp.ne.s32.totalorder %s170, %s172
      %p179 = scmp.eq.s32.totalorder %s24, 3
      %p180 = por %p178, %p179
      %p181 = scmp.ne.s32.totalorder %s172, %s173
      %p182 = scmp.eq.s32.totalorder %s24, 0
      %p183 = por %p181, %p182
      %p184 = scmp.ne.s32.totalorder %s172, %s173
      %p185 = scmp.eq.s32.totalorder %s25, 3
      %p186 = por %p184, %p185
      %p188 = scmp.ne.s32.totalorder %s173, %s187
      %p189 = scmp.eq.s32.totalorder %s25, 0
      %p190 = por %p188, %p189
      %s192 = sadd.s32 %s191, 1
      %p195 = scmp.eq.s32.totalorder %s19, 3
      %p196 = scmp.ne.s32.totalorder %s191, %s193
      %p197 = scmp.eq.s32.totalorder %s19, 0
      %p198 = por %p196, %p197
      %p199 = scmp.ne.s32.totalorder %s191, %s193
      %p200 = scmp.eq.s32.totalorder %s24, 3
      %p201 = por %p199, %p200
      %p202 = scmp.ne.s32.totalorder %s193, %s194
      %p203 = scmp.eq.s32.totalorder %s24, 0
      %p204 = por %p202, %p203
      %p205 = scmp.ne.s32.totalorder %s193, %s194
      %p206 = scmp.eq.s32.totalorder %s25, 3
      %p207 = por %p205, %p206
      %p209 = scmp.ne.s32.totalorder %s194, %s208
      %p210 = scmp.eq.s32.totalorder %s25, 0
      %p211 = por %p209, %p210
      %s213 = sadd.s32 %s212, 1
      %p216 = scmp.eq.s32.totalorder %s19, 3
      %p217 = scmp.ne.s32.totalorder %s212, %s214
      %p218 = scmp.eq.s32.totalorder %s19, 0
      %p219 = por %p217, %p218
      %p220 = scmp.ne.s32.totalorder %s212, %s214
      %p221 = scmp.eq.s32.totalorder %s24, 3
      %p222 = por %p220, %p221
      %p223 = scmp.ne.s32.totalorder %s214, %s215
      %p224 = scmp.eq.s32.totalorder %s24, 0
      %p225 = por %p223, %p224
      %p226 = scmp.ne.s32.totalorder %s214, %s215
      %p227 = scmp.eq.s32.totalorder %s25, 3
      %p228 = por %p226, %p227
      %p230 = scmp.ne.s32.totalorder %s215, %s229
      %p231 = scmp.eq.s32.totalorder %s25, 0
      %p232 = por %p230, %p231
      %s234 = sadd.s32 %s233, 1
      %p237 = scmp.eq.s32.totalorder %s19, 3
      %p238 = scmp.ne.s32.totalorder %s233, %s235
      %p239 = scmp.eq.s32.totalorder %s19, 0
      %p240 = por %p238, %p239
      %p241 = scmp.ne.s32.totalorder %s233, %s235
      %p242 = scmp.eq.s32.totalorder %s24, 3
      %p243 = por %p241, %p242
      %p244 = scmp.ne.s32.totalorder %s235, %s236
      %p245 = scmp.eq.s32.totalorder %s24, 0
      %p246 = por %p244, %p245
      %p247 = scmp.ne.s32.totalorder %s235, %s236
      %p248 = scmp.eq.s32.totalorder %s25, 3
      %p249 = por %p247, %p248
      %p251 = scmp.ne.s32.totalorder %s236, %s250
      %p252 = scmp.eq.s32.totalorder %s25, 0
      %p253 = por %p251, %p252
      %s255 = sadd.s32 %s254, 1
      %p258 = scmp.eq.s32.totalorder %s19, 3
      %p259 = scmp.ne.s32.totalorder %s254, %s256
      %p260 = scmp.eq.s32.totalorder %s19, 0
      %p261 = por %p259, %p260
      %p262 = scmp.ne.s32.totalorder %s254, %s256
      %p263 = scmp.eq.s32.totalorder %s24, 3
      %p264 = por %p262, %p263
      %p265 = scmp.ne.s32.totalorder %s256, %s257
      %p266 = scmp.eq.s32.totalorder %s24, 0
      %p267 = por %p265, %p266
      %p268 = scmp.ne.s32.totalorder %s256, %s257
      %p269 = scmp.eq.s32.totalorder %s25, 3
      %p270 = por %p268, %p269
      %p272 = scmp.ne.s32.totalorder %s257, %s271
      %p273 = scmp.eq.s32.totalorder %s25, 0
      %p274 = por %p272, %p273
      %s275 = ssub.s32 %s27, %s34
      %p276 = scmp.eq.s32.totalorder %s275, 0
      %s278 = sadd.s32 %s277, 1
      %s279 = scalar_select %p276, %s277, %s278
      %p282 = pneg %p276
      %p283 = scmp.eq.s32.totalorder %s19, 3
      %p284 = por %p282, %p283
      %p285 = scmp.ne.s32.totalorder %s277, %s280
      %p286 = scmp.eq.s32.totalorder %s19, 0
      %p287 = por %p285, %p286
      %p288 = scmp.ne.s32.totalorder %s277, %s280
      %p289 = scmp.eq.s32.totalorder %s24, 3
      %p290 = por %p288, %p289
      %p291 = scmp.ne.s32.totalorder %s280, %s281
      %p292 = scmp.eq.s32.totalorder %s24, 0
      %p293 = por %p291, %p292
      %p294 = scmp.ne.s32.totalorder %s280, %s281
      %p295 = scmp.eq.s32.totalorder %s25, 3
      %p296 = por %p294, %p295
      %p298 = scmp.ne.s32.totalorder %s281, %s297
      %p299 = scmp.eq.s32.totalorder %s25, 0
      %p300 = por %p298, %p299
      %s301 = ssub.s32 %s27, %s34
      %p302 = scmp.eq.s32.totalorder %s301, 0
      %s304 = sadd.s32 %s303, 1
      %s305 = scalar_select %p302, %s303, %s304
      %p308 = pneg %p302
      %p309 = scmp.eq.s32.totalorder %s19, 3
      %p310 = por %p308, %p309
      %p311 = scmp.ne.s32.totalorder %s303, %s306
      %p312 = scmp.eq.s32.totalorder %s19, 0
      %p313 = por %p311, %p312
      %p314 = scmp.ne.s32.totalorder %s303, %s306
      %p315 = scmp.eq.s32.totalorder %s24, 3
      %p316 = por %p314, %p315
      %p317 = scmp.ne.s32.totalorder %s306, %s307
      %p318 = scmp.eq.s32.totalorder %s24, 0
      %p319 = por %p317, %p318
      %p320 = scmp.ne.s32.totalorder %s306, %s307
      %p321 = scmp.eq.s32.totalorder %s25, 3
      %p322 = por %p320, %p321
      %p324 = scmp.ne.s32.totalorder %s307, %s323
      %p325 = scmp.eq.s32.totalorder %s25, 0
      %p326 = por %p324, %p325
      %s327 = ssub.s32 %s26, %s38
      %s328 = ssub.s32 %s27, %s34
      %s329 = sor.u32 %s327, %s328
      %p330 = scmp.eq.s32.totalorder %s329, 0
      %s332 = sadd.s32 %s331, 1
      %s333 = scalar_select %p330, %s331, %s332
      %p336 = pneg %p330
      %p337 = scmp.eq.s32.totalorder %s19, 3
      %p338 = por %p336, %p337
      %p339 = scmp.ne.s32.totalorder %s331, %s334
      %p340 = scmp.eq.s32.totalorder %s19, 0
      %p341 = por %p339, %p340
      %p342 = scmp.ne.s32.totalorder %s331, %s334
      %p343 = scmp.eq.s32.totalorder %s24, 3
      %p344 = por %p342, %p343
      %p345 = scmp.ne.s32.totalorder %s334, %s335
      %p346 = scmp.eq.s32.totalorder %s24, 0
      %p347 = por %p345, %p346
      %p348 = scmp.ne.s32.totalorder %s334, %s335
      %p349 = scmp.eq.s32.totalorder %s25, 3
      %p350 = por %p348, %p349
      %p352 = scmp.ne.s32.totalorder %s335, %s351
      %p353 = scmp.eq.s32.totalorder %s25, 0
      %p354 = por %p352, %p353
      %p355 = scmp.le.s32.totalorder 1, %s19
      %p356 = scmp.lt.s32.totalorder %s19, 5
      %p357 = pnand %p355, %p356
      %p358 = pneg %p357
      // Predicated region
      $region9: #{_mlp_medium_forward.1} parent=5 // pred_check
        _
      $region10: #{_mlp_medium_forward.1} parent=5 // pred_check_branch
        %360 = sbr.rel (%p357) target = $region12
      $region11: #{_mlp_medium_forward.1} parent=5 // pred_region
        %s361 = ssub.s32 %s19, 1
        // Predicated region
        $region13: #{_mlp_medium_forward.1} parent=11 // pred_check
          %p362 = pneg %p78
        $region14: #{_mlp_medium_forward.1} parent=11 // pred_check_branch
          %364 = sbr.rel (%p362) target = $region16
        $region15: #{_mlp_medium_forward.1} parent=11 // pred_region
          _
        $region16: #{_mlp_medium_forward.1} parent=11 // pred_fallthru
          _
        // Predicated region
        $region17: #{_mlp_medium_forward.1} parent=11 // pred_check
          %p365 = pneg %p99
        $region18: #{_mlp_medium_forward.1} parent=11 // pred_check_branch
          %367 = sbr.rel (%p365) target = $region20
        $region19: #{_mlp_medium_forward.1} parent=11 // pred_region
          _
        $region20: #{_mlp_medium_forward.1} parent=11 // pred_fallthru
          _
        // Predicated region
        $region21: #{_mlp_medium_forward.1} parent=11 // pred_check
          %p368 = pneg %p120
        $region22: #{_mlp_medium_forward.1} parent=11 // pred_check_branch
          %370 = sbr.rel (%p368) target = $region24
        $region23: #{_mlp_medium_forward.1} parent=11 // pred_region
          _
        $region24: #{_mlp_medium_forward.1} parent=11 // pred_fallthru
          _
        // Predicated region
        $region25: #{_mlp_medium_forward.1} parent=11 // pred_check
          %p371 = pneg %p141
        $region26: #{_mlp_medium_forward.1} parent=11 // pred_check_branch
          %373 = sbr.rel (%p371) target = $region28
        $region27: #{_mlp_medium_forward.1} parent=11 // pred_region
          _
        $region28: #{_mlp_medium_forward.1} parent=11 // pred_fallthru
          _
        // Predicated region
        $region29: #{_mlp_medium_forward.1} parent=11 // pred_check
          %p374 = pneg %p162
        $region30: #{_mlp_medium_forward.1} parent=11 // pred_check_branch
          %376 = sbr.rel (%p374) target = $region32
        $region31: #{_mlp_medium_forward.1} parent=11 // pred_region
          _
        $region32: #{_mlp_medium_forward.1} parent=11 // pred_fallthru
          _
        // Predicated region
        $region33: #{_mlp_medium_forward.1} parent=11 // pred_check
          %p377 = pneg %p183
        $region34: #{_mlp_medium_forward.1} parent=11 // pred_check_branch
          %379 = sbr.rel (%p377) target = $region36
        $region35: #{_mlp_medium_forward.1} parent=11 // pred_region
          _
        $region36: #{_mlp_medium_forward.1} parent=11 // pred_fallthru
          _
        // Predicated region
        $region37: #{_mlp_medium_forward.1} parent=11 // pred_check
          %p380 = pneg %p204
        $region38: #{_mlp_medium_forward.1} parent=11 // pred_check_branch
          %382 = sbr.rel (%p380) target = $region40
        $region39: #{_mlp_medium_forward.1} parent=11 // pred_region
          _
        $region40: #{_mlp_medium_forward.1} parent=11 // pred_fallthru
          _
        // Predicated region
        $region41: #{_mlp_medium_forward.1} parent=11 // pred_check
          %p383 = pneg %p225
        $region42: #{_mlp_medium_forward.1} parent=11 // pred_check_branch
          %385 = sbr.rel (%p383) target = $region44
        $region43: #{_mlp_medium_forward.1} parent=11 // pred_region
          _
        $region44: #{_mlp_medium_forward.1} parent=11 // pred_fallthru
          _
        // Predicated region
        $region45: #{_mlp_medium_forward.1} parent=11 // pred_check
          %p386 = pneg %p246
        $region46: #{_mlp_medium_forward.1} parent=11 // pred_check_branch
          %388 = sbr.rel (%p386) target = $region48
        $region47: #{_mlp_medium_forward.1} parent=11 // pred_region
          _
        $region48: #{_mlp_medium_forward.1} parent=11 // pred_fallthru
          _
        // Predicated region
        $region49: #{_mlp_medium_forward.1} parent=11 // pred_check
          %p389 = pneg %p267
        $region50: #{_mlp_medium_forward.1} parent=11 // pred_check_branch
          %391 = sbr.rel (%p389) target = $region52
        $region51: #{_mlp_medium_forward.1} parent=11 // pred_region
          _
        $region52: #{_mlp_medium_forward.1} parent=11 // pred_fallthru
          _
      $region12: #{_mlp_medium_forward.1} parent=5 // pred_fallthru
        _
      %p392 = scmp.lt.s32.totalorder %s19, 4
      // Predicated region
      $region53: #{_mlp_medium_forward.1} parent=5 // pred_check
        %p393 = pneg %p392
      $region54: #{_mlp_medium_forward.1} parent=5 // pred_check_branch
        %395 = sbr.rel (%p393) target = $region56
      $region55: #{_mlp_medium_forward.1} parent=5 // pred_region
        // Predicated region
        $region57: #{_mlp_medium_forward.1} parent=55 // pred_check
          %p396 = pneg %p51
        $region58: #{_mlp_medium_forward.1} parent=55 // pred_check_branch
          %398 = sbr.rel (%p396) target = $region60
        $region59: #{_mlp_medium_forward.1} parent=55 // pred_region
          %s399 = smul.u32 16, %s26
          %p400 = scmp.lt.s32.totalorder %s399, 31
          %s401 = scalar_select %p400, %s399, 31
          %s402 = smul.addr %s401, 4
          %s403 = scalar_lea.vmem %s0, %s402
          %s404 = smul.u32 16, %s26
        $region60: #{_mlp_medium_forward.1} parent=55 // pred_fallthru
          _
        // Predicated region
        $region61: #{_mlp_medium_forward.1} parent=55 // pred_check
          %p405 = pneg %p287
        $region62: #{_mlp_medium_forward.1} parent=55 // pred_check_branch
          %407 = sbr.rel (%p405) target = $region64
        $region63: #{_mlp_medium_forward.1} parent=55 // pred_region
          %s408 = sand.u32 %s277, 1
          %s409 = sand.u32 %s277, 1
          %s410 = smul.addr %s409, 64
          %s411 = scalar_lea.vmem [#allocation3], %s410
          %s412 = smul.addr %s27, 4
          %s413 = scalar_lea.vmem %s11, %s412
          // Predicated region
          $region65: #{_mlp_medium_forward.1} parent=63 // pred_check
            _
          $region66: #{_mlp_medium_forward.1} parent=63 // pred_check_branch
            %415 = sbr.rel (0) target = $region68
          $region67: #{_mlp_medium_forward.1} parent=63 // pred_region
            // Predicated region
            $region69: #{_mlp_medium_forward.1} parent=67 // pred_check
              _
            $region70: #{_mlp_medium_forward.1} parent=67 // pred_check_branch
              %417 = sbr.rel target = $region72
            $region71: #{_mlp_medium_forward.1} parent=67 // pred_region
              // Predicated region
              $region84: #{_mlp_medium_forward.1} parent=71 // pred_check
                _
              $region85: #{_mlp_medium_forward.1} parent=71 // pred_check_branch
                %463 = sbr.rel (0) target = $region87
              $region86: #{_mlp_medium_forward.1} parent=71 // pred_region
                loop: start=0, step=1, limit=1
                $region88: #{_mlp_medium_forward.1} parent=86 // loop_pre_header
                  _
                $region89: #{_mlp_medium_forward.1} parent=86 // loop_header
                  %s465 = sphi 0, %s469
                  %p466 = scmp.ge.s32.totalorder %s465, 1
                  %s470 = sphi %s413, %s413
                  %s471 = sphi %s411, %s411
                $region90: #{_mlp_medium_forward.1} parent=86 // loop_header_branch
                  %468 = sbr.rel (%p466) target = $region94
                $region91: #{_mlp_medium_forward.1} parent=86 // loop_body
                  _
                $region92: #{_mlp_medium_forward.1} parent=86 // loop_footer
                  %s469 = sadd.s32 1, %s465
                $region93: #{_mlp_medium_forward.1} parent=86 // loop_footer_branch
                  %464 = sbr.rel target = $region89
                $region94: #{_mlp_medium_forward.1} parent=86 // loop_exit
                  _
                %s473 = ssub.s32 16, 1
                loop: start=0, step=1, limit=1
                $region95: #{_mlp_medium_forward.1} parent=86 // loop_pre_header
                  _
                $region96: #{_mlp_medium_forward.1} parent=86 // loop_header
                  %s475 = sphi 0, %s479
                  %p476 = scmp.ge.s32.totalorder %s475, 1
                  %s480 = sphi %s413, %s413
                  %s481 = sphi %s411, %s411
                $region97: #{_mlp_medium_forward.1} parent=86 // loop_header_branch
                  %478 = sbr.rel (%p476) target = $region101
                $region98: #{_mlp_medium_forward.1} parent=86 // loop_body
                  %v482 = vld [vmem:[%s480] sm:%s473]
                  %483 = vst [vmem:[%s481] sm:%s473] %v482
                  %v484 = vld [vmem:[%s480 + $0x8] sm:%s473]
                  %485 = vst [vmem:[%s481 + $0x4] sm:%s473] %v484
                  %v486 = vld [vmem:[%s480 + $0x10] sm:%s473]
                  %487 = vst [vmem:[%s481 + $0x8] sm:%s473] %v486
                  %v488 = vld [vmem:[%s480 + $0x18] sm:%s473]
                  %489 = vst [vmem:[%s481 + $0xc] sm:%s473] %v488
                  %v490 = vld [vmem:[%s480 + $0x20] sm:%s473]
                  %491 = vst [vmem:[%s481 + $0x10] sm:%s473] %v490
                  %v492 = vld [vmem:[%s480 + $0x28] sm:%s473]
                  %493 = vst [vmem:[%s481 + $0x14] sm:%s473] %v492
                  %v494 = vld [vmem:[%s480 + $0x30] sm:%s473]
                  %495 = vst [vmem:[%s481 + $0x18] sm:%s473] %v494
                  %v496 = vld [vmem:[%s480 + $0x38] sm:%s473]
                  %497 = vst [vmem:[%s481 + $0x1c] sm:%s473] %v496
                  %v498 = vld [vmem:[%s480 + $0x40] sm:%s473]
                  %499 = vst [vmem:[%s481 + $0x20] sm:%s473] %v498
                  %v500 = vld [vmem:[%s480 + $0x48] sm:%s473]
                  %501 = vst [vmem:[%s481 + $0x24] sm:%s473] %v500
                  %v502 = vld [vmem:[%s480 + $0x50] sm:%s473]
                  %503 = vst [vmem:[%s481 + $0x28] sm:%s473] %v502
                  %v504 = vld [vmem:[%s480 + $0x58] sm:%s473]
                  %505 = vst [vmem:[%s481 + $0x2c] sm:%s473] %v504
                  %v506 = vld [vmem:[%s480 + $0x60] sm:%s473]
                  %507 = vst [vmem:[%s481 + $0x30] sm:%s473] %v506
                  %v508 = vld [vmem:[%s480 + $0x68] sm:%s473]
                  %509 = vst [vmem:[%s481 + $0x34] sm:%s473] %v508
                  %v510 = vld [vmem:[%s480 + $0x70] sm:%s473]
                  %511 = vst [vmem:[%s481 + $0x38] sm:%s473] %v510
                  %v512 = vld [vmem:[%s480 + $0x78] sm:%s473]
                  %513 = vst [vmem:[%s481 + $0x3c] sm:%s473] %v512
                $region99: #{_mlp_medium_forward.1} parent=86 // loop_footer
                  %s479 = sadd.s32 1, %s475
                $region100: #{_mlp_medium_forward.1} parent=86 // loop_footer_branch
                  %474 = sbr.rel target = $region96
                $region101: #{_mlp_medium_forward.1} parent=86 // loop_exit
                  _
              $region87: #{_mlp_medium_forward.1} parent=71 // pred_fallthru
                _
            $region72: #{_mlp_medium_forward.1} parent=67 // pred_fallthru
              _
            // Predicated region
            $region73: #{_mlp_medium_forward.1} parent=67 // pred_check
              _
            $region74: #{_mlp_medium_forward.1} parent=67 // pred_check_branch
              %419 = sbr.rel (0) target = $region76
            $region75: #{_mlp_medium_forward.1} parent=67 // pred_region
              %s421 = ssub.s32 16, 1
              loop: start=0, step=1, limit=1
              $region77: #{_mlp_medium_forward.1} parent=75 // loop_pre_header
                _
              $region78: #{_mlp_medium_forward.1} parent=75 // loop_header
                %s423 = sphi 0, %s427
                %p424 = scmp.ge.s32.totalorder %s423, 1
                %s428 = sphi %s413, %s413
                %s429 = sphi %s411, %s411
              $region79: #{_mlp_medium_forward.1} parent=75 // loop_header_branch
                %426 = sbr.rel (%p424) target = $region83
              $region80: #{_mlp_medium_forward.1} parent=75 // loop_body
                %v430 = vld [vmem:[%s428] sm:%s421]
                %431 = vst [vmem:[%s429] sm:%s421] %v430
                %v432 = vld [vmem:[%s428 + $0x8] sm:%s421]
                %433 = vst [vmem:[%s429 + $0x4] sm:%s421] %v432
                %v434 = vld [vmem:[%s428 + $0x10] sm:%s421]
                %435 = vst [vmem:[%s429 + $0x8] sm:%s421] %v434
                %v436 = vld [vmem:[%s428 + $0x18] sm:%s421]
                %437 = vst [vmem:[%s429 + $0xc] sm:%s421] %v436
                %v438 = vld [vmem:[%s428 + $0x20] sm:%s421]
                %439 = vst [vmem:[%s429 + $0x10] sm:%s421] %v438
                %v440 = vld [vmem:[%s428 + $0x28] sm:%s421]
                %441 = vst [vmem:[%s429 + $0x14] sm:%s421] %v440
                %v442 = vld [vmem:[%s428 + $0x30] sm:%s421]
                %443 = vst [vmem:[%s429 + $0x18] sm:%s421] %v442
                %v444 = vld [vmem:[%s428 + $0x38] sm:%s421]
                %445 = vst [vmem:[%s429 + $0x1c] sm:%s421] %v444
                %v446 = vld [vmem:[%s428 + $0x40] sm:%s421]
                %447 = vst [vmem:[%s429 + $0x20] sm:%s421] %v446
                %v448 = vld [vmem:[%s428 + $0x48] sm:%s421]
                %449 = vst [vmem:[%s429 + $0x24] sm:%s421] %v448
                %v450 = vld [vmem:[%s428 + $0x50] sm:%s421]
                %451 = vst [vmem:[%s429 + $0x28] sm:%s421] %v450
                %v452 = vld [vmem:[%s428 + $0x58] sm:%s421]
                %453 = vst [vmem:[%s429 + $0x2c] sm:%s421] %v452
                %v454 = vld [vmem:[%s428 + $0x60] sm:%s421]
                %455 = vst [vmem:[%s429 + $0x30] sm:%s421] %v454
                %v456 = vld [vmem:[%s428 + $0x68] sm:%s421]
                %457 = vst [vmem:[%s429 + $0x34] sm:%s421] %v456
                %v458 = vld [vmem:[%s428 + $0x70] sm:%s421]
                %459 = vst [vmem:[%s429 + $0x38] sm:%s421] %v458
                %v460 = vld [vmem:[%s428 + $0x78] sm:%s421]
                %461 = vst [vmem:[%s429 + $0x3c] sm:%s421] %v460
              $region81: #{_mlp_medium_forward.1} parent=75 // loop_footer
                %s427 = sadd.s32 1, %s423
              $region82: #{_mlp_medium_forward.1} parent=75 // loop_footer_branch
                %422 = sbr.rel target = $region78
              $region83: #{_mlp_medium_forward.1} parent=75 // loop_exit
                _
            $region76: #{_mlp_medium_forward.1} parent=67 // pred_fallthru
              _
          $region68: #{_mlp_medium_forward.1} parent=63 // pred_fallthru
            _
          %514 = vnop
        $region64: #{_mlp_medium_forward.1} parent=55 // pred_fallthru
          _
        // Predicated region
        $region102: #{_mlp_medium_forward.1} parent=55 // pred_check
          %p515 = pneg %p313
        $region103: #{_mlp_medium_forward.1} parent=55 // pred_check_branch
          %517 = sbr.rel (%p515) target = $region105
        $region104: #{_mlp_medium_forward.1} parent=55 // pred_region
          %p518 = scmp.lt.s32.totalorder %s27, 1
          %s519 = scalar_select %p518, %s27, 1
          %s520 = scalar_lea.vmem %s12, %s519
        $region105: #{_mlp_medium_forward.1} parent=55 // pred_fallthru
          _
      $region56: #{_mlp_medium_forward.1} parent=5 // pred_fallthru
        _
      %p521 = scmp.le.s32.totalorder 1, %s19
      %p522 = scmp.lt.s32.totalorder %s19, 5
      %p523 = pnand %p521, %p522
      %p524 = pneg %p523
      // Predicated region
      $region106: #{_mlp_medium_forward.1} parent=5 // pred_check
        _
      $region107: #{_mlp_medium_forward.1} parent=5 // pred_check_branch
        %526 = sbr.rel (%p523) target = $region109
      $region108: #{_mlp_medium_forward.1} parent=5 // pred_region
        %s527 = ssub.s32 %s19, 1
        %s528 = sand.u32 %s280, 1
        %s529 = sand.u32 %s280, 1
        %s530 = smul.addr %s529, 64
        %s531 = scalar_lea.vmem [#allocation3], %s530
        // Predicated region
        $region110: #{_mlp_medium_forward.1} parent=108 // pred_check
          %p532 = pneg %p293
        $region111: #{_mlp_medium_forward.1} parent=108 // pred_check_branch
          %534 = sbr.rel (%p532) target = $region113
        $region112: #{_mlp_medium_forward.1} parent=108 // pred_region
          _
        $region113: #{_mlp_medium_forward.1} parent=108 // pred_fallthru
          _
        %s535 = smul.u32 16, %s28
        %p536 = scmp.lt.s32.totalorder %s535, 31
        %s537 = scalar_select %p536, %s535, 31
        %s538 = smul.addr %s537, 4
        %s539 = scalar_lea.vmem %s0, %s538
        %p540 = pneg %p57
        %p541 = pneg %p54
        %p542 = pneg %p78
        %p543 = pneg %p75
        %p544 = pneg %p99
        %p545 = pneg %p96
        %p546 = pneg %p120
        %p547 = pneg %p117
        %p548 = pneg %p141
        %p549 = pneg %p138
        %p550 = pneg %p162
        %p551 = pneg %p159
        %p552 = pneg %p183
        %p553 = pneg %p180
        %p554 = pneg %p204
        %p555 = pneg %p201
        %p556 = pneg %p225
        %p557 = pneg %p222
        %p558 = pneg %p246
        %p559 = pneg %p243
        %p560 = pneg %p267
        %p561 = pneg %p264
        %s562 = sand.u32 %s280, 1
        %s563 = sand.u32 %s280, 1
        %s564 = smul.addr %s563, 64
        %s565 = scalar_lea.vmem [#allocation3], %s564
        %p566 = pneg %p293
        %p567 = pneg %p290
        %p568 = scmp.lt.s32.totalorder %s29, 1
        %s569 = scalar_select %p568, %s29, 1
        %s570 = scalar_lea.vmem %s12, %s569
        %p571 = pneg %p319
        %p572 = pneg %p316
        %p573 = pneg %p347
        %p574 = pneg %p344
        %s575 = sand.u32 %s334, 1
        %s576 = sand.u32 %s334, 1
        %s577 = smul.addr %s576, 128
        %s578 = scalar_lea.vmem [#allocation4], %s577
        %s579 = smul.u32 16, %s28
        %p580 = scmp.lt.s32.totalorder %s579, 31
        %s581 = scalar_select %p580, %s579, 31
        %s582 = smul.addr %s581, 4
        %s583 = scalar_lea.vmem %s0, %s582
        %s584 = smul.u32 16, %s28
        %p585 = scmp.lt.s32.totalorder %s29, 1
        %s586 = scalar_select %p585, %s29, 1
        %s587 = scalar_lea.vmem %s12, %s586
        %s588 = smul.u32 16, %s28
        %p589 = scmp.eq.s32.totalorder %s29, 0
        // Predicated region
        $region114: #{_mlp_medium_forward.1} parent=108 // pred_check
          %p590 = pneg %p589
        $region115: #{_mlp_medium_forward.1} parent=108 // pred_check_branch
          %592 = sbr.rel (%p590) target = $region117
        $region116: #{_mlp_medium_forward.1} parent=108 // pred_region
          %v593 = vld [vmem:[%s583] sm:$0xf]
          %v594 = vld [vmem:[%s583 + $0x4] sm:$0xf]
          %v595 = vld [vmem:[%s583 + $0x8] sm:$0xf]
          %v596 = vld [vmem:[%s583 + $0xc] sm:$0xf]
          %v597 = vld [vmem:[%s583 + $0x10] sm:$0xf]
          %v598 = vld [vmem:[%s583 + $0x14] sm:$0xf]
          %v599 = vld [vmem:[%s583 + $0x18] sm:$0xf]
          %v600 = vld [vmem:[%s583 + $0x1c] sm:$0xf]
          %v601 = vld [vmem:[%s583 + $0x20] sm:$0xf]
          %v602 = vld [vmem:[%s583 + $0x24] sm:$0xf]
          %v603 = vld [vmem:[%s583 + $0x28] sm:$0xf]
          %v604 = vld [vmem:[%s583 + $0x2c] sm:$0xf]
          %v605 = vld [vmem:[%s583 + $0x30] sm:$0xf]
          %v606 = vld [vmem:[%s583 + $0x34] sm:$0xf]
          %v607 = vld [vmem:[%s583 + $0x38] sm:$0xf]
          %v608 = vld [vmem:[%s583 + $0x3c] sm:$0xf]
          %v609 = vld [vmem:[%s1] sm:$0xf]
          %v610 = vld [vmem:[%s1 + $0x4] sm:$0xf]
          %v611 = vld [vmem:[%s1 + $0x8] sm:$0xf]
          %v612 = vld [vmem:[%s1 + $0xc] sm:$0xf]
          %v613 = vld [vmem:[%s1 + $0x10] sm:$0xf]
          %v614 = vld [vmem:[%s1 + $0x14] sm:$0xf]
          %v615 = vld [vmem:[%s1 + $0x18] sm:$0xf]
          %v616 = vld [vmem:[%s1 + $0x1c] sm:$0xf]
          %v617 = vld [vmem:[%s1 + $0x20] sm:$0xf]
          %v618 = vld [vmem:[%s1 + $0x24] sm:$0xf]
          %v619 = vld [vmem:[%s1 + $0x28] sm:$0xf]
          %v620 = vld [vmem:[%s1 + $0x2c] sm:$0xf]
          %v621 = vld [vmem:[%s1 + $0x30] sm:$0xf]
          %v622 = vld [vmem:[%s1 + $0x34] sm:$0xf]
          %v623 = vld [vmem:[%s1 + $0x38] sm:$0xf]
          %v624 = vld [vmem:[%s1 + $0x3c] sm:$0xf]
          %v625 = vld [vmem:[%s2] sm:$0x1]
          %v627 = vperm.slane %v625, 0
          %v645 = vunpack.c.l.b16 %v593
          %v646 = vunpack.c.l.b16 %v594
          %v647 = vunpack.c.l.b16 %v595
          %v648 = vunpack.c.l.b16 %v596
          %v649 = vunpack.c.l.b16 %v597
          %v650 = vunpack.c.l.b16 %v598
          %v651 = vunpack.c.l.b16 %v599
          %v652 = vunpack.c.l.b16 %v600
          %v653 = vunpack.c.l.b16 %v601
          %v654 = vunpack.c.l.b16 %v602
          %v655 = vunpack.c.l.b16 %v603
          %v656 = vunpack.c.l.b16 %v604
          %v657 = vunpack.c.l.b16 %v605
          %v658 = vunpack.c.l.b16 %v606
          %v659 = vunpack.c.l.b16 %v607
          %v660 = vunpack.c.l.b16 %v608
          %v661 = vpack.c.b16 %v646, %v645
          %v662 = vpack.c.b16 %v648, %v647
          %v663 = vpack.c.b16 %v650, %v649
          %v664 = vpack.c.b16 %v652, %v651
          %v665 = vpack.c.b16 %v654, %v653
          %v666 = vpack.c.b16 %v656, %v655
          %v667 = vpack.c.b16 %v658, %v657
          %v668 = vpack.c.b16 %v660, %v659
          %v693 = vunpack.c.l.b16 %v609
          %v694 = vunpack.c.l.b16 %v610
          %v695 = vunpack.c.l.b16 %v611
          %v696 = vunpack.c.l.b16 %v612
          %v697 = vunpack.c.l.b16 %v613
          %v698 = vunpack.c.l.b16 %v614
          %v699 = vunpack.c.l.b16 %v615
          %v700 = vunpack.c.l.b16 %v616
          %v701 = vunpack.c.l.b16 %v617
          %v702 = vunpack.c.l.b16 %v618
          %v703 = vunpack.c.l.b16 %v619
          %v704 = vunpack.c.l.b16 %v620
          %v705 = vunpack.c.l.b16 %v621
          %v706 = vunpack.c.l.b16 %v622
          %v707 = vunpack.c.l.b16 %v623
          %v708 = vunpack.c.l.b16 %v624
          %v709 = vpack.c.b16 %v694, %v693
          %v710 = vpack.c.b16 %v696, %v695
          %v711 = vpack.c.b16 %v698, %v697
          %v712 = vpack.c.b16 %v700, %v699
          %v713 = vpack.c.b16 %v702, %v701
          %v714 = vpack.c.b16 %v704, %v703
          %v715 = vpack.c.b16 %v706, %v705
          %v716 = vpack.c.b16 %v708, %v707
          %725 = vmatpush.bf16.msra.mxu0 %v716
          %726 = vmatpush.bf16.msra.mxu0 %v715
          %727 = vmatpush.bf16.msra.mxu0 %v714
          %728 = vmatpush.bf16.msra.mxu0 %v713
          %729 = vmatpush.bf16.msra.mxu0 %v712
          %730 = vmatpush.bf16.msra.mxu0 %v711
          %731 = vmatpush.bf16.msra.mxu0 %v710
          %732 = vmatpush.bf16.msra.mxu0 %v709
          %733 = vmatmul.bf16.gmra.mxu0 %v661
          %v734 = vpop.f32.mrf.mxu0
          %v735 = vadd.f32 %v627, %v734
          %v736 = vpop.f32.mrf.mxu0
          %v737 = vadd.f32 %v627, %v736
          %738 = vmatmul.bf16.gmra.mxu0 %v662
          %v739 = vpop.f32.mrf.mxu0
          %v740 = vadd.f32 %v627, %v739
          %v741 = vpop.f32.mrf.mxu0
          %v742 = vadd.f32 %v627, %v741
          %743 = vmatmul.bf16.gmra.mxu0 %v663
          %v744 = vpop.f32.mrf.mxu0
          %v745 = vadd.f32 %v627, %v744
          %v746 = vpop.f32.mrf.mxu0
          %v747 = vadd.f32 %v627, %v746
          %748 = vmatmul.bf16.gmra.mxu0 %v664
          %v749 = vpop.f32.mrf.mxu0
          %v750 = vadd.f32 %v627, %v749
          %v751 = vpop.f32.mrf.mxu0
          %v752 = vadd.f32 %v627, %v751
          %753 = vmatmul.bf16.gmra.mxu0 %v665
          %v754 = vpop.f32.mrf.mxu0
          %v755 = vadd.f32 %v627, %v754
          %v756 = vpop.f32.mrf.mxu0
          %v757 = vadd.f32 %v627, %v756
          %758 = vmatmul.bf16.gmra.mxu0 %v666
          %v759 = vpop.f32.mrf.mxu0
          %v760 = vadd.f32 %v627, %v759
          %v761 = vpop.f32.mrf.mxu0
          %v762 = vadd.f32 %v627, %v761
          %763 = vmatmul.bf16.gmra.mxu0 %v667
          %v764 = vpop.f32.mrf.mxu0
          %v765 = vadd.f32 %v627, %v764
          %v766 = vpop.f32.mrf.mxu0
          %v767 = vadd.f32 %v627, %v766
          %768 = vmatmul.bf16.gmra.mxu0 %v668
          %v769 = vpop.f32.mrf.mxu0
          %v770 = vadd.f32 %v627, %v769
          %v771 = vpop.f32.mrf.mxu0
          %v772 = vadd.f32 %v627, %v771
          %773 = vdwg.mxu0
          %v774 = vmax.f32 %v735, 0.0
          %v775 = vmax.f32 %v737, 0.0
          %v776 = vmax.f32 %v740, 0.0
          %v777 = vmax.f32 %v742, 0.0
          %v778 = vmax.f32 %v745, 0.0
          %v779 = vmax.f32 %v747, 0.0
          %v780 = vmax.f32 %v750, 0.0
          %v781 = vmax.f32 %v752, 0.0
          %v782 = vmax.f32 %v755, 0.0
          %v783 = vmax.f32 %v757, 0.0
          %v784 = vmax.f32 %v760, 0.0
          %v785 = vmax.f32 %v762, 0.0
          %v786 = vmax.f32 %v765, 0.0
          %v787 = vmax.f32 %v767, 0.0
          %v788 = vmax.f32 %v770, 0.0
          %v789 = vmax.f32 %v772, 0.0
          %v790 = vpack.c.bf16 %v775, %v774
          %v791 = vpack.c.bf16 %v777, %v776
          %v792 = vpack.c.bf16 %v779, %v778
          %v793 = vpack.c.bf16 %v781, %v780
          %v794 = vpack.c.bf16 %v783, %v782
          %v795 = vpack.c.bf16 %v785, %v784
          %v796 = vpack.c.bf16 %v787, %v786
          %v797 = vpack.c.bf16 %v789, %v788
          %v798 = vld [vmem:[%s3] sm:$0xf]
          %v799 = vld [vmem:[%s3 + $0x4] sm:$0xf]
          %v800 = vld [vmem:[%s3 + $0x8] sm:$0xf]
          %v801 = vld [vmem:[%s3 + $0xc] sm:$0xf]
          %v802 = vld [vmem:[%s3 + $0x10] sm:$0xf]
          %v803 = vld [vmem:[%s3 + $0x14] sm:$0xf]
          %v804 = vld [vmem:[%s3 + $0x18] sm:$0xf]
          %v805 = vld [vmem:[%s3 + $0x1c] sm:$0xf]
          %v806 = vld [vmem:[%s3 + $0x20] sm:$0xf]
          %v807 = vld [vmem:[%s3 + $0x24] sm:$0xf]
          %v808 = vld [vmem:[%s3 + $0x28] sm:$0xf]
          %v809 = vld [vmem:[%s3 + $0x2c] sm:$0xf]
          %v810 = vld [vmem:[%s3 + $0x30] sm:$0xf]
          %v811 = vld [vmem:[%s3 + $0x34] sm:$0xf]
          %v812 = vld [vmem:[%s3 + $0x38] sm:$0xf]
          %v813 = vld [vmem:[%s3 + $0x3c] sm:$0xf]
          %v814 = vld [vmem:[%s4] sm:$0x1]
          %v816 = vperm.slane %v814, 0
          %v834 = vunpack.c.l.b16 %v798
          %v835 = vunpack.c.l.b16 %v799
          %v836 = vunpack.c.l.b16 %v800
          %v837 = vunpack.c.l.b16 %v801
          %v838 = vunpack.c.l.b16 %v802
          %v839 = vunpack.c.l.b16 %v803
          %v840 = vunpack.c.l.b16 %v804
          %v841 = vunpack.c.l.b16 %v805
          %v842 = vunpack.c.l.b16 %v806
          %v843 = vunpack.c.l.b16 %v807
          %v844 = vunpack.c.l.b16 %v808
          %v845 = vunpack.c.l.b16 %v809
          %v846 = vunpack.c.l.b16 %v810
          %v847 = vunpack.c.l.b16 %v811
          %v848 = vunpack.c.l.b16 %v812
          %v849 = vunpack.c.l.b16 %v813
          %v850 = vpack.c.b16 %v835, %v834
          %v851 = vpack.c.b16 %v837, %v836
          %v852 = vpack.c.b16 %v839, %v838
          %v853 = vpack.c.b16 %v841, %v840
          %v854 = vpack.c.b16 %v843, %v842
          %v855 = vpack.c.b16 %v845, %v844
          %v856 = vpack.c.b16 %v847, %v846
          %v857 = vpack.c.b16 %v849, %v848
          %866 = vmatpush.bf16.msra.mxu0 %v857
          %867 = vmatpush.bf16.msra.mxu0 %v856
          %868 = vmatpush.bf16.msra.mxu0 %v855
          %869 = vmatpush.bf16.msra.mxu0 %v854
          %870 = vmatpush.bf16.msra.mxu0 %v853
          %871 = vmatpush.bf16.msra.mxu0 %v852
          %872 = vmatpush.bf16.msra.mxu0 %v851
          %873 = vmatpush.bf16.msra.mxu0 %v850
          %874 = vmatmul.bf16.gmra.mxu0 %v790
          %v875 = vpop.f32.mrf.mxu0
          %v876 = vadd.f32 %v816, %v875
          %v877 = vpop.f32.mrf.mxu0
          %v878 = vadd.f32 %v816, %v877
          %879 = vmatmul.bf16.gmra.mxu0 %v791
          %v880 = vpop.f32.mrf.mxu0
          %v881 = vadd.f32 %v816, %v880
          %v882 = vpop.f32.mrf.mxu0
          %v883 = vadd.f32 %v816, %v882
          %884 = vmatmul.bf16.gmra.mxu0 %v792
          %v885 = vpop.f32.mrf.mxu0
          %v886 = vadd.f32 %v816, %v885
          %v887 = vpop.f32.mrf.mxu0
          %v888 = vadd.f32 %v816, %v887
          %889 = vmatmul.bf16.gmra.mxu0 %v793
          %v890 = vpop.f32.mrf.mxu0
          %v891 = vadd.f32 %v816, %v890
          %v892 = vpop.f32.mrf.mxu0
          %v893 = vadd.f32 %v816, %v892
          %894 = vmatmul.bf16.gmra.mxu0 %v794
          %v895 = vpop.f32.mrf.mxu0
          %v896 = vadd.f32 %v816, %v895
          %v897 = vpop.f32.mrf.mxu0
          %v898 = vadd.f32 %v816, %v897
          %899 = vmatmul.bf16.gmra.mxu0 %v795
          %v900 = vpop.f32.mrf.mxu0
          %v901 = vadd.f32 %v816, %v900
          %v902 = vpop.f32.mrf.mxu0
          %v903 = vadd.f32 %v816, %v902
          %904 = vmatmul.bf16.gmra.mxu0 %v796
          %v905 = vpop.f32.mrf.mxu0
          %v906 = vadd.f32 %v816, %v905
          %v907 = vpop.f32.mrf.mxu0
          %v908 = vadd.f32 %v816, %v907
          %909 = vmatmul.bf16.gmra.mxu0 %v797
          %v910 = vpop.f32.mrf.mxu0
          %v911 = vadd.f32 %v816, %v910
          %v912 = vpop.f32.mrf.mxu0
          %v913 = vadd.f32 %v816, %v912
          %914 = vdwg.mxu0
          %v915 = vmax.f32 %v876, 0.0
          %v916 = vmax.f32 %v878, 0.0
          %v917 = vmax.f32 %v881, 0.0
          %v918 = vmax.f32 %v883, 0.0
          %v919 = vmax.f32 %v886, 0.0
          %v920 = vmax.f32 %v888, 0.0
          %v921 = vmax.f32 %v891, 0.0
          %v922 = vmax.f32 %v893, 0.0
          %v923 = vmax.f32 %v896, 0.0
          %v924 = vmax.f32 %v898, 0.0
          %v925 = vmax.f32 %v901, 0.0
          %v926 = vmax.f32 %v903, 0.0
          %v927 = vmax.f32 %v906, 0.0
          %v928 = vmax.f32 %v908, 0.0
          %v929 = vmax.f32 %v911, 0.0
          %v930 = vmax.f32 %v913, 0.0
          %v931 = vpack.c.bf16 %v916, %v915
          %v932 = vpack.c.bf16 %v918, %v917
          %v933 = vpack.c.bf16 %v920, %v919
          %v934 = vpack.c.bf16 %v922, %v921
          %v935 = vpack.c.bf16 %v924, %v923
          %v936 = vpack.c.bf16 %v926, %v925
          %v937 = vpack.c.bf16 %v928, %v927
          %v938 = vpack.c.bf16 %v930, %v929
          %v939 = vld [vmem:[%s5] sm:$0xf]
          %v940 = vld [vmem:[%s5 + $0x4] sm:$0xf]
          %v941 = vld [vmem:[%s5 + $0x8] sm:$0xf]
          %v942 = vld [vmem:[%s5 + $0xc] sm:$0xf]
          %v943 = vld [vmem:[%s5 + $0x10] sm:$0xf]
          %v944 = vld [vmem:[%s5 + $0x14] sm:$0xf]
          %v945 = vld [vmem:[%s5 + $0x18] sm:$0xf]
          %v946 = vld [vmem:[%s5 + $0x1c] sm:$0xf]
          %v947 = vld [vmem:[%s5 + $0x20] sm:$0xf]
          %v948 = vld [vmem:[%s5 + $0x24] sm:$0xf]
          %v949 = vld [vmem:[%s5 + $0x28] sm:$0xf]
          %v950 = vld [vmem:[%s5 + $0x2c] sm:$0xf]
          %v951 = vld [vmem:[%s5 + $0x30] sm:$0xf]
          %v952 = vld [vmem:[%s5 + $0x34] sm:$0xf]
          %v953 = vld [vmem:[%s5 + $0x38] sm:$0xf]
          %v954 = vld [vmem:[%s5 + $0x3c] sm:$0xf]
          %v955 = vld [vmem:[%s6] sm:$0x1]
          %v957 = vperm.slane %v955, 0
          %v975 = vunpack.c.l.b16 %v939
          %v976 = vunpack.c.l.b16 %v940
          %v977 = vunpack.c.l.b16 %v941
          %v978 = vunpack.c.l.b16 %v942
          %v979 = vunpack.c.l.b16 %v943
          %v980 = vunpack.c.l.b16 %v944
          %v981 = vunpack.c.l.b16 %v945
          %v982 = vunpack.c.l.b16 %v946
          %v983 = vunpack.c.l.b16 %v947
          %v984 = vunpack.c.l.b16 %v948
          %v985 = vunpack.c.l.b16 %v949
          %v986 = vunpack.c.l.b16 %v950
          %v987 = vunpack.c.l.b16 %v951
          %v988 = vunpack.c.l.b16 %v952
          %v989 = vunpack.c.l.b16 %v953
          %v990 = vunpack.c.l.b16 %v954
          %v991 = vpack.c.b16 %v976, %v975
          %v992 = vpack.c.b16 %v978, %v977
          %v993 = vpack.c.b16 %v980, %v979
          %v994 = vpack.c.b16 %v982, %v981
          %v995 = vpack.c.b16 %v984, %v983
          %v996 = vpack.c.b16 %v986, %v985
          %v997 = vpack.c.b16 %v988, %v987
          %v998 = vpack.c.b16 %v990, %v989
          %1007 = vmatpush.bf16.msra.mxu0 %v998
          %1008 = vmatpush.bf16.msra.mxu0 %v997
          %1009 = vmatpush.bf16.msra.mxu0 %v996
          %1010 = vmatpush.bf16.msra.mxu0 %v995
          %1011 = vmatpush.bf16.msra.mxu0 %v994
          %1012 = vmatpush.bf16.msra.mxu0 %v993
          %1013 = vmatpush.bf16.msra.mxu0 %v992
          %1014 = vmatpush.bf16.msra.mxu0 %v991
          %1015 = vmatmul.bf16.gmra.mxu0 %v931
          %v1016 = vpop.f32.mrf.mxu0
          %v1017 = vadd.f32 %v957, %v1016
          %v1018 = vpop.f32.mrf.mxu0
          %v1019 = vadd.f32 %v957, %v1018
          %1020 = vmatmul.bf16.gmra.mxu0 %v932
          %v1021 = vpop.f32.mrf.mxu0
          %v1022 = vadd.f32 %v957, %v1021
          %v1023 = vpop.f32.mrf.mxu0
          %v1024 = vadd.f32 %v957, %v1023
          %1025 = vmatmul.bf16.gmra.mxu0 %v933
          %v1026 = vpop.f32.mrf.mxu0
          %v1027 = vadd.f32 %v957, %v1026
          %v1028 = vpop.f32.mrf.mxu0
          %v1029 = vadd.f32 %v957, %v1028
          %1030 = vmatmul.bf16.gmra.mxu0 %v934
          %v1031 = vpop.f32.mrf.mxu0
          %v1032 = vadd.f32 %v957, %v1031
          %v1033 = vpop.f32.mrf.mxu0
          %v1034 = vadd.f32 %v957, %v1033
          %1035 = vmatmul.bf16.gmra.mxu0 %v935
          %v1036 = vpop.f32.mrf.mxu0
          %v1037 = vadd.f32 %v957, %v1036
          %v1038 = vpop.f32.mrf.mxu0
          %v1039 = vadd.f32 %v957, %v1038
          %1040 = vmatmul.bf16.gmra.mxu0 %v936
          %v1041 = vpop.f32.mrf.mxu0
          %v1042 = vadd.f32 %v957, %v1041
          %v1043 = vpop.f32.mrf.mxu0
          %v1044 = vadd.f32 %v957, %v1043
          %1045 = vmatmul.bf16.gmra.mxu0 %v937
          %v1046 = vpop.f32.mrf.mxu0
          %v1047 = vadd.f32 %v957, %v1046
          %v1048 = vpop.f32.mrf.mxu0
          %v1049 = vadd.f32 %v957, %v1048
          %1050 = vmatmul.bf16.gmra.mxu0 %v938
          %v1051 = vpop.f32.mrf.mxu0
          %v1052 = vadd.f32 %v957, %v1051
          %v1053 = vpop.f32.mrf.mxu0
          %v1054 = vadd.f32 %v957, %v1053
          %1055 = vdwg.mxu0
          %v1056 = vmax.f32 %v1017, 0.0
          %v1057 = vmax.f32 %v1019, 0.0
          %v1058 = vmax.f32 %v1022, 0.0
          %v1059 = vmax.f32 %v1024, 0.0
          %v1060 = vmax.f32 %v1027, 0.0
          %v1061 = vmax.f32 %v1029, 0.0
          %v1062 = vmax.f32 %v1032, 0.0
          %v1063 = vmax.f32 %v1034, 0.0
          %v1064 = vmax.f32 %v1037, 0.0
          %v1065 = vmax.f32 %v1039, 0.0
          %v1066 = vmax.f32 %v1042, 0.0
          %v1067 = vmax.f32 %v1044, 0.0
          %v1068 = vmax.f32 %v1047, 0.0
          %v1069 = vmax.f32 %v1049, 0.0
          %v1070 = vmax.f32 %v1052, 0.0
          %v1071 = vmax.f32 %v1054, 0.0
          %v1072 = vpack.c.bf16 %v1057, %v1056
          %v1073 = vpack.c.bf16 %v1059, %v1058
          %v1074 = vpack.c.bf16 %v1061, %v1060
          %v1075 = vpack.c.bf16 %v1063, %v1062
          %v1076 = vpack.c.bf16 %v1065, %v1064
          %v1077 = vpack.c.bf16 %v1067, %v1066
          %v1078 = vpack.c.bf16 %v1069, %v1068
          %v1079 = vpack.c.bf16 %v1071, %v1070
          %v1080 = vld [vmem:[%s7] sm:$0xf]
          %v1081 = vld [vmem:[%s7 + $0x4] sm:$0xf]
          %v1082 = vld [vmem:[%s7 + $0x8] sm:$0xf]
          %v1083 = vld [vmem:[%s7 + $0xc] sm:$0xf]
          %v1084 = vld [vmem:[%s7 + $0x10] sm:$0xf]
          %v1085 = vld [vmem:[%s7 + $0x14] sm:$0xf]
          %v1086 = vld [vmem:[%s7 + $0x18] sm:$0xf]
          %v1087 = vld [vmem:[%s7 + $0x1c] sm:$0xf]
          %v1088 = vld [vmem:[%s7 + $0x20] sm:$0xf]
          %v1089 = vld [vmem:[%s7 + $0x24] sm:$0xf]
          %v1090 = vld [vmem:[%s7 + $0x28] sm:$0xf]
          %v1091 = vld [vmem:[%s7 + $0x2c] sm:$0xf]
          %v1092 = vld [vmem:[%s7 + $0x30] sm:$0xf]
          %v1093 = vld [vmem:[%s7 + $0x34] sm:$0xf]
          %v1094 = vld [vmem:[%s7 + $0x38] sm:$0xf]
          %v1095 = vld [vmem:[%s7 + $0x3c] sm:$0xf]
          %v1096 = vld [vmem:[%s8] sm:$0x1]
          %v1098 = vperm.slane %v1096, 0
          %v1116 = vunpack.c.l.b16 %v1080
          %v1117 = vunpack.c.l.b16 %v1081
          %v1118 = vunpack.c.l.b16 %v1082
          %v1119 = vunpack.c.l.b16 %v1083
          %v1120 = vunpack.c.l.b16 %v1084
          %v1121 = vunpack.c.l.b16 %v1085
          %v1122 = vunpack.c.l.b16 %v1086
          %v1123 = vunpack.c.l.b16 %v1087
          %v1124 = vunpack.c.l.b16 %v1088
          %v1125 = vunpack.c.l.b16 %v1089
          %v1126 = vunpack.c.l.b16 %v1090
          %v1127 = vunpack.c.l.b16 %v1091
          %v1128 = vunpack.c.l.b16 %v1092
          %v1129 = vunpack.c.l.b16 %v1093
          %v1130 = vunpack.c.l.b16 %v1094
          %v1131 = vunpack.c.l.b16 %v1095
          %v1132 = vpack.c.b16 %v1117, %v1116
          %v1133 = vpack.c.b16 %v1119, %v1118
          %v1134 = vpack.c.b16 %v1121, %v1120
          %v1135 = vpack.c.b16 %v1123, %v1122
          %v1136 = vpack.c.b16 %v1125, %v1124
          %v1137 = vpack.c.b16 %v1127, %v1126
          %v1138 = vpack.c.b16 %v1129, %v1128
          %v1139 = vpack.c.b16 %v1131, %v1130
          %1148 = vmatpush.bf16.msra.mxu0 %v1139
          %1149 = vmatpush.bf16.msra.mxu0 %v1138
          %1150 = vmatpush.bf16.msra.mxu0 %v1137
          %1151 = vmatpush.bf16.msra.mxu0 %v1136
          %1152 = vmatpush.bf16.msra.mxu0 %v1135
          %1153 = vmatpush.bf16.msra.mxu0 %v1134
          %1154 = vmatpush.bf16.msra.mxu0 %v1133
          %1155 = vmatpush.bf16.msra.mxu0 %v1132
          %1156 = vmatmul.bf16.gmra.mxu0 %v1072
          %v1157 = vpop.f32.mrf.mxu0
          %v1158 = vadd.f32 %v1098, %v1157
          %v1159 = vpop.f32.mrf.mxu0
          %v1160 = vadd.f32 %v1098, %v1159
          %1161 = vmatmul.bf16.gmra.mxu0 %v1073
          %v1162 = vpop.f32.mrf.mxu0
          %v1163 = vadd.f32 %v1098, %v1162
          %v1164 = vpop.f32.mrf.mxu0
          %v1165 = vadd.f32 %v1098, %v1164
          %1166 = vmatmul.bf16.gmra.mxu0 %v1074
          %v1167 = vpop.f32.mrf.mxu0
          %v1168 = vadd.f32 %v1098, %v1167
          %v1169 = vpop.f32.mrf.mxu0
          %v1170 = vadd.f32 %v1098, %v1169
          %1171 = vmatmul.bf16.gmra.mxu0 %v1075
          %v1172 = vpop.f32.mrf.mxu0
          %v1173 = vadd.f32 %v1098, %v1172
          %v1174 = vpop.f32.mrf.mxu0
          %v1175 = vadd.f32 %v1098, %v1174
          %1176 = vmatmul.bf16.gmra.mxu0 %v1076
          %v1177 = vpop.f32.mrf.mxu0
          %v1178 = vadd.f32 %v1098, %v1177
          %v1179 = vpop.f32.mrf.mxu0
          %v1180 = vadd.f32 %v1098, %v1179
          %1181 = vmatmul.bf16.gmra.mxu0 %v1077
          %v1182 = vpop.f32.mrf.mxu0
          %v1183 = vadd.f32 %v1098, %v1182
          %v1184 = vpop.f32.mrf.mxu0
          %v1185 = vadd.f32 %v1098, %v1184
          %1186 = vmatmul.bf16.gmra.mxu0 %v1078
          %v1187 = vpop.f32.mrf.mxu0
          %v1188 = vadd.f32 %v1098, %v1187
          %v1189 = vpop.f32.mrf.mxu0
          %v1190 = vadd.f32 %v1098, %v1189
          %1191 = vmatmul.bf16.gmra.mxu0 %v1079
          %v1192 = vpop.f32.mrf.mxu0
          %v1193 = vadd.f32 %v1098, %v1192
          %v1194 = vpop.f32.mrf.mxu0
          %v1195 = vadd.f32 %v1098, %v1194
          %1196 = vdwg.mxu0
          %v1197 = vmax.f32 %v1158, 0.0
          %v1198 = vmax.f32 %v1160, 0.0
          %v1199 = vmax.f32 %v1163, 0.0
          %v1200 = vmax.f32 %v1165, 0.0
          %v1201 = vmax.f32 %v1168, 0.0
          %v1202 = vmax.f32 %v1170, 0.0
          %v1203 = vmax.f32 %v1173, 0.0
          %v1204 = vmax.f32 %v1175, 0.0
          %v1205 = vmax.f32 %v1178, 0.0
          %v1206 = vmax.f32 %v1180, 0.0
          %v1207 = vmax.f32 %v1183, 0.0
          %v1208 = vmax.f32 %v1185, 0.0
          %v1209 = vmax.f32 %v1188, 0.0
          %v1210 = vmax.f32 %v1190, 0.0
          %v1211 = vmax.f32 %v1193, 0.0
          %v1212 = vmax.f32 %v1195, 0.0
          %v1213 = vpack.c.bf16 %v1198, %v1197
          %v1214 = vpack.c.bf16 %v1200, %v1199
          %v1215 = vpack.c.bf16 %v1202, %v1201
          %v1216 = vpack.c.bf16 %v1204, %v1203
          %v1217 = vpack.c.bf16 %v1206, %v1205
          %v1218 = vpack.c.bf16 %v1208, %v1207
          %v1219 = vpack.c.bf16 %v1210, %v1209
          %v1220 = vpack.c.bf16 %v1212, %v1211
          %v1221 = vld [vmem:[%s9] sm:$0xf]
          %v1222 = vld [vmem:[%s9 + $0x4] sm:$0xf]
          %v1223 = vld [vmem:[%s9 + $0x8] sm:$0xf]
          %v1224 = vld [vmem:[%s9 + $0xc] sm:$0xf]
          %v1225 = vld [vmem:[%s9 + $0x10] sm:$0xf]
          %v1226 = vld [vmem:[%s9 + $0x14] sm:$0xf]
          %v1227 = vld [vmem:[%s9 + $0x18] sm:$0xf]
          %v1228 = vld [vmem:[%s9 + $0x1c] sm:$0xf]
          %v1229 = vld [vmem:[%s9 + $0x20] sm:$0xf]
          %v1230 = vld [vmem:[%s9 + $0x24] sm:$0xf]
          %v1231 = vld [vmem:[%s9 + $0x28] sm:$0xf]
          %v1232 = vld [vmem:[%s9 + $0x2c] sm:$0xf]
          %v1233 = vld [vmem:[%s9 + $0x30] sm:$0xf]
          %v1234 = vld [vmem:[%s9 + $0x34] sm:$0xf]
          %v1235 = vld [vmem:[%s9 + $0x38] sm:$0xf]
          %v1236 = vld [vmem:[%s9 + $0x3c] sm:$0xf]
          %v1237 = vld [vmem:[%s10] sm:$0x1]
          %v1239 = vperm.slane %v1237, 0
          %v1257 = vunpack.c.l.b16 %v1221
          %v1258 = vunpack.c.l.b16 %v1222
          %v1259 = vunpack.c.l.b16 %v1223
          %v1260 = vunpack.c.l.b16 %v1224
          %v1261 = vunpack.c.l.b16 %v1225
          %v1262 = vunpack.c.l.b16 %v1226
          %v1263 = vunpack.c.l.b16 %v1227
          %v1264 = vunpack.c.l.b16 %v1228
          %v1265 = vunpack.c.l.b16 %v1229
          %v1266 = vunpack.c.l.b16 %v1230
          %v1267 = vunpack.c.l.b16 %v1231
          %v1268 = vunpack.c.l.b16 %v1232
          %v1269 = vunpack.c.l.b16 %v1233
          %v1270 = vunpack.c.l.b16 %v1234
          %v1271 = vunpack.c.l.b16 %v1235
          %v1272 = vunpack.c.l.b16 %v1236
          %v1273 = vpack.c.b16 %v1258, %v1257
          %v1274 = vpack.c.b16 %v1260, %v1259
          %v1275 = vpack.c.b16 %v1262, %v1261
          %v1276 = vpack.c.b16 %v1264, %v1263
          %v1277 = vpack.c.b16 %v1266, %v1265
          %v1278 = vpack.c.b16 %v1268, %v1267
          %v1279 = vpack.c.b16 %v1270, %v1269
          %v1280 = vpack.c.b16 %v1272, %v1271
          %1289 = vmatpush.bf16.msra.mxu0 %v1280
          %1290 = vmatpush.bf16.msra.mxu0 %v1279
          %1291 = vmatpush.bf16.msra.mxu0 %v1278
          %1292 = vmatpush.bf16.msra.mxu0 %v1277
          %1293 = vmatpush.bf16.msra.mxu0 %v1276
          %1294 = vmatpush.bf16.msra.mxu0 %v1275
          %1295 = vmatpush.bf16.msra.mxu0 %v1274
          %1296 = vmatpush.bf16.msra.mxu0 %v1273
          %1297 = vmatmul.bf16.gmra.mxu0 %v1213
          %v1298 = vpop.f32.mrf.mxu0
          %v1299 = vadd.f32 %v1239, %v1298
          %v1300 = vpop.f32.mrf.mxu0
          %v1301 = vadd.f32 %v1239, %v1300
          %1302 = vmatmul.bf16.gmra.mxu0 %v1214
          %v1303 = vpop.f32.mrf.mxu0
          %v1304 = vadd.f32 %v1239, %v1303
          %v1305 = vpop.f32.mrf.mxu0
          %v1306 = vadd.f32 %v1239, %v1305
          %1307 = vmatmul.bf16.gmra.mxu0 %v1215
          %v1308 = vpop.f32.mrf.mxu0
          %v1309 = vadd.f32 %v1239, %v1308
          %v1310 = vpop.f32.mrf.mxu0
          %v1311 = vadd.f32 %v1239, %v1310
          %1312 = vmatmul.bf16.gmra.mxu0 %v1216
          %v1313 = vpop.f32.mrf.mxu0
          %v1314 = vadd.f32 %v1239, %v1313
          %v1315 = vpop.f32.mrf.mxu0
          %v1316 = vadd.f32 %v1239, %v1315
          %1317 = vmatmul.bf16.gmra.mxu0 %v1217
          %v1318 = vpop.f32.mrf.mxu0
          %v1319 = vadd.f32 %v1239, %v1318
          %v1320 = vpop.f32.mrf.mxu0
          %v1321 = vadd.f32 %v1239, %v1320
          %1322 = vmatmul.bf16.gmra.mxu0 %v1218
          %v1323 = vpop.f32.mrf.mxu0
          %v1324 = vadd.f32 %v1239, %v1323
          %v1325 = vpop.f32.mrf.mxu0
          %v1326 = vadd.f32 %v1239, %v1325
          %1327 = vmatmul.bf16.gmra.mxu0 %v1219
          %v1328 = vpop.f32.mrf.mxu0
          %v1329 = vadd.f32 %v1239, %v1328
          %v1330 = vpop.f32.mrf.mxu0
          %v1331 = vadd.f32 %v1239, %v1330
          %1332 = vmatmul.bf16.gmra.mxu0 %v1220
          %v1333 = vpop.f32.mrf.mxu0
          %v1334 = vadd.f32 %v1239, %v1333
          %v1335 = vpop.f32.mrf.mxu0
          %v1336 = vadd.f32 %v1239, %v1335
          %1337 = vdwg.mxu0
          %v1338 = vmax.f32 %v1299, 0.0
          %v1339 = vmax.f32 %v1301, 0.0
          %v1340 = vmax.f32 %v1304, 0.0
          %v1341 = vmax.f32 %v1306, 0.0
          %v1342 = vmax.f32 %v1309, 0.0
          %v1343 = vmax.f32 %v1311, 0.0
          %v1344 = vmax.f32 %v1314, 0.0
          %v1345 = vmax.f32 %v1316, 0.0
          %v1346 = vmax.f32 %v1319, 0.0
          %v1347 = vmax.f32 %v1321, 0.0
          %v1348 = vmax.f32 %v1324, 0.0
          %v1349 = vmax.f32 %v1326, 0.0
          %v1350 = vmax.f32 %v1329, 0.0
          %v1351 = vmax.f32 %v1331, 0.0
          %v1352 = vmax.f32 %v1334, 0.0
          %v1353 = vmax.f32 %v1336, 0.0
          %v1354 = vpack.c.bf16 %v1338, %v1338
          %v1355 = vpack.c.bf16 %v1339, %v1339
          %v1356 = vpack.c.bf16 %v1340, %v1340
          %v1357 = vpack.c.bf16 %v1341, %v1341
          %v1358 = vpack.c.bf16 %v1342, %v1342
          %v1359 = vpack.c.bf16 %v1343, %v1343
          %v1360 = vpack.c.bf16 %v1344, %v1344
          %v1361 = vpack.c.bf16 %v1345, %v1345
          %v1362 = vpack.c.bf16 %v1346, %v1346
          %v1363 = vpack.c.bf16 %v1347, %v1347
          %v1364 = vpack.c.bf16 %v1348, %v1348
          %v1365 = vpack.c.bf16 %v1349, %v1349
          %v1366 = vpack.c.bf16 %v1350, %v1350
          %v1367 = vpack.c.bf16 %v1351, %v1351
          %v1368 = vpack.c.bf16 %v1352, %v1352
          %v1369 = vpack.c.bf16 %v1353, %v1353
          %1370 = vst [vmem:[#allocation2] sm:$0xf] %v1354
          %1371 = vst [vmem:[#allocation2 + $0x4] sm:$0xf] %v1355
          %1372 = vst [vmem:[#allocation2 + $0x8] sm:$0xf] %v1356
          %1373 = vst [vmem:[#allocation2 + $0xc] sm:$0xf] %v1357
          %1374 = vst [vmem:[#allocation2 + $0x10] sm:$0xf] %v1358
          %1375 = vst [vmem:[#allocation2 + $0x14] sm:$0xf] %v1359
          %1376 = vst [vmem:[#allocation2 + $0x18] sm:$0xf] %v1360
          %1377 = vst [vmem:[#allocation2 + $0x1c] sm:$0xf] %v1361
          %1378 = vst [vmem:[#allocation2 + $0x20] sm:$0xf] %v1362
          %1379 = vst [vmem:[#allocation2 + $0x24] sm:$0xf] %v1363
          %1380 = vst [vmem:[#allocation2 + $0x28] sm:$0xf] %v1364
          %1381 = vst [vmem:[#allocation2 + $0x2c] sm:$0xf] %v1365
          %1382 = vst [vmem:[#allocation2 + $0x30] sm:$0xf] %v1366
          %1383 = vst [vmem:[#allocation2 + $0x34] sm:$0xf] %v1367
          %1384 = vst [vmem:[#allocation2 + $0x38] sm:$0xf] %v1368
          %1385 = vst [vmem:[#allocation2 + $0x3c] sm:$0xf] %v1369
        $region117: #{_mlp_medium_forward.1} parent=108 // pred_fallthru
          _
        %v1386 = vld [vmem:[#allocation2] sm:$0xf]
        %v1387 = vld [vmem:[#allocation2 + $0x4] sm:$0xf]
        %v1388 = vld [vmem:[#allocation2 + $0x8] sm:$0xf]
        %v1389 = vld [vmem:[#allocation2 + $0xc] sm:$0xf]
        %v1390 = vld [vmem:[#allocation2 + $0x10] sm:$0xf]
        %v1391 = vld [vmem:[#allocation2 + $0x14] sm:$0xf]
        %v1392 = vld [vmem:[#allocation2 + $0x18] sm:$0xf]
        %v1393 = vld [vmem:[#allocation2 + $0x1c] sm:$0xf]
        %v1394 = vld [vmem:[#allocation2 + $0x20] sm:$0xf]
        %v1395 = vld [vmem:[#allocation2 + $0x24] sm:$0xf]
        %v1396 = vld [vmem:[#allocation2 + $0x28] sm:$0xf]
        %v1397 = vld [vmem:[#allocation2 + $0x2c] sm:$0xf]
        %v1398 = vld [vmem:[#allocation2 + $0x30] sm:$0xf]
        %v1399 = vld [vmem:[#allocation2 + $0x34] sm:$0xf]
        %v1400 = vld [vmem:[#allocation2 + $0x38] sm:$0xf]
        %v1401 = vld [vmem:[#allocation2 + $0x3c] sm:$0xf]
        %v1402 = vld [vmem:[%s531] sm:$0xf]
        %v1403 = vld [vmem:[%s531 + $0x4] sm:$0xf]
        %v1404 = vld [vmem:[%s531 + $0x8] sm:$0xf]
        %v1405 = vld [vmem:[%s531 + $0xc] sm:$0xf]
        %v1406 = vld [vmem:[%s531 + $0x10] sm:$0xf]
        %v1407 = vld [vmem:[%s531 + $0x14] sm:$0xf]
        %v1408 = vld [vmem:[%s531 + $0x18] sm:$0xf]
        %v1409 = vld [vmem:[%s531 + $0x1c] sm:$0xf]
        %v1410 = vld [vmem:[%s531 + $0x20] sm:$0xf]
        %v1411 = vld [vmem:[%s531 + $0x24] sm:$0xf]
        %v1412 = vld [vmem:[%s531 + $0x28] sm:$0xf]
        %v1413 = vld [vmem:[%s531 + $0x2c] sm:$0xf]
        %v1414 = vld [vmem:[%s531 + $0x30] sm:$0xf]
        %v1415 = vld [vmem:[%s531 + $0x34] sm:$0xf]
        %v1416 = vld [vmem:[%s531 + $0x38] sm:$0xf]
        %v1417 = vld [vmem:[%s531 + $0x3c] sm:$0xf]
        %v1418 = vld [vmem:[%s587] sm:$0x1]
        %v1420 = vperm.slane %v1418, 0
        %v1438 = vunpack.c.l.b16 %v1386
        %v1439 = vunpack.c.l.b16 %v1387
        %v1440 = vunpack.c.l.b16 %v1388
        %v1441 = vunpack.c.l.b16 %v1389
        %v1442 = vunpack.c.l.b16 %v1390
        %v1443 = vunpack.c.l.b16 %v1391
        %v1444 = vunpack.c.l.b16 %v1392
        %v1445 = vunpack.c.l.b16 %v1393
        %v1446 = vunpack.c.l.b16 %v1394
        %v1447 = vunpack.c.l.b16 %v1395
        %v1448 = vunpack.c.l.b16 %v1396
        %v1449 = vunpack.c.l.b16 %v1397
        %v1450 = vunpack.c.l.b16 %v1398
        %v1451 = vunpack.c.l.b16 %v1399
        %v1452 = vunpack.c.l.b16 %v1400
        %v1453 = vunpack.c.l.b16 %v1401
        %v1454 = vpack.c.b16 %v1439, %v1438
        %v1455 = vpack.c.b16 %v1441, %v1440
        %v1456 = vpack.c.b16 %v1443, %v1442
        %v1457 = vpack.c.b16 %v1445, %v1444
        %v1458 = vpack.c.b16 %v1447, %v1446
        %v1459 = vpack.c.b16 %v1449, %v1448
        %v1460 = vpack.c.b16 %v1451, %v1450
        %v1461 = vpack.c.b16 %v1453, %v1452
        %v1486 = vunpack.c.l.b16 %v1402
        %v1487 = vunpack.c.l.b16 %v1403
        %v1488 = vunpack.c.l.b16 %v1404
        %v1489 = vunpack.c.l.b16 %v1405
        %v1490 = vunpack.c.l.b16 %v1406
        %v1491 = vunpack.c.l.b16 %v1407
        %v1492 = vunpack.c.l.b16 %v1408
        %v1493 = vunpack.c.l.b16 %v1409
        %v1494 = vunpack.c.l.b16 %v1410
        %v1495 = vunpack.c.l.b16 %v1411
        %v1496 = vunpack.c.l.b16 %v1412
        %v1497 = vunpack.c.l.b16 %v1413
        %v1498 = vunpack.c.l.b16 %v1414
        %v1499 = vunpack.c.l.b16 %v1415
        %v1500 = vunpack.c.l.b16 %v1416
        %v1501 = vunpack.c.l.b16 %v1417
        %v1502 = vpack.c.b16 %v1487, %v1486
        %v1503 = vpack.c.b16 %v1489, %v1488
        %v1504 = vpack.c.b16 %v1491, %v1490
        %v1505 = vpack.c.b16 %v1493, %v1492
        %v1506 = vpack.c.b16 %v1495, %v1494
        %v1507 = vpack.c.b16 %v1497, %v1496
        %v1508 = vpack.c.b16 %v1499, %v1498
        %v1509 = vpack.c.b16 %v1501, %v1500
        %1518 = vmatpush.bf16.msra.mxu0 %v1509
        %1519 = vmatpush.bf16.msra.mxu0 %v1508
        %1520 = vmatpush.bf16.msra.mxu0 %v1507
        %1521 = vmatpush.bf16.msra.mxu0 %v1506
        %1522 = vmatpush.bf16.msra.mxu0 %v1505
        %1523 = vmatpush.bf16.msra.mxu0 %v1504
        %1524 = vmatpush.bf16.msra.mxu0 %v1503
        %1525 = vmatpush.bf16.msra.mxu0 %v1502
        %1526 = vmatmul.bf16.gmra.mxu0 %v1454
        %v1527 = vpop.f32.mrf.mxu0
        %v1528 = vadd.f32 %v1420, %v1527
        %v1529 = vpop.f32.mrf.mxu0
        %v1530 = vadd.f32 %v1420, %v1529
        %1531 = vmatmul.bf16.gmra.mxu0 %v1455
        %v1532 = vpop.f32.mrf.mxu0
        %v1533 = vadd.f32 %v1420, %v1532
        %v1534 = vpop.f32.mrf.mxu0
        %v1535 = vadd.f32 %v1420, %v1534
        %1536 = vmatmul.bf16.gmra.mxu0 %v1456
        %v1537 = vpop.f32.mrf.mxu0
        %v1538 = vadd.f32 %v1420, %v1537
        %v1539 = vpop.f32.mrf.mxu0
        %v1540 = vadd.f32 %v1420, %v1539
        %1541 = vmatmul.bf16.gmra.mxu0 %v1457
        %v1542 = vpop.f32.mrf.mxu0
        %v1543 = vadd.f32 %v1420, %v1542
        %v1544 = vpop.f32.mrf.mxu0
        %v1545 = vadd.f32 %v1420, %v1544
        %1546 = vmatmul.bf16.gmra.mxu0 %v1458
        %v1547 = vpop.f32.mrf.mxu0
        %v1548 = vadd.f32 %v1420, %v1547
        %v1549 = vpop.f32.mrf.mxu0
        %v1550 = vadd.f32 %v1420, %v1549
        %1551 = vmatmul.bf16.gmra.mxu0 %v1459
        %v1552 = vpop.f32.mrf.mxu0
        %v1553 = vadd.f32 %v1420, %v1552
        %v1554 = vpop.f32.mrf.mxu0
        %v1555 = vadd.f32 %v1420, %v1554
        %1556 = vmatmul.bf16.gmra.mxu0 %v1460
        %v1557 = vpop.f32.mrf.mxu0
        %v1558 = vadd.f32 %v1420, %v1557
        %v1559 = vpop.f32.mrf.mxu0
        %v1560 = vadd.f32 %v1420, %v1559
        %1561 = vmatmul.bf16.gmra.mxu0 %v1461
        %v1562 = vpop.f32.mrf.mxu0
        %v1563 = vadd.f32 %v1420, %v1562
        %v1564 = vpop.f32.mrf.mxu0
        %v1565 = vadd.f32 %v1420, %v1564
        %1566 = vdwg.mxu0
        %1567 = vst [vmem:[%s578] sm:$0xff] %v1528
        %1568 = vst [vmem:[%s578 + $0x8] sm:$0xff] %v1530
        %1569 = vst [vmem:[%s578 + $0x10] sm:$0xff] %v1533
        %1570 = vst [vmem:[%s578 + $0x18] sm:$0xff] %v1535
        %1571 = vst [vmem:[%s578 + $0x20] sm:$0xff] %v1538
        %1572 = vst [vmem:[%s578 + $0x28] sm:$0xff] %v1540
        %1573 = vst [vmem:[%s578 + $0x30] sm:$0xff] %v1543
        %1574 = vst [vmem:[%s578 + $0x38] sm:$0xff] %v1545
        %1575 = vst [vmem:[%s578 + $0x40] sm:$0xff] %v1548
        %1576 = vst [vmem:[%s578 + $0x48] sm:$0xff] %v1550
        %1577 = vst [vmem:[%s578 + $0x50] sm:$0xff] %v1553
        %1578 = vst [vmem:[%s578 + $0x58] sm:$0xff] %v1555
        %1579 = vst [vmem:[%s578 + $0x60] sm:$0xff] %v1558
        %1580 = vst [vmem:[%s578 + $0x68] sm:$0xff] %v1560
        %1581 = vst [vmem:[%s578 + $0x70] sm:$0xff] %v1563
        %1582 = vst [vmem:[%s578 + $0x78] sm:$0xff] %v1565
        %s1583 = sand.u32 %s334, 1
        %s1584 = sand.u32 %s334, 1
        %s1585 = smul.addr %s1584, 128
        %s1586 = scalar_lea.vmem [#allocation4], %s1585
        // Predicated region
        $region118: #{_mlp_medium_forward.1} parent=108 // pred_check
          %p1587 = pneg %p344
        $region119: #{_mlp_medium_forward.1} parent=108 // pred_check_branch
          %1589 = sbr.rel (%p1587) target = $region121
        $region120: #{_mlp_medium_forward.1} parent=108 // pred_region
          %s1590 = smul.u32 16, %s28
          %s1591 = smul.addr %s1590, 2
          %s1592 = sadd.s32 %s29, %s1591
          %s1593 = smul.addr %s1592, 8
          %s1594 = scalar_lea.vmem %s13, %s1593
          // Predicated region
          $region122: #{_mlp_medium_forward.1} parent=120 // pred_check
            _
          $region123: #{_mlp_medium_forward.1} parent=120 // pred_check_branch
            %1596 = sbr.rel (0) target = $region125
          $region124: #{_mlp_medium_forward.1} parent=120 // pred_region
            // Predicated region
            $region126: #{_mlp_medium_forward.1} parent=124 // pred_check
              _
            $region127: #{_mlp_medium_forward.1} parent=124 // pred_check_branch
              %1598 = sbr.rel (0) target = $region129
            $region128: #{_mlp_medium_forward.1} parent=124 // pred_region
              // Predicated region
              $region141: #{_mlp_medium_forward.1} parent=128 // pred_check
                _
              $region142: #{_mlp_medium_forward.1} parent=128 // pred_check_branch
                %1644 = sbr.rel (0) target = $region144
              $region143: #{_mlp_medium_forward.1} parent=128 // pred_region
                loop: start=0, step=1, limit=1
                $region145: #{_mlp_medium_forward.1} parent=143 // loop_pre_header
                  _
                $region146: #{_mlp_medium_forward.1} parent=143 // loop_header
                  %s1646 = sphi 0, %s1650
                  %p1647 = scmp.ge.s32.totalorder %s1646, 1
                  %s1651 = sphi %s1586, %s1586
                  %s1652 = sphi %s1594, %s1594
                $region147: #{_mlp_medium_forward.1} parent=143 // loop_header_branch
                  %1649 = sbr.rel (%p1647) target = $region151
                $region148: #{_mlp_medium_forward.1} parent=143 // loop_body
                  %v1653 = vld [vmem:[%s1651] sm:$0xff]
                  %1654 = vst [vmem:[%s1652] sm:$0xff] %v1653
                  %v1655 = vld [vmem:[%s1651 + $0x8] sm:$0xff]
                  %1656 = vst [vmem:[%s1652 + $0x10] sm:$0xff] %v1655
                  %v1657 = vld [vmem:[%s1651 + $0x10] sm:$0xff]
                  %1658 = vst [vmem:[%s1652 + $0x20] sm:$0xff] %v1657
                  %v1659 = vld [vmem:[%s1651 + $0x18] sm:$0xff]
                  %1660 = vst [vmem:[%s1652 + $0x30] sm:$0xff] %v1659
                  %v1661 = vld [vmem:[%s1651 + $0x20] sm:$0xff]
                  %1662 = vst [vmem:[%s1652 + $0x40] sm:$0xff] %v1661
                  %v1663 = vld [vmem:[%s1651 + $0x28] sm:$0xff]
                  %1664 = vst [vmem:[%s1652 + $0x50] sm:$0xff] %v1663
                  %v1665 = vld [vmem:[%s1651 + $0x30] sm:$0xff]
                  %1666 = vst [vmem:[%s1652 + $0x60] sm:$0xff] %v1665
                  %v1667 = vld [vmem:[%s1651 + $0x38] sm:$0xff]
                  %1668 = vst [vmem:[%s1652 + $0x70] sm:$0xff] %v1667
                  %v1669 = vld [vmem:[%s1651 + $0x40] sm:$0xff]
                  %1670 = vst [vmem:[%s1652 + $0x80] sm:$0xff] %v1669
                  %v1671 = vld [vmem:[%s1651 + $0x48] sm:$0xff]
                  %1672 = vst [vmem:[%s1652 + $0x90] sm:$0xff] %v1671
                  %v1673 = vld [vmem:[%s1651 + $0x50] sm:$0xff]
                  %1674 = vst [vmem:[%s1652 + $0xa0] sm:$0xff] %v1673
                  %v1675 = vld [vmem:[%s1651 + $0x58] sm:$0xff]
                  %1676 = vst [vmem:[%s1652 + $0xb0] sm:$0xff] %v1675
                  %v1677 = vld [vmem:[%s1651 + $0x60] sm:$0xff]
                  %1678 = vst [vmem:[%s1652 + $0xc0] sm:$0xff] %v1677
                  %v1679 = vld [vmem:[%s1651 + $0x68] sm:$0xff]
                  %1680 = vst [vmem:[%s1652 + $0xd0] sm:$0xff] %v1679
                  %v1681 = vld [vmem:[%s1651 + $0x70] sm:$0xff]
                  %1682 = vst [vmem:[%s1652 + $0xe0] sm:$0xff] %v1681
                  %v1683 = vld [vmem:[%s1651 + $0x78] sm:$0xff]
                  %1684 = vst [vmem:[%s1652 + $0xf0] sm:$0xff] %v1683
                $region149: #{_mlp_medium_forward.1} parent=143 // loop_footer
                  %s1650 = sadd.s32 1, %s1646
                $region150: #{_mlp_medium_forward.1} parent=143 // loop_footer_branch
                  %1645 = sbr.rel target = $region146
                $region151: #{_mlp_medium_forward.1} parent=143 // loop_exit
                  _
              $region144: #{_mlp_medium_forward.1} parent=128 // pred_fallthru
                _
              // Predicated region
              $region152: #{_mlp_medium_forward.1} parent=128 // pred_check
                _
              $region153: #{_mlp_medium_forward.1} parent=128 // pred_check_branch
                %1686 = sbr.rel target = $region155
              $region154: #{_mlp_medium_forward.1} parent=128 // pred_region
                _
              $region155: #{_mlp_medium_forward.1} parent=128 // pred_fallthru
                _
            $region129: #{_mlp_medium_forward.1} parent=124 // pred_fallthru
              _
            // Predicated region
            $region130: #{_mlp_medium_forward.1} parent=124 // pred_check
              _
            $region131: #{_mlp_medium_forward.1} parent=124 // pred_check_branch
              %1600 = sbr.rel target = $region133
            $region132: #{_mlp_medium_forward.1} parent=124 // pred_region
              %s1602 = ssub.s32 256, 1
              loop: start=0, step=1, limit=1
              $region134: #{_mlp_medium_forward.1} parent=132 // loop_pre_header
                _
              $region135: #{_mlp_medium_forward.1} parent=132 // loop_header
                %s1604 = sphi 0, %s1608
                %p1605 = scmp.ge.s32.totalorder %s1604, 1
                %s1609 = sphi %s1586, %s1586
                %s1610 = sphi %s1594, %s1594
              $region136: #{_mlp_medium_forward.1} parent=132 // loop_header_branch
                %1607 = sbr.rel (%p1605) target = $region140
              $region137: #{_mlp_medium_forward.1} parent=132 // loop_body
                %v1611 = vld [vmem:[%s1609] sm:%s1602]
                %1612 = vst [vmem:[%s1610] sm:%s1602] %v1611
                %v1613 = vld [vmem:[%s1609 + $0x8] sm:%s1602]
                %1614 = vst [vmem:[%s1610 + $0x10] sm:%s1602] %v1613
                %v1615 = vld [vmem:[%s1609 + $0x10] sm:%s1602]
                %1616 = vst [vmem:[%s1610 + $0x20] sm:%s1602] %v1615
                %v1617 = vld [vmem:[%s1609 + $0x18] sm:%s1602]
                %1618 = vst [vmem:[%s1610 + $0x30] sm:%s1602] %v1617
                %v1619 = vld [vmem:[%s1609 + $0x20] sm:%s1602]
                %1620 = vst [vmem:[%s1610 + $0x40] sm:%s1602] %v1619
                %v1621 = vld [vmem:[%s1609 + $0x28] sm:%s1602]
                %1622 = vst [vmem:[%s1610 + $0x50] sm:%s1602] %v1621
                %v1623 = vld [vmem:[%s1609 + $0x30] sm:%s1602]
                %1624 = vst [vmem:[%s1610 + $0x60] sm:%s1602] %v1623
                %v1625 = vld [vmem:[%s1609 + $0x38] sm:%s1602]
                %1626 = vst [vmem:[%s1610 + $0x70] sm:%s1602] %v1625
                %v1627 = vld [vmem:[%s1609 + $0x40] sm:%s1602]
                %1628 = vst [vmem:[%s1610 + $0x80] sm:%s1602] %v1627
                %v1629 = vld [vmem:[%s1609 + $0x48] sm:%s1602]
                %1630 = vst [vmem:[%s1610 + $0x90] sm:%s1602] %v1629
                %v1631 = vld [vmem:[%s1609 + $0x50] sm:%s1602]
                %1632 = vst [vmem:[%s1610 + $0xa0] sm:%s1602] %v1631
                %v1633 = vld [vmem:[%s1609 + $0x58] sm:%s1602]
                %1634 = vst [vmem:[%s1610 + $0xb0] sm:%s1602] %v1633
                %v1635 = vld [vmem:[%s1609 + $0x60] sm:%s1602]
                %1636 = vst [vmem:[%s1610 + $0xc0] sm:%s1602] %v1635
                %v1637 = vld [vmem:[%s1609 + $0x68] sm:%s1602]
                %1638 = vst [vmem:[%s1610 + $0xd0] sm:%s1602] %v1637
                %v1639 = vld [vmem:[%s1609 + $0x70] sm:%s1602]
                %1640 = vst [vmem:[%s1610 + $0xe0] sm:%s1602] %v1639
                %v1641 = vld [vmem:[%s1609 + $0x78] sm:%s1602]
                %1642 = vst [vmem:[%s1610 + $0xf0] sm:%s1602] %v1641
              $region138: #{_mlp_medium_forward.1} parent=132 // loop_footer
                %s1608 = sadd.s32 1, %s1604
              $region139: #{_mlp_medium_forward.1} parent=132 // loop_footer_branch
                %1603 = sbr.rel target = $region135
              $region140: #{_mlp_medium_forward.1} parent=132 // loop_exit
                _
            $region133: #{_mlp_medium_forward.1} parent=124 // pred_fallthru
              _
          $region125: #{_mlp_medium_forward.1} parent=120 // pred_fallthru
            _
          %1687 = vnop
        $region121: #{_mlp_medium_forward.1} parent=108 // pred_fallthru
          _
      $region109: #{_mlp_medium_forward.1} parent=5 // pred_fallthru
        _
      %p1688 = scmp.le.s32.totalorder 2, %s19
      // Predicated region
      $region156: #{_mlp_medium_forward.1} parent=5 // pred_check
        %p1689 = pneg %p1688
      $region157: #{_mlp_medium_forward.1} parent=5 // pred_check_branch
        %1691 = sbr.rel (%p1689) target = $region159
      $region158: #{_mlp_medium_forward.1} parent=5 // pred_region
        %s1692 = ssub.s32 %s19, 2
        // Predicated region
        $region160: #{_mlp_medium_forward.1} parent=158 // pred_check
          %p1693 = pneg %p350
        $region161: #{_mlp_medium_forward.1} parent=158 // pred_check_branch
          %1695 = sbr.rel (%p1693) target = $region163
        $region162: #{_mlp_medium_forward.1} parent=158 // pred_region
          %s1696 = sand.u32 %s335, 1
          %s1697 = sand.u32 %s335, 1
          %s1698 = smul.addr %s1697, 128
          %s1699 = scalar_lea.vmem [#allocation4], %s1698
        $region163: #{_mlp_medium_forward.1} parent=158 // pred_fallthru
          _
      $region159: #{_mlp_medium_forward.1} parent=5 // pred_fallthru
        _
    $region6: #{_mlp_medium_forward.1} parent=1 // loop_footer
      %s23 = sadd.s32 1, %s19
    $region7: #{_mlp_medium_forward.1} parent=1 // loop_footer_branch
      %18 = sbr.rel target = $region3
    $region8: #{_mlp_medium_forward.1} parent=1 // loop_exit
      _

</llo_original>
